<compile_context>
chip_gen: v7x
topology: tpu7x:2x2x1
jax: 0.10.0
libtpu: 0.0.40
codegen_flags: <defaults>
</compile_context>

<pallas_src>
import functools

import numpy as np
import jax
import jax.numpy as jnp
from jax import lax
from jax.experimental import pallas as pl
from jax.experimental.pallas import tpu as pltpu


def _expand_cores(tt_cores, tt_p_shapes, tt_q_shapes, tt_ranks):
    """Host-side layout plumbing (pure replication of core entries).

    Produces, for each core, a (rows, p_i) matrix whose rows are already laid
    out in the (rank, q0*q1*q2) feature order the kernel consumes, so the
    in-kernel rank contractions become plain sublane-block multiply-adds with
    no broadcasts.  Arithmetic is unchanged.
    """
    p0, p1, p2 = tt_p_shapes
    q0, q1, q2 = tt_q_shapes
    _, r1, r2, _ = tt_ranks
    D = q0 * q1 * q2
    M1 = r1 * q1 * q2

    # core0[i, x*r1 + a] -> c0e[a*D + x*(q1*q2) + (y*q2+z), i]
    c0 = tt_cores[0].reshape(p0, q0, r1)                      # [i, x, a]
    c0e = jnp.transpose(c0, (2, 1, 0))                        # [a, x, i]
    c0e = jnp.broadcast_to(c0e[:, :, None, :], (r1, q0, q1 * q2, p0))
    c0e = c0e.reshape(r1 * D, p0)

    # core1[j, a*q1*r2 + y*r2 + s] -> c1e[s*M1 + a*(q1*q2) + y*q2 + z, j]
    c1 = tt_cores[1].reshape(p1, r1, q1, r2)                  # [j, a, y, s]
    c1e = jnp.transpose(c1, (3, 1, 2, 0))                     # [s, a, y, j]
    c1e = jnp.broadcast_to(c1e[:, :, :, None, :], (r2, r1, q1, q2, p1))
    c1e = c1e.reshape(r2 * M1, p1)

    # core2[k, s*q2 + z] -> c2e[s*M1 + (a*q1+y)*q2 + z, k]
    c2 = tt_cores[2].reshape(p2, r2, q2)                      # [k, s, z]
    c2e = jnp.transpose(c2, (1, 2, 0))                        # [s, z, k]
    c2e = jnp.broadcast_to(c2e[:, None, :, :], (r2, r1 * q1, q2, p2))
    c2e = c2e.reshape(r2 * M1, p2)

    return c0e, c1e, c2e


def _make_tt_kernel(tt_p_shapes, tt_q_shapes, r1, r2, block_b):
    p0, p1, p2 = tt_p_shapes
    q0, q1, q2 = tt_q_shapes
    D = q0 * q1 * q2          # embedding_dim
    M1 = r1 * q1 * q2         # rows of the (core1 x core2) intermediate
    blk = q1 * q2

    # HIGHEST precision keeps the f32 core values exact through the one-hot
    # gather matmul (default precision could truncate operands to bf16).
    mxu_dot = functools.partial(jnp.dot, preferred_element_type=jnp.float32,
                                precision=jax.lax.Precision.HIGHEST)

    def kernel(idx3_ref, c0e_ref, c1e_ref, c2e_ref, out_ref):
        # idx3_ref: (3, block_b) int32 -- rows are (i0, i1, i2)
        idx3 = idx3_ref[...]
        i0 = idx3[0:1, :]                          # (1, Bt)
        i1 = idx3[1:2, :]
        i2 = idx3[2:3, :]

        def onehot(i, p):                          # (p, Bt) f32 one-hot
            rows = lax.broadcasted_iota(jnp.int32, (p, block_b), 0)
            return jnp.where(rows == i, jnp.float32(1.0), jnp.float32(0.0))

        # Gather the core rows for the whole batch tile at once (MXU).
        G0 = mxu_dot(c0e_ref[...], onehot(i0, p0))   # (r1*D,  Bt)
        G1 = mxu_dot(c1e_ref[...], onehot(i1, p1))   # (r2*M1, Bt)
        G2 = mxu_dot(c2e_ref[...], onehot(i2, p2))   # (r2*M1, Bt)

        # Stage 1: contract core1 x core2 over rank r2 (VPU, batch on lanes).
        u = G1[0:M1, :] * G2[0:M1, :]
        for s in range(1, r2):
            u = u + G1[s * M1:(s + 1) * M1, :] * G2[s * M1:(s + 1) * M1, :]
        # u[(a, y, z), b] = sum_s core1[i1[b]][a, y, s] * core2[i2[b]][s, z]

        # Stage 2: contract with core0 over rank r1.
        def tile_q0(v):                            # (q1*q2, Bt) -> (D, Bt)
            return jnp.concatenate([v] * q0, axis=0) if q0 > 1 else v

        acc = G0[0:D, :] * tile_q0(u[0:blk, :])
        for a in range(1, r1):
            acc = acc + G0[a * D:(a + 1) * D, :] * tile_q0(
                u[a * blk:(a + 1) * blk, :])

        out_ref[...] = acc                         # (D, Bt), lane-dense store

    return kernel


def tt_embedding_forward(indices, tt_cores, tt_p_shapes, tt_q_shapes, tt_ranks,
                         block_b=256):
    p0, p1, p2 = tt_p_shapes
    q0, q1, q2 = tt_q_shapes
    r0, r1, r2, r3 = tt_ranks
    assert r0 == 1 and r3 == 1
    assert block_b % 128 == 0, "batch tile must be a multiple of 128 lanes"

    B = indices.shape[0]
    D = q0 * q1 * q2
    M1 = r1 * q1 * q2

    # Pad the batch up to a whole number of tiles (index 0 is a valid row).
    B_pad = ((B + block_b - 1) // block_b) * block_b
    idx = indices.astype(jnp.int32)
    if B_pad != B:
        idx = jnp.pad(idx, (0, B_pad - B))

    # Index factorization, L = [p1*p2, p2, 1] (same convention as the module).
    i0 = idx // (p1 * p2)
    i1 = (idx // p2) % p1
    i2 = idx % p2
    idx3 = jnp.stack([i0, i1, i2], axis=0)         # (3, B_pad) int32

    c0e, c1e, c2e = _expand_cores(tt_cores, tt_p_shapes, tt_q_shapes, tt_ranks)
    num_tiles = B_pad // block_b

    kernel = _make_tt_kernel(tt_p_shapes, tt_q_shapes, r1, r2, block_b)

    flops = 2 * B_pad * (r1 * D * p0 + r2 * M1 * (p1 + p2) + r2 * M1 + r1 * D)
    bytes_accessed = 4 * (3 * B_pad + B_pad * D
                          + r1 * D * p0 + r2 * M1 * (p1 + p2))

    grid_spec = pltpu.PrefetchScalarGridSpec(
        num_scalar_prefetch=0,
        grid=(num_tiles,),
        in_specs=[
            # per-tile split indices
            pl.BlockSpec((3, block_b), lambda t: (0, t)),
            # whole (expanded) TT cores; constant block index => DMA'd once
            # and resident in VMEM across all grid steps (a few KB total).
            pl.BlockSpec((r1 * D, p0), lambda t: (0, 0)),
            pl.BlockSpec((r2 * M1, p1), lambda t: (0, 0)),
            pl.BlockSpec((r2 * M1, p2), lambda t: (0, 0)),
        ],
        # feature-major output tile: lanes = batch tile (multiple of 128)
        out_specs=pl.BlockSpec((D, block_b), lambda t: (0, t)),
    )

    out_fm = pl.pallas_call(
        kernel,
        out_shape=jax.ShapeDtypeStruct((D, B_pad), jnp.float32),
        grid_spec=grid_spec,
        compiler_params=pltpu.CompilerParams(
            dimension_semantics=("parallel",)),    # tiles are independent
        cost_estimate=pl.CostEstimate(flops=int(flops), transcendentals=0,
                                      bytes_accessed=int(bytes_accessed)),
    )(idx3, c0e, c1e, c2e)

    # Layout plumbing back to the module's [B, embedding_dim] output.
    return out_fm.T[:B]


def init_tt_cores(key, num_embeddings, embedding_dim,
                  tt_p_shapes, tt_q_shapes, tt_ranks):
    # Deterministic re-implementation of Eff_TTEmbedding.reset_parameters().
    num_tt_core = len(tt_p_shapes)
    lamb = 2.0 / (num_embeddings + embedding_dim)
    stddev = np.sqrt(lamb)
    ranks = np.array(tt_ranks, dtype=np.float64)
    cr_exponent = -1.0 / (2 * num_tt_core)
    var = np.prod(ranks ** cr_exponent)
    core_stddev = float(stddev ** (1.0 / num_tt_core) * var)
    keys = jax.random.split(key, num_tt_core)
    cores = []
    for i in range(num_tt_core):
        shape = (tt_p_shapes[i], tt_ranks[i] * tt_q_shapes[i] * tt_ranks[i + 1])
        cores.append(jax.random.uniform(keys[i], shape, dtype=jnp.float32,
                                        minval=0.0, maxval=core_stddev))
    return cores


def tt_embedding_reference_np(indices, tt_cores, tt_p_shapes, tt_q_shapes,
                              tt_ranks):
    # Pure-NumPy (float64) reference of the same left-to-right contraction.
    p0, p1, p2 = tt_p_shapes
    q0, q1, q2 = tt_q_shapes
    _, r1, r2, _ = tt_ranks
    idx = np.asarray(indices).astype(np.int64)
    c0 = np.asarray(tt_cores[0], dtype=np.float64)
    c1 = np.asarray(tt_cores[1], dtype=np.float64)
    c2 = np.asarray(tt_cores[2], dtype=np.float64)
    i0 = idx // (p1 * p2)
    i1 = (idx // p2) % p1
    i2 = idx % p2
    a = c0[i0].reshape(-1, q0, r1)
    b = c1[i1].reshape(-1, r1, q1 * r2)
    c = c2[i2].reshape(-1, r2, q2)
    t = np.einsum('bxa,bam->bxm', a, b).reshape(-1, q0 * q1, r2)
    o = np.einsum('bks,bsz->bkz', t, c).reshape(-1, q0 * q1 * q2)
    return o.astype(np.float32)


if __name__ == "__main__":
    # Small, consistent configuration:
    #   num_embeddings = 4*4*4 = 64, embedding_dim = 4*4*2 = 32, ranks [1,4,4,1]
    num_embeddings = 64
    embedding_dim = 32
    tt_p_shapes = [4, 4, 4]
    tt_q_shapes = [4, 4, 2]
    tt_ranks = [1, 4, 4, 1]
    # TODO(synk): suggested_tt_shapes (sympy/scipy factorization heuristic) and
    # the CUDA backward / fused SGD update are host-side / training code; only
    # the forward lookup is implemented here.

    key = jax.random.PRNGKey(0)
    k_cores, k_idx = jax.random.split(key)
    tt_cores = init_tt_cores(k_cores, num_embeddings, embedding_dim,
                             tt_p_shapes, tt_q_shapes, tt_ranks)

    B = 300   # exercises padding up to the 256-wide batch tile (2 grid steps)
    indices = jax.random.randint(k_idx, (B,), 0, num_embeddings,
                                 dtype=jnp.int32)

    out = tt_embedding_forward(indices, tt_cores, tt_p_shapes, tt_q_shapes,
                               tt_ranks, block_b=256)
    out = jax.block_until_ready(out)
    assert out.shape == (B, embedding_dim)

    ref = tt_embedding_reference_np(indices, tt_cores, tt_p_shapes,
                                    tt_q_shapes, tt_ranks)
    np.testing.assert_allclose(np.asarray(out), ref, rtol=1e-4, atol=1e-5)

    print("KERNEL_OK")
</pallas_src>

<mosaic_0001>
module attributes {stable_mosaic.version = 11 : i64} {
  func.func @kernel(%arg0: i32, %arg1: memref<3x256xi32, #tpu.memory_space<vmem>>, %arg2: memref<128x4xf32, #tpu.memory_space<vmem>>, %arg3: memref<128x4xf32, #tpu.memory_space<vmem>>, %arg4: memref<128x4xf32, #tpu.memory_space<vmem>>, %arg5: memref<32x256xf32, #tpu.memory_space<vmem>>) attributes {dimension_semantics = [#tpu.dimension_semantics<parallel>], iteration_bounds = array<i64: 2>, scalar_prefetch = 0 : i64, scratch_operands = 0 : i64, tpu.core_type = #tpu.core_type<tc>, window_params = [{transform_indices = @transform_0, window_bounds = array<i64: 3, 256>}, {pipeline_mode = #tpu.pipeline_mode<synchronous>, transform_indices = @transform_1, window_bounds = array<i64: 128, 4>}, {pipeline_mode = #tpu.pipeline_mode<synchronous>, transform_indices = @transform_2, window_bounds = array<i64: 128, 4>}, {pipeline_mode = #tpu.pipeline_mode<synchronous>, transform_indices = @transform_3, window_bounds = array<i64: 128, 4>}, {transform_indices = @transform_4, window_bounds = array<i64: 32, 256>}]} {
    %c0 = arith.constant 0 : index
    %c0_0 = arith.constant 0 : index
    %0 = vector.load %arg1[%c0, %c0_0] : memref<3x256xi32, #tpu.memory_space<vmem>>, vector<3x256xi32>
    %1 = vector.extract_strided_slice %0 {offsets = [0, 0], sizes = [1, 256], strides = [1, 1]} : vector<3x256xi32> to vector<1x256xi32>
    %2 = vector.extract_strided_slice %0 {offsets = [1, 0], sizes = [1, 256], strides = [1, 1]} : vector<3x256xi32> to vector<1x256xi32>
    %3 = vector.extract_strided_slice %0 {offsets = [2, 0], sizes = [1, 256], strides = [1, 1]} : vector<3x256xi32> to vector<1x256xi32>
    %c0_1 = arith.constant 0 : index
    %c0_2 = arith.constant 0 : index
    %4 = vector.load %arg2[%c0_1, %c0_2] : memref<128x4xf32, #tpu.memory_space<vmem>>, vector<128x4xf32>
    %5 = tpu.iota {dimensions = array<i32: 0>} : vector<4x256xi32>
    %6 = vector.broadcast %1 : vector<1x256xi32> to vector<4x256xi32>
    %7 = arith.cmpi eq, %5, %6 : vector<4x256xi32>
    %cst = arith.constant 1.000000e+00 : f32
    %cst_3 = arith.constant 0.000000e+00 : f32
    %8 = vector.broadcast %cst : f32 to vector<4x256xf32>
    %9 = vector.broadcast %cst_3 : f32 to vector<4x256xf32>
    %10 = arith.select %7, %8, %9 : vector<4x256xi1>, vector<4x256xf32>
    %cst_4 = arith.constant dense<0.000000e+00> : vector<128x256xf32>
    %11 = tpu.matmul %4, %10, %cst_4 {dimension_numbers = #tpu.dot_dimension_numbers<[1], [0], [0], [1], [0, 0, 1, 1], [], []>, precision = #tpu.contract_precision<fp32>} : vector<128x4xf32>, vector<4x256xf32>, vector<128x256xf32> -> vector<128x256xf32>
    %c0_5 = arith.constant 0 : index
    %c0_6 = arith.constant 0 : index
    %12 = vector.load %arg3[%c0_5, %c0_6] : memref<128x4xf32, #tpu.memory_space<vmem>>, vector<128x4xf32>
    %13 = tpu.iota {dimensions = array<i32: 0>} : vector<4x256xi32>
    %14 = vector.broadcast %2 : vector<1x256xi32> to vector<4x256xi32>
    %15 = arith.cmpi eq, %13, %14 : vector<4x256xi32>
    %cst_7 = arith.constant 1.000000e+00 : f32
    %cst_8 = arith.constant 0.000000e+00 : f32
    %16 = vector.broadcast %cst_7 : f32 to vector<4x256xf32>
    %17 = vector.broadcast %cst_8 : f32 to vector<4x256xf32>
    %18 = arith.select %15, %16, %17 : vector<4x256xi1>, vector<4x256xf32>
    %cst_9 = arith.constant dense<0.000000e+00> : vector<128x256xf32>
    %19 = tpu.matmul %12, %18, %cst_9 {dimension_numbers = #tpu.dot_dimension_numbers<[1], [0], [0], [1], [0, 0, 1, 1], [], []>, precision = #tpu.contract_precision<fp32>} : vector<128x4xf32>, vector<4x256xf32>, vector<128x256xf32> -> vector<128x256xf32>
    %c0_10 = arith.constant 0 : index
    %c0_11 = arith.constant 0 : index
    %20 = vector.load %arg4[%c0_10, %c0_11] : memref<128x4xf32, #tpu.memory_space<vmem>>, vector<128x4xf32>
    %21 = tpu.iota {dimensions = array<i32: 0>} : vector<4x256xi32>
    %22 = vector.broadcast %3 : vector<1x256xi32> to vector<4x256xi32>
    %23 = arith.cmpi eq, %21, %22 : vector<4x256xi32>
    %cst_12 = arith.constant 1.000000e+00 : f32
    %cst_13 = arith.constant 0.000000e+00 : f32
    %24 = vector.broadcast %cst_12 : f32 to vector<4x256xf32>
    %25 = vector.broadcast %cst_13 : f32 to vector<4x256xf32>
    %26 = arith.select %23, %24, %25 : vector<4x256xi1>, vector<4x256xf32>
    %cst_14 = arith.constant dense<0.000000e+00> : vector<128x256xf32>
    %27 = tpu.matmul %20, %26, %cst_14 {dimension_numbers = #tpu.dot_dimension_numbers<[1], [0], [0], [1], [0, 0, 1, 1], [], []>, precision = #tpu.contract_precision<fp32>} : vector<128x4xf32>, vector<4x256xf32>, vector<128x256xf32> -> vector<128x256xf32>
    %28 = vector.extract_strided_slice %19 {offsets = [0, 0], sizes = [32, 256], strides = [1, 1]} : vector<128x256xf32> to vector<32x256xf32>
    %29 = vector.extract_strided_slice %27 {offsets = [0, 0], sizes = [32, 256], strides = [1, 1]} : vector<128x256xf32> to vector<32x256xf32>
    %30 = arith.mulf %28, %29 : vector<32x256xf32>
    %31 = vector.extract_strided_slice %19 {offsets = [32, 0], sizes = [32, 256], strides = [1, 1]} : vector<128x256xf32> to vector<32x256xf32>
    %32 = vector.extract_strided_slice %27 {offsets = [32, 0], sizes = [32, 256], strides = [1, 1]} : vector<128x256xf32> to vector<32x256xf32>
    %33 = arith.mulf %31, %32 : vector<32x256xf32>
    %34 = arith.addf %30, %33 : vector<32x256xf32>
    %35 = vector.extract_strided_slice %19 {offsets = [64, 0], sizes = [32, 256], strides = [1, 1]} : vector<128x256xf32> to vector<32x256xf32>
    %36 = vector.extract_strided_slice %27 {offsets = [64, 0], sizes = [32, 256], strides = [1, 1]} : vector<128x256xf32> to vector<32x256xf32>
    %37 = arith.mulf %35, %36 : vector<32x256xf32>
    %38 = arith.addf %34, %37 : vector<32x256xf32>
    %39 = vector.extract_strided_slice %19 {offsets = [96, 0], sizes = [32, 256], strides = [1, 1]} : vector<128x256xf32> to vector<32x256xf32>
    %40 = vector.extract_strided_slice %27 {offsets = [96, 0], sizes = [32, 256], strides = [1, 1]} : vector<128x256xf32> to vector<32x256xf32>
    %41 = arith.mulf %39, %40 : vector<32x256xf32>
    %42 = arith.addf %38, %41 : vector<32x256xf32>
    %43 = vector.extract_strided_slice %11 {offsets = [0, 0], sizes = [32, 256], strides = [1, 1]} : vector<128x256xf32> to vector<32x256xf32>
    %44 = vector.extract_strided_slice %42 {offsets = [0, 0], sizes = [8, 256], strides = [1, 1]} : vector<32x256xf32> to vector<8x256xf32>
    %45 = tpu.concatenate %44, %44, %44, %44 in 0 : vector<8x256xf32>, vector<8x256xf32>, vector<8x256xf32>, vector<8x256xf32> -> vector<32x256xf32>
    %46 = arith.mulf %43, %45 : vector<32x256xf32>
    %47 = vector.extract_strided_slice %11 {offsets = [32, 0], sizes = [32, 256], strides = [1, 1]} : vector<128x256xf32> to vector<32x256xf32>
    %48 = vector.extract_strided_slice %42 {offsets = [8, 0], sizes = [8, 256], strides = [1, 1]} : vector<32x256xf32> to vector<8x256xf32>
    %49 = tpu.concatenate %48, %48, %48, %48 in 0 : vector<8x256xf32>, vector<8x256xf32>, vector<8x256xf32>, vector<8x256xf32> -> vector<32x256xf32>
    %50 = arith.mulf %47, %49 : vector<32x256xf32>
    %51 = arith.addf %46, %50 : vector<32x256xf32>
    %52 = vector.extract_strided_slice %11 {offsets = [64, 0], sizes = [32, 256], strides = [1, 1]} : vector<128x256xf32> to vector<32x256xf32>
    %53 = vector.extract_strided_slice %42 {offsets = [16, 0], sizes = [8, 256], strides = [1, 1]} : vector<32x256xf32> to vector<8x256xf32>
    %54 = tpu.concatenate %53, %53, %53, %53 in 0 : vector<8x256xf32>, vector<8x256xf32>, vector<8x256xf32>, vector<8x256xf32> -> vector<32x256xf32>
    %55 = arith.mulf %52, %54 : vector<32x256xf32>
    %56 = arith.addf %51, %55 : vector<32x256xf32>
    %57 = vector.extract_strided_slice %11 {offsets = [96, 0], sizes = [32, 256], strides = [1, 1]} : vector<128x256xf32> to vector<32x256xf32>
    %58 = vector.extract_strided_slice %42 {offsets = [24, 0], sizes = [8, 256], strides = [1, 1]} : vector<32x256xf32> to vector<8x256xf32>
    %59 = tpu.concatenate %58, %58, %58, %58 in 0 : vector<8x256xf32>, vector<8x256xf32>, vector<8x256xf32>, vector<8x256xf32> -> vector<32x256xf32>
    %60 = arith.mulf %57, %59 : vector<32x256xf32>
    %61 = arith.addf %56, %60 : vector<32x256xf32>
    %c0_15 = arith.constant 0 : index
    %c0_16 = arith.constant 0 : index
    %62 = vector.load %arg5[%c0_15, %c0_16] : memref<32x256xf32, #tpu.memory_space<vmem>>, vector<32x256xf32>
    tpu.vector_store %arg5[%c0_15, %c0_16], %61 {strides = array<i32>} : memref<32x256xf32, #tpu.memory_space<vmem>>, vector<32x256xf32>,
    return
  }
  func.func @transform_0(%arg0: i32) -> (i32, i32) {
    %c0_i32 = arith.constant 0 : i32
    %c0_i32_0 = arith.constant 0 : i32
    return %c0_i32, %arg0 : i32, i32
  }
  func.func @transform_1(%arg0: i32) -> (i32, i32) {
    %c0_i32 = arith.constant 0 : i32
    %c0_i32_0 = arith.constant 0 : i32
    %c0_i32_1 = arith.constant 0 : i32
    return %c0_i32, %c0_i32_0 : i32, i32
  }
  func.func @transform_2(%arg0: i32) -> (i32, i32) {
    %c0_i32 = arith.constant 0 : i32
    %c0_i32_0 = arith.constant 0 : i32
    %c0_i32_1 = arith.constant 0 : i32
    return %c0_i32, %c0_i32_0 : i32, i32
  }
  func.func @transform_3(%arg0: i32) -> (i32, i32) {
    %c0_i32 = arith.constant 0 : i32
    %c0_i32_0 = arith.constant 0 : i32
    %c0_i32_1 = arith.constant 0 : i32
    return %c0_i32, %c0_i32_0 : i32, i32
  }
  func.func @transform_4(%arg0: i32) -> (i32, i32) {
    %c0_i32 = arith.constant 0 : i32
    %c0_i32_0 = arith.constant 0 : i32
    return %c0_i32, %arg0 : i32, i32
  }
}

</mosaic_0001>

<llo_original>
// kernel: tpu_custom_call.1
$region0: #{tpu_custom_call.1}
  #allocation0 [shape = 'u32[]', space=smem, size = 0x4, offset = 0x4, fixed_abs, tag = 'smem constant byte address 0x4 - core index']
  #allocation1 [shape = 'u32[144,128]{1,0:T(1,128)}', space=vmem, size = 0x12000, scoped, tag = 'internal scratch']
  %s0 = inlined_call_operand.vmem [shape: s32[3,512], index: 0, kind: input, shape index: {}]
  %s1 = inlined_call_operand.vmem [shape: f32[128,4], index: 1, kind: input, shape index: {}]
  %s2 = inlined_call_operand.vmem [shape: f32[128,4], index: 2, kind: input, shape index: {}]
  %s3 = inlined_call_operand.vmem [shape: f32[128,4], index: 3, kind: input, shape index: {}]
  %s4 = inlined_call_operand.hbm [shape: f32[32,512], index: 4, kind: output, shape index: {}]
  %s5 = sld [smem:[#allocation0]]
  $region49: #{tpu_custom_call.1} parent=0
    _
  %s7 = ssub.s32 1, %s5
  %s8 = scalar_select 0, %s7, %s5
  $region1: #{tpu_custom_call.1} parent=0
    #allocation2 [shape = 'u8[65536]{0}', space=vmem, size = 0x10000, scoped, tag = 'output window, operand 0']
    #allocation3 [shape = 's32[2]{0}', space=sflag, size = 0x8, scoped, tag = 'scoped memory for tpu_custom_call.1']
    %9 = vsyncpa [#allocation3], 0
    %s10 = scalar_lea.sflag [#allocation3], 1
    %11 = vsyncpa %s10, 0
    loop: start=0, step=1, limit=4
    $region2: #{tpu_custom_call.1} parent=1 // loop_pre_header
      _
    $region3: #{tpu_custom_call.1} parent=1 // loop_header
      %s13 = sphi 0, %s17
      %p14 = scmp.ge.s32.totalorder %s13, 4
      %s23 = sphi 0, %s25
      %s26 = sphi 0, %s23
      %s27 = sphi 0, %s26
      %s43 = sphi 0, %s27
      %s47 = sphi 0, %s47
      %s49 = sphi 0, %s47
      %s50 = sphi 0, %s49
      %s64 = sphi 0, %s50
      %s68 = sphi 0, %s68
      %s70 = sphi 0, %s68
      %s71 = sphi 0, %s70
      %s85 = sphi 0, %s71
      %s89 = sphi 0, %s89
      %s91 = sphi 0, %s89
      %s92 = sphi 0, %s91
      %s106 = sphi 0, %s92
      %s112 = sphi 0, %s114
      %s115 = sphi 0, %s112
      %s116 = sphi 0, %s115
      %s132 = sphi 0, %s116
    $region4: #{tpu_custom_call.1} parent=1 // loop_header_branch
      %16 = sbr.rel (%p14) target = $region8
    $region5: #{tpu_custom_call.1} parent=1 // loop_body
      %s18 = ssub.s32 %s13, 1
      %s19 = ssub.s32 %s13, 2
      %s20 = sadd.s32 %s13, 1
      %s21 = ssub.s32 %s13, %s20
      %p22 = scmp.eq.s32.totalorder %s21, 0
      %s24 = sadd.s32 %s23, 1
      %s25 = scalar_select %p22, %s23, %s24
      %p28 = pneg %p22
      %p29 = scmp.eq.s32.totalorder %s13, 1
      %p30 = por %p28, %p29
      %p31 = scmp.ne.s32.totalorder %s23, %s26
      %p32 = scmp.eq.s32.totalorder %s13, 0
      %p33 = por %p31, %p32
      %p34 = scmp.ne.s32.totalorder %s23, %s26
      %p35 = scmp.eq.s32.totalorder %s18, 1
      %p36 = por %p34, %p35
      %p37 = scmp.ne.s32.totalorder %s26, %s27
      %p38 = scmp.eq.s32.totalorder %s18, 0
      %p39 = por %p37, %p38
      %p40 = scmp.ne.s32.totalorder %s26, %s27
      %p41 = scmp.eq.s32.totalorder %s19, 1
      %p42 = por %p40, %p41
      %p44 = scmp.ne.s32.totalorder %s27, %s43
      %p45 = scmp.eq.s32.totalorder %s19, 0
      %p46 = por %p44, %p45
      %s48 = sadd.s32 %s47, 1
      %p51 = scmp.eq.s32.totalorder %s13, 1
      %p52 = scmp.ne.s32.totalorder %s47, %s49
      %p53 = scmp.eq.s32.totalorder %s13, 0
      %p54 = por %p52, %p53
      %p55 = scmp.ne.s32.totalorder %s47, %s49
      %p56 = scmp.eq.s32.totalorder %s18, 1
      %p57 = por %p55, %p56
      %p58 = scmp.ne.s32.totalorder %s49, %s50
      %p59 = scmp.eq.s32.totalorder %s18, 0
      %p60 = por %p58, %p59
      %p61 = scmp.ne.s32.totalorder %s49, %s50
      %p62 = scmp.eq.s32.totalorder %s19, 1
      %p63 = por %p61, %p62
      %p65 = scmp.ne.s32.totalorder %s50, %s64
      %p66 = scmp.eq.s32.totalorder %s19, 0
      %p67 = por %p65, %p66
      %s69 = sadd.s32 %s68, 1
      %p72 = scmp.eq.s32.totalorder %s13, 1
      %p73 = scmp.ne.s32.totalorder %s68, %s70
      %p74 = scmp.eq.s32.totalorder %s13, 0
      %p75 = por %p73, %p74
      %p76 = scmp.ne.s32.totalorder %s68, %s70
      %p77 = scmp.eq.s32.totalorder %s18, 1
      %p78 = por %p76, %p77
      %p79 = scmp.ne.s32.totalorder %s70, %s71
      %p80 = scmp.eq.s32.totalorder %s18, 0
      %p81 = por %p79, %p80
      %p82 = scmp.ne.s32.totalorder %s70, %s71
      %p83 = scmp.eq.s32.totalorder %s19, 1
      %p84 = por %p82, %p83
      %p86 = scmp.ne.s32.totalorder %s71, %s85
      %p87 = scmp.eq.s32.totalorder %s19, 0
      %p88 = por %p86, %p87
      %s90 = sadd.s32 %s89, 1
      %p93 = scmp.eq.s32.totalorder %s13, 1
      %p94 = scmp.ne.s32.totalorder %s89, %s91
      %p95 = scmp.eq.s32.totalorder %s13, 0
      %p96 = por %p94, %p95
      %p97 = scmp.ne.s32.totalorder %s89, %s91
      %p98 = scmp.eq.s32.totalorder %s18, 1
      %p99 = por %p97, %p98
      %p100 = scmp.ne.s32.totalorder %s91, %s92
      %p101 = scmp.eq.s32.totalorder %s18, 0
      %p102 = por %p100, %p101
      %p103 = scmp.ne.s32.totalorder %s91, %s92
      %p104 = scmp.eq.s32.totalorder %s19, 1
      %p105 = por %p103, %p104
      %p107 = scmp.ne.s32.totalorder %s92, %s106
      %p108 = scmp.eq.s32.totalorder %s19, 0
      %p109 = por %p107, %p108
      %s110 = ssub.s32 %s13, %s20
      %p111 = scmp.eq.s32.totalorder %s110, 0
      %s113 = sadd.s32 %s112, 1
      %s114 = scalar_select %p111, %s112, %s113
      %p117 = pneg %p111
      %p118 = scmp.eq.s32.totalorder %s13, 1
      %p119 = por %p117, %p118
      %p120 = scmp.ne.s32.totalorder %s112, %s115
      %p121 = scmp.eq.s32.totalorder %s13, 0
      %p122 = por %p120, %p121
      %p123 = scmp.ne.s32.totalorder %s112, %s115
      %p124 = scmp.eq.s32.totalorder %s18, 1
      %p125 = por %p123, %p124
      %p126 = scmp.ne.s32.totalorder %s115, %s116
      %p127 = scmp.eq.s32.totalorder %s18, 0
      %p128 = por %p126, %p127
      %p129 = scmp.ne.s32.totalorder %s115, %s116
      %p130 = scmp.eq.s32.totalorder %s19, 1
      %p131 = por %p129, %p130
      %p133 = scmp.ne.s32.totalorder %s116, %s132
      %p134 = scmp.eq.s32.totalorder %s19, 0
      %p135 = por %p133, %p134
      %p136 = scmp.le.s32.totalorder 1, %s13
      %p137 = scmp.lt.s32.totalorder %s13, 3
      %p138 = pnand %p136, %p137
      %p139 = pneg %p138
      // Predicated region
      $region9: #{tpu_custom_call.1} parent=5 // pred_check
        _
      $region10: #{tpu_custom_call.1} parent=5 // pred_check_branch
        %141 = sbr.rel (%p138) target = $region12
      $region11: #{tpu_custom_call.1} parent=5 // pred_region
        %s142 = ssub.s32 %s13, 1
        // Predicated region
        $region13: #{tpu_custom_call.1} parent=11 // pred_check
          %p143 = pneg %p60
        $region14: #{tpu_custom_call.1} parent=11 // pred_check_branch
          %145 = sbr.rel (%p143) target = $region16
        $region15: #{tpu_custom_call.1} parent=11 // pred_region
          _
        $region16: #{tpu_custom_call.1} parent=11 // pred_fallthru
          _
        // Predicated region
        $region17: #{tpu_custom_call.1} parent=11 // pred_check
          %p146 = pneg %p81
        $region18: #{tpu_custom_call.1} parent=11 // pred_check_branch
          %148 = sbr.rel (%p146) target = $region20
        $region19: #{tpu_custom_call.1} parent=11 // pred_region
          _
        $region20: #{tpu_custom_call.1} parent=11 // pred_fallthru
          _
        // Predicated region
        $region21: #{tpu_custom_call.1} parent=11 // pred_check
          %p149 = pneg %p102
        $region22: #{tpu_custom_call.1} parent=11 // pred_check_branch
          %151 = sbr.rel (%p149) target = $region24
        $region23: #{tpu_custom_call.1} parent=11 // pred_region
          _
        $region24: #{tpu_custom_call.1} parent=11 // pred_fallthru
          _
      $region12: #{tpu_custom_call.1} parent=5 // pred_fallthru
        _
      %p152 = scmp.lt.s32.totalorder %s13, 2
      // Predicated region
      $region25: #{tpu_custom_call.1} parent=5 // pred_check
        %p153 = pneg %p152
      $region26: #{tpu_custom_call.1} parent=5 // pred_check_branch
        %155 = sbr.rel (%p153) target = $region28
      $region27: #{tpu_custom_call.1} parent=5 // pred_region
        // Predicated region
        $region29: #{tpu_custom_call.1} parent=27 // pred_check
          %p156 = pneg %p33
        $region30: #{tpu_custom_call.1} parent=27 // pred_check_branch
          %158 = sbr.rel (%p156) target = $region32
        $region31: #{tpu_custom_call.1} parent=27 // pred_region
          %s159 = smul.u32 2, %s13
          %p160 = scmp.lt.s32.totalorder %s159, 3
          %s161 = scalar_select %p160, %s159, 3
          %s162 = smul.addr %s161, 4
          %s163 = scalar_lea.vmem %s0, %s162
          %s164 = smul.u32 2, %s13
        $region32: #{tpu_custom_call.1} parent=27 // pred_fallthru
          _
      $region28: #{tpu_custom_call.1} parent=5 // pred_fallthru
        _
      %p165 = scmp.le.s32.totalorder 1, %s13
      %p166 = scmp.lt.s32.totalorder %s13, 3
      %p167 = pnand %p165, %p166
      %p168 = pneg %p167
      // Predicated region
      $region33: #{tpu_custom_call.1} parent=5 // pred_check
        _
      $region34: #{tpu_custom_call.1} parent=5 // pred_check_branch
        %170 = sbr.rel (%p167) target = $region36
      $region35: #{tpu_custom_call.1} parent=5 // pred_region
        %s171 = ssub.s32 %s13, 1
        %s172 = smul.u32 2, %s18
        %p173 = scmp.lt.s32.totalorder %s172, 3
        %s174 = scalar_select %p173, %s172, 3
        %s175 = smul.addr %s174, 4
        %s176 = scalar_lea.vmem %s0, %s175
        %p177 = pneg %p39
        %p178 = pneg %p36
        %p179 = pneg %p60
        %p180 = pneg %p57
        %p181 = pneg %p81
        %p182 = pneg %p78
        %p183 = pneg %p102
        %p184 = pneg %p99
        %p185 = pneg %p128
        %p186 = pneg %p125
        %s187 = sand.u32 %s115, 1
        %s188 = scalar_lea.sflag [#allocation3], %s187
        %s189 = sand.u32 %s115, 1
        %s190 = smul.addr %s189, 64
        %s191 = scalar_lea.vmem [#allocation2], %s190
        %s192 = smul.u32 2, %s18
        %p193 = scmp.lt.s32.totalorder %s192, 3
        %s194 = scalar_select %p193, %s192, 3
        %s195 = smul.addr %s194, 4
        %s196 = scalar_lea.vmem %s0, %s195
        %s197 = smul.u32 2, %s18
        %s198 = smul.u32 2, %s18
        %v199 = vld [vmem:[%s196] sm:$0x77]
        %v200 = vld [vmem:[%s1] sm:$0xff]
        %v201 = vld [vmem:[%s1 + $0x8] sm:$0xff]
        %v202 = vld [vmem:[%s1 + $0x10] sm:$0xff]
        %v203 = vld [vmem:[%s1 + $0x18] sm:$0xff]
        %v204 = vld [vmem:[%s1 + $0x20] sm:$0xff]
        %v205 = vld [vmem:[%s1 + $0x28] sm:$0xff]
        %v206 = vld [vmem:[%s1 + $0x30] sm:$0xff]
        %v207 = vld [vmem:[%s1 + $0x38] sm:$0xff]
        %v208 = vld [vmem:[%s1 + $0x40] sm:$0xff]
        %v209 = vld [vmem:[%s1 + $0x48] sm:$0xff]
        %v210 = vld [vmem:[%s1 + $0x50] sm:$0xff]
        %v211 = vld [vmem:[%s1 + $0x58] sm:$0xff]
        %v212 = vld [vmem:[%s1 + $0x60] sm:$0xff]
        %v213 = vld [vmem:[%s1 + $0x68] sm:$0xff]
        %v214 = vld [vmem:[%s1 + $0x70] sm:$0xff]
        %v215 = vld [vmem:[%s1 + $0x78] sm:$0xff]
        %v216 = vlaneseq
        %v217 = vshrl.u32 %v216, 7
        %v218 = vlaneseq
        %v219 = vshrl.u32 %v218, 7
        %v220 = vsub.s32 0, %v219
        %v221 = vrot.slane %v199, %v220
        %v222 = vlaneseq
        %v223 = vshrl.u32 %v222, 7
        %v224 = vsub.s32 4, %v223
        %v225 = vrot.slane %v199, %v224
        %v226 = vlaneseq
        %v227 = vshrl.u32 %v226, 7
        %v228 = vsub.s32 0, %v227
        %v229 = vrot.slane %v221, %v228
        %v230 = vlaneseq
        %v231 = vshrl.u32 %v230, 7
        %v232 = vsub.s32 0, %v231
        %v233 = vrot.slane %v225, %v232
        %vm234 = vcmp.eq.s32.totalorder %v217, %v229
        %vm235 = vcmp.eq.s32.totalorder %v217, %v233
        %v236 = vsel %vm234, 1.0, 0.0
        %v237 = vsel %vm235, 1.0, 0.0
        %vm238 = vcmask 31744
        %v240 = vsel %vm238, %v200, 0
        %v243 = vsel %vm238, %v201, 0
        %v246 = vsel %vm238, %v202, 0
        %v249 = vsel %vm238, %v203, 0
        %v252 = vsel %vm238, %v204, 0
        %v255 = vsel %vm238, %v205, 0
        %v258 = vsel %vm238, %v206, 0
        %v261 = vsel %vm238, %v207, 0
        %v264 = vsel %vm238, %v208, 0
        %v267 = vsel %vm238, %v209, 0
        %v270 = vsel %vm238, %v210, 0
        %v273 = vsel %vm238, %v211, 0
        %v276 = vsel %vm238, %v212, 0
        %v279 = vsel %vm238, %v213, 0
        %v282 = vsel %vm238, %v214, 0
        %v285 = vsel %vm238, %v215, 0
        %vm287 = vcmask 1043456
        %v289 = vsel %vm287, %v236, 0
        %v292 = vsel %vm287, %v237, 0
        %v294 = vand.u32 %v292, 4294901760
        %295 = vmatprep.subr.mxu0 %v294
        %v296 = vand.u32 %v289, 4294901760
        %297 = vmatpush1.msra.mxu0 %v296
        %298 = vmatprep.subr.mxu0 0.0
        %299 = vmatpush1.msra.mxu0 0.0
        %300 = vmatprep.subr.mxu0 0.0
        %301 = vmatpush1.msra.mxu0 0.0
        %302 = vmatprep.subr.mxu0 0.0
        %303 = vmatpush1.msra.mxu0 0.0
        %304 = vmatprep.subr.mxu0 0.0
        %305 = vmatpush1.msra.mxu0 0.0
        %306 = vmatprep.subr.mxu0 0.0
        %307 = vmatpush1.msra.mxu0 0.0
        %308 = vmatprep.subr.mxu0 0.0
        %309 = vmatpush1.msra.mxu0 0.0
        %310 = vmatprep.subr.mxu0 0.0
        %311 = vmatpush1.msra.mxu0 0.0
        %312 = vmatprep.subr.mxu0 0.0
        %313 = vmatpush1.msra.mxu0 0.0
        %314 = vmatprep.subr.mxu0 0.0
        %315 = vmatpush1.msra.mxu0 0.0
        %316 = vmatprep.subr.mxu0 0.0
        %317 = vmatpush1.msra.mxu0 0.0
        %318 = vmatprep.subr.mxu0 0.0
        %319 = vmatpush1.msra.mxu0 0.0
        %320 = vmatprep.subr.mxu0 0.0
        %321 = vmatpush1.msra.mxu0 0.0
        %322 = vmatprep.subr.mxu0 0.0
        %323 = vmatpush1.msra.mxu0 0.0
        %324 = vmatprep.subr.mxu0 0.0
        %325 = vmatpush1.msra.mxu0 0.0
        %326 = vmatprep.subr.mxu0 0.0
        %327 = vmatpush1.msra.mxu0 0.0
        %328 = vmatprep.subr.mxu0 0.0
        %329 = vmatpush1.msra.mxu0 0.0
        %330 = vmatprep.subr.mxu0 0.0
        %331 = vmatpush1.msra.mxu0 0.0
        %332 = vmatprep.subr.mxu0 0.0
        %333 = vmatpush1.msra.mxu0 0.0
        %334 = vmatprep.subr.mxu0 0.0
        %335 = vmatpush1.msra.mxu0 0.0
        %336 = vmatprep.subr.mxu0 0.0
        %337 = vmatpush1.msra.mxu0 0.0
        %338 = vmatprep.subr.mxu0 0.0
        %339 = vmatpush1.msra.mxu0 0.0
        %340 = vmatprep.subr.mxu0 0.0
        %341 = vmatpush1.msra.mxu0 0.0
        %342 = vmatprep.subr.mxu0 0.0
        %343 = vmatpush1.msra.mxu0 0.0
        %344 = vmatprep.subr.mxu0 0.0
        %345 = vmatpush1.msra.mxu0 0.0
        %346 = vmatprep.subr.mxu0 0.0
        %347 = vmatpush1.msra.mxu0 0.0
        %348 = vmatprep.subr.mxu0 0.0
        %349 = vmatpush1.msra.mxu0 0.0
        %350 = vmatprep.subr.mxu0 0.0
        %351 = vmatpush1.msra.mxu0 0.0
        %352 = vmatprep.subr.mxu0 0.0
        %353 = vmatpush1.msra.mxu0 0.0
        %354 = vmatprep.subr.mxu0 0.0
        %355 = vmatpush1.msra.mxu0 0.0
        %356 = vmatprep.subr.mxu0 0.0
        %357 = vmatpush1.msra.mxu0 0.0
        %358 = vmatprep.subr.mxu0 0.0
        %359 = vmatpush1.msra.mxu0 0.0
        %360 = vmatprep.mubr.f32.mxu0 0.0
        %v361 = vand.u32 %v240, 4294901760
        %v362 = vsub.f32 %v240, %v361
        %v363 = vand.u32 %v362, 4294901760
        %v364 = vsub.f32 %v362, %v363
        %v365 = vand.u32 %v364, 4294901760
        %366 = vmatmul.mubr.f32.gmra.mrb[0].mxu0 %v365
        %v367 = vpop.f32.mrb[0].mxu0
        %v368 = vadd.f32 0.0, %v367
        %v369 = vpop.f32.mrb[0].mxu0
        %v370 = vadd.f32 0.0, %v369
        %371 = vmatprep.mubr.f32.mxu0 0.0
        %v372 = vand.u32 %v243, 4294901760
        %v373 = vsub.f32 %v243, %v372
        %v374 = vand.u32 %v373, 4294901760
        %v375 = vsub.f32 %v373, %v374
        %v376 = vand.u32 %v375, 4294901760
        %377 = vmatmul.mubr.f32.gmra.mrb[0].mxu0 %v376
        %v378 = vpop.f32.mrb[0].mxu0
        %v379 = vadd.f32 0.0, %v378
        %v380 = vpop.f32.mrb[0].mxu0
        %v381 = vadd.f32 0.0, %v380
        %382 = vmatprep.mubr.f32.mxu0 0.0
        %v383 = vand.u32 %v246, 4294901760
        %v384 = vsub.f32 %v246, %v383
        %v385 = vand.u32 %v384, 4294901760
        %v386 = vsub.f32 %v384, %v385
        %v387 = vand.u32 %v386, 4294901760
        %388 = vmatmul.mubr.f32.gmra.mrb[0].mxu0 %v387
        %v389 = vpop.f32.mrb[0].mxu0
        %v390 = vadd.f32 0.0, %v389
        %v391 = vpop.f32.mrb[0].mxu0
        %v392 = vadd.f32 0.0, %v391
        %393 = vmatprep.mubr.f32.mxu0 0.0
        %v394 = vand.u32 %v249, 4294901760
        %v395 = vsub.f32 %v249, %v394
        %v396 = vand.u32 %v395, 4294901760
        %v397 = vsub.f32 %v395, %v396
        %v398 = vand.u32 %v397, 4294901760
        %399 = vmatmul.mubr.f32.gmra.mrb[0].mxu0 %v398
        %v400 = vpop.f32.mrb[0].mxu0
        %v401 = vadd.f32 0.0, %v400
        %v402 = vpop.f32.mrb[0].mxu0
        %v403 = vadd.f32 0.0, %v402
        %404 = vmatprep.mubr.f32.mxu0 0.0
        %v405 = vand.u32 %v252, 4294901760
        %v406 = vsub.f32 %v252, %v405
        %v407 = vand.u32 %v406, 4294901760
        %v408 = vsub.f32 %v406, %v407
        %v409 = vand.u32 %v408, 4294901760
        %410 = vmatmul.mubr.f32.gmra.mrb[0].mxu0 %v409
        %v411 = vpop.f32.mrb[0].mxu0
        %v412 = vadd.f32 0.0, %v411
        %v413 = vpop.f32.mrb[0].mxu0
        %v414 = vadd.f32 0.0, %v413
        %415 = vmatprep.mubr.f32.mxu0 0.0
        %v416 = vand.u32 %v255, 4294901760
        %v417 = vsub.f32 %v255, %v416
        %v418 = vand.u32 %v417, 4294901760
        %v419 = vsub.f32 %v417, %v418
        %v420 = vand.u32 %v419, 4294901760
        %421 = vmatmul.mubr.f32.gmra.mrb[0].mxu0 %v420
        %v422 = vpop.f32.mrb[0].mxu0
        %v423 = vadd.f32 0.0, %v422
        %v424 = vpop.f32.mrb[0].mxu0
        %v425 = vadd.f32 0.0, %v424
        %426 = vmatprep.mubr.f32.mxu0 0.0
        %v427 = vand.u32 %v258, 4294901760
        %v428 = vsub.f32 %v258, %v427
        %v429 = vand.u32 %v428, 4294901760
        %v430 = vsub.f32 %v428, %v429
        %v431 = vand.u32 %v430, 4294901760
        %432 = vmatmul.mubr.f32.gmra.mrb[0].mxu0 %v431
        %v433 = vpop.f32.mrb[0].mxu0
        %v434 = vadd.f32 0.0, %v433
        %v435 = vpop.f32.mrb[0].mxu0
        %v436 = vadd.f32 0.0, %v435
        %437 = vmatprep.mubr.f32.mxu0 0.0
        %v438 = vand.u32 %v261, 4294901760
        %v439 = vsub.f32 %v261, %v438
        %v440 = vand.u32 %v439, 4294901760
        %v441 = vsub.f32 %v439, %v440
        %v442 = vand.u32 %v441, 4294901760
        %443 = vmatmul.mubr.f32.gmra.mrb[0].mxu0 %v442
        %v444 = vpop.f32.mrb[0].mxu0
        %v445 = vadd.f32 0.0, %v444
        %v446 = vpop.f32.mrb[0].mxu0
        %v447 = vadd.f32 0.0, %v446
        %448 = vmatprep.mubr.f32.mxu0 0.0
        %v449 = vand.u32 %v264, 4294901760
        %v450 = vsub.f32 %v264, %v449
        %v451 = vand.u32 %v450, 4294901760
        %v452 = vsub.f32 %v450, %v451
        %v453 = vand.u32 %v452, 4294901760
        %454 = vmatmul.mubr.f32.gmra.mrb[0].mxu0 %v453
        %v455 = vpop.f32.mrb[0].mxu0
        %v456 = vadd.f32 0.0, %v455
        %v457 = vpop.f32.mrb[0].mxu0
        %v458 = vadd.f32 0.0, %v457
        %459 = vmatprep.mubr.f32.mxu0 0.0
        %v460 = vand.u32 %v267, 4294901760
        %v461 = vsub.f32 %v267, %v460
        %v462 = vand.u32 %v461, 4294901760
        %v463 = vsub.f32 %v461, %v462
        %v464 = vand.u32 %v463, 4294901760
        %465 = vmatmul.mubr.f32.gmra.mrb[0].mxu0 %v464
        %v466 = vpop.f32.mrb[0].mxu0
        %v467 = vadd.f32 0.0, %v466
        %v468 = vpop.f32.mrb[0].mxu0
        %v469 = vadd.f32 0.0, %v468
        %470 = vmatprep.mubr.f32.mxu0 0.0
        %v471 = vand.u32 %v270, 4294901760
        %v472 = vsub.f32 %v270, %v471
        %v473 = vand.u32 %v472, 4294901760
        %v474 = vsub.f32 %v472, %v473
        %v475 = vand.u32 %v474, 4294901760
        %476 = vmatmul.mubr.f32.gmra.mrb[0].mxu0 %v475
        %v477 = vpop.f32.mrb[0].mxu0
        %v478 = vadd.f32 0.0, %v477
        %v479 = vpop.f32.mrb[0].mxu0
        %v480 = vadd.f32 0.0, %v479
        %481 = vmatprep.mubr.f32.mxu0 0.0
        %v482 = vand.u32 %v273, 4294901760
        %v483 = vsub.f32 %v273, %v482
        %v484 = vand.u32 %v483, 4294901760
        %v485 = vsub.f32 %v483, %v484
        %v486 = vand.u32 %v485, 4294901760
        %487 = vmatmul.mubr.f32.gmra.mrb[0].mxu0 %v486
        %v488 = vpop.f32.mrb[0].mxu0
        %v489 = vadd.f32 0.0, %v488
        %v490 = vpop.f32.mrb[0].mxu0
        %v491 = vadd.f32 0.0, %v490
        %492 = vmatprep.mubr.f32.mxu0 0.0
        %v493 = vand.u32 %v276, 4294901760
        %v494 = vsub.f32 %v276, %v493
        %v495 = vand.u32 %v494, 4294901760
        %v496 = vsub.f32 %v494, %v495
        %v497 = vand.u32 %v496, 4294901760
        %498 = vmatmul.mubr.f32.gmra.mrb[0].mxu0 %v497
        %v499 = vpop.f32.mrb[0].mxu0
        %v500 = vadd.f32 0.0, %v499
        %v501 = vpop.f32.mrb[0].mxu0
        %v502 = vadd.f32 0.0, %v501
        %503 = vmatprep.mubr.f32.mxu0 0.0
        %v504 = vand.u32 %v279, 4294901760
        %v505 = vsub.f32 %v279, %v504
        %v506 = vand.u32 %v505, 4294901760
        %v507 = vsub.f32 %v505, %v506
        %v508 = vand.u32 %v507, 4294901760
        %509 = vmatmul.mubr.f32.gmra.mrb[0].mxu0 %v508
        %v510 = vpop.f32.mrb[0].mxu0
        %v511 = vadd.f32 0.0, %v510
        %v512 = vpop.f32.mrb[0].mxu0
        %v513 = vadd.f32 0.0, %v512
        %514 = vmatprep.mubr.f32.mxu0 0.0
        %v515 = vand.u32 %v282, 4294901760
        %v516 = vsub.f32 %v282, %v515
        %v517 = vand.u32 %v516, 4294901760
        %v518 = vsub.f32 %v516, %v517
        %v519 = vand.u32 %v518, 4294901760
        %520 = vmatmul.mubr.f32.gmra.mrb[0].mxu0 %v519
        %v521 = vpop.f32.mrb[0].mxu0
        %v522 = vadd.f32 0.0, %v521
        %v523 = vpop.f32.mrb[0].mxu0
        %v524 = vadd.f32 0.0, %v523
        %525 = vmatprep.mubr.f32.mxu0 0.0
        %v526 = vand.u32 %v285, 4294901760
        %v527 = vsub.f32 %v285, %v526
        %v528 = vand.u32 %v527, 4294901760
        %v529 = vsub.f32 %v527, %v528
        %v530 = vand.u32 %v529, 4294901760
        %531 = vmatmul.mubr.f32.gmra.mrb[0].mxu0 %v530
        %v532 = vpop.f32.mrb[0].mxu0
        %v533 = vadd.f32 0.0, %v532
        %v534 = vpop.f32.mrb[0].mxu0
        %v535 = vadd.f32 0.0, %v534
        %536 = vdwg.mxu0
        %v537 = vand.u32 %v292, 4294901760
        %v538 = vsub.f32 %v292, %v537
        %v539 = vand.u32 %v538, 4294901760
        %v540 = vsub.f32 %v538, %v539
        %v541 = vand.u32 %v540, 4294901760
        %542 = vmatprep.subr.mxu0 %v541
        %v543 = vand.u32 %v289, 4294901760
        %v544 = vsub.f32 %v289, %v543
        %v545 = vand.u32 %v544, 4294901760
        %v546 = vsub.f32 %v544, %v545
        %v547 = vand.u32 %v546, 4294901760
        %548 = vmatpush1.msra.mxu0 %v547
        %549 = vmatprep.subr.mxu0 0.0
        %550 = vmatpush1.msra.mxu0 0.0
        %551 = vmatprep.subr.mxu0 0.0
        %552 = vmatpush1.msra.mxu0 0.0
        %553 = vmatprep.subr.mxu0 0.0
        %554 = vmatpush1.msra.mxu0 0.0
        %555 = vmatprep.subr.mxu0 0.0
        %556 = vmatpush1.msra.mxu0 0.0
        %557 = vmatprep.subr.mxu0 0.0
        %558 = vmatpush1.msra.mxu0 0.0
        %559 = vmatprep.subr.mxu0 0.0
        %560 = vmatpush1.msra.mxu0 0.0
        %561 = vmatprep.subr.mxu0 0.0
        %562 = vmatpush1.msra.mxu0 0.0
        %563 = vmatprep.subr.mxu0 0.0
        %564 = vmatpush1.msra.mxu0 0.0
        %565 = vmatprep.subr.mxu0 0.0
        %566 = vmatpush1.msra.mxu0 0.0
        %567 = vmatprep.subr.mxu0 0.0
        %568 = vmatpush1.msra.mxu0 0.0
        %569 = vmatprep.subr.mxu0 0.0
        %570 = vmatpush1.msra.mxu0 0.0
        %571 = vmatprep.subr.mxu0 0.0
        %572 = vmatpush1.msra.mxu0 0.0
        %573 = vmatprep.subr.mxu0 0.0
        %574 = vmatpush1.msra.mxu0 0.0
        %575 = vmatprep.subr.mxu0 0.0
        %576 = vmatpush1.msra.mxu0 0.0
        %577 = vmatprep.subr.mxu0 0.0
        %578 = vmatpush1.msra.mxu0 0.0
        %579 = vmatprep.subr.mxu0 0.0
        %580 = vmatpush1.msra.mxu0 0.0
        %581 = vmatprep.subr.mxu0 0.0
        %582 = vmatpush1.msra.mxu0 0.0
        %583 = vmatprep.subr.mxu0 0.0
        %584 = vmatpush1.msra.mxu0 0.0
        %585 = vmatprep.subr.mxu0 0.0
        %586 = vmatpush1.msra.mxu0 0.0
        %587 = vmatprep.subr.mxu0 0.0
        %588 = vmatpush1.msra.mxu0 0.0
        %589 = vmatprep.subr.mxu0 0.0
        %590 = vmatpush1.msra.mxu0 0.0
        %591 = vmatprep.subr.mxu0 0.0
        %592 = vmatpush1.msra.mxu0 0.0
        %593 = vmatprep.subr.mxu0 0.0
        %594 = vmatpush1.msra.mxu0 0.0
        %595 = vmatprep.subr.mxu0 0.0
        %596 = vmatpush1.msra.mxu0 0.0
        %597 = vmatprep.subr.mxu0 0.0
        %598 = vmatpush1.msra.mxu0 0.0
        %599 = vmatprep.subr.mxu0 0.0
        %600 = vmatpush1.msra.mxu0 0.0
        %601 = vmatprep.subr.mxu0 0.0
        %602 = vmatpush1.msra.mxu0 0.0
        %603 = vmatprep.subr.mxu0 0.0
        %604 = vmatpush1.msra.mxu0 0.0
        %605 = vmatprep.subr.mxu0 0.0
        %606 = vmatpush1.msra.mxu0 0.0
        %607 = vmatprep.subr.mxu0 0.0
        %608 = vmatpush1.msra.mxu0 0.0
        %609 = vmatprep.subr.mxu0 0.0
        %610 = vmatpush1.msra.mxu0 0.0
        %611 = vmatprep.mubr.f32.mxu0 0.0
        %v612 = vand.u32 %v240, 4294901760
        %613 = vmatmul.mubr.f32.gmra.mrb[0].mxu0 %v612
        %v614 = vpop.f32.mrb[0].mxu0
        %v615 = vadd.f32 %v368, %v614
        %v616 = vpop.f32.mrb[0].mxu0
        %v617 = vadd.f32 %v370, %v616
        %618 = vmatprep.mubr.f32.mxu0 0.0
        %v619 = vand.u32 %v243, 4294901760
        %620 = vmatmul.mubr.f32.gmra.mrb[0].mxu0 %v619
        %v621 = vpop.f32.mrb[0].mxu0
        %v622 = vadd.f32 %v379, %v621
        %v623 = vpop.f32.mrb[0].mxu0
        %v624 = vadd.f32 %v381, %v623
        %625 = vmatprep.mubr.f32.mxu0 0.0
        %v626 = vand.u32 %v246, 4294901760
        %627 = vmatmul.mubr.f32.gmra.mrb[0].mxu0 %v626
        %v628 = vpop.f32.mrb[0].mxu0
        %v629 = vadd.f32 %v390, %v628
        %v630 = vpop.f32.mrb[0].mxu0
        %v631 = vadd.f32 %v392, %v630
        %632 = vmatprep.mubr.f32.mxu0 0.0
        %v633 = vand.u32 %v249, 4294901760
        %634 = vmatmul.mubr.f32.gmra.mrb[0].mxu0 %v633
        %v635 = vpop.f32.mrb[0].mxu0
        %v636 = vadd.f32 %v401, %v635
        %v637 = vpop.f32.mrb[0].mxu0
        %v638 = vadd.f32 %v403, %v637
        %639 = vmatprep.mubr.f32.mxu0 0.0
        %v640 = vand.u32 %v252, 4294901760
        %641 = vmatmul.mubr.f32.gmra.mrb[0].mxu0 %v640
        %v642 = vpop.f32.mrb[0].mxu0
        %v643 = vadd.f32 %v412, %v642
        %v644 = vpop.f32.mrb[0].mxu0
        %v645 = vadd.f32 %v414, %v644
        %646 = vmatprep.mubr.f32.mxu0 0.0
        %v647 = vand.u32 %v255, 4294901760
        %648 = vmatmul.mubr.f32.gmra.mrb[0].mxu0 %v647
        %v649 = vpop.f32.mrb[0].mxu0
        %v650 = vadd.f32 %v423, %v649
        %v651 = vpop.f32.mrb[0].mxu0
        %v652 = vadd.f32 %v425, %v651
        %653 = vmatprep.mubr.f32.mxu0 0.0
        %v654 = vand.u32 %v258, 4294901760
        %655 = vmatmul.mubr.f32.gmra.mrb[0].mxu0 %v654
        %v656 = vpop.f32.mrb[0].mxu0
        %v657 = vadd.f32 %v434, %v656
        %v658 = vpop.f32.mrb[0].mxu0
        %v659 = vadd.f32 %v436, %v658
        %660 = vmatprep.mubr.f32.mxu0 0.0
        %v661 = vand.u32 %v261, 4294901760
        %662 = vmatmul.mubr.f32.gmra.mrb[0].mxu0 %v661
        %v663 = vpop.f32.mrb[0].mxu0
        %v664 = vadd.f32 %v445, %v663
        %v665 = vpop.f32.mrb[0].mxu0
        %v666 = vadd.f32 %v447, %v665
        %667 = vmatprep.mubr.f32.mxu0 0.0
        %v668 = vand.u32 %v264, 4294901760
        %669 = vmatmul.mubr.f32.gmra.mrb[0].mxu0 %v668
        %v670 = vpop.f32.mrb[0].mxu0
        %v671 = vadd.f32 %v456, %v670
        %v672 = vpop.f32.mrb[0].mxu0
        %v673 = vadd.f32 %v458, %v672
        %674 = vmatprep.mubr.f32.mxu0 0.0
        %v675 = vand.u32 %v267, 4294901760
        %676 = vmatmul.mubr.f32.gmra.mrb[0].mxu0 %v675
        %v677 = vpop.f32.mrb[0].mxu0
        %v678 = vadd.f32 %v467, %v677
        %v679 = vpop.f32.mrb[0].mxu0
        %v680 = vadd.f32 %v469, %v679
        %681 = vmatprep.mubr.f32.mxu0 0.0
        %v682 = vand.u32 %v270, 4294901760
        %683 = vmatmul.mubr.f32.gmra.mrb[0].mxu0 %v682
        %v684 = vpop.f32.mrb[0].mxu0
        %v685 = vadd.f32 %v478, %v684
        %v686 = vpop.f32.mrb[0].mxu0
        %v687 = vadd.f32 %v480, %v686
        %688 = vmatprep.mubr.f32.mxu0 0.0
        %v689 = vand.u32 %v273, 4294901760
        %690 = vmatmul.mubr.f32.gmra.mrb[0].mxu0 %v689
        %v691 = vpop.f32.mrb[0].mxu0
        %v692 = vadd.f32 %v489, %v691
        %v693 = vpop.f32.mrb[0].mxu0
        %v694 = vadd.f32 %v491, %v693
        %695 = vmatprep.mubr.f32.mxu0 0.0
        %v696 = vand.u32 %v276, 4294901760
        %697 = vmatmul.mubr.f32.gmra.mrb[0].mxu0 %v696
        %v698 = vpop.f32.mrb[0].mxu0
        %v699 = vadd.f32 %v500, %v698
        %v700 = vpop.f32.mrb[0].mxu0
        %v701 = vadd.f32 %v502, %v700
        %702 = vmatprep.mubr.f32.mxu0 0.0
        %v703 = vand.u32 %v279, 4294901760
        %704 = vmatmul.mubr.f32.gmra.mrb[0].mxu0 %v703
        %v705 = vpop.f32.mrb[0].mxu0
        %v706 = vadd.f32 %v511, %v705
        %v707 = vpop.f32.mrb[0].mxu0
        %v708 = vadd.f32 %v513, %v707
        %709 = vmatprep.mubr.f32.mxu0 0.0
        %v710 = vand.u32 %v282, 4294901760
        %711 = vmatmul.mubr.f32.gmra.mrb[0].mxu0 %v710
        %v712 = vpop.f32.mrb[0].mxu0
        %v713 = vadd.f32 %v522, %v712
        %v714 = vpop.f32.mrb[0].mxu0
        %v715 = vadd.f32 %v524, %v714
        %716 = vmatprep.mubr.f32.mxu0 0.0
        %v717 = vand.u32 %v285, 4294901760
        %718 = vmatmul.mubr.f32.gmra.mrb[0].mxu0 %v717
        %v719 = vpop.f32.mrb[0].mxu0
        %v720 = vadd.f32 %v533, %v719
        %v721 = vpop.f32.mrb[0].mxu0
        %v722 = vadd.f32 %v535, %v721
        %723 = vdwg.mxu0
        %v724 = vand.u32 %v292, 4294901760
        %v725 = vsub.f32 %v292, %v724
        %726 = vmatprep.subr.mxu0 %v725
        %v727 = vand.u32 %v289, 4294901760
        %v728 = vsub.f32 %v289, %v727
        %729 = vmatpush1.msra.mxu0 %v728
        %730 = vmatprep.subr.mxu0 0.0
        %731 = vmatpush1.msra.mxu0 0.0
        %732 = vmatprep.subr.mxu0 0.0
        %733 = vmatpush1.msra.mxu0 0.0
        %734 = vmatprep.subr.mxu0 0.0
        %735 = vmatpush1.msra.mxu0 0.0
        %736 = vmatprep.subr.mxu0 0.0
        %737 = vmatpush1.msra.mxu0 0.0
        %738 = vmatprep.subr.mxu0 0.0
        %739 = vmatpush1.msra.mxu0 0.0
        %740 = vmatprep.subr.mxu0 0.0
        %741 = vmatpush1.msra.mxu0 0.0
        %742 = vmatprep.subr.mxu0 0.0
        %743 = vmatpush1.msra.mxu0 0.0
        %744 = vmatprep.subr.mxu0 0.0
        %745 = vmatpush1.msra.mxu0 0.0
        %746 = vmatprep.subr.mxu0 0.0
        %747 = vmatpush1.msra.mxu0 0.0
        %748 = vmatprep.subr.mxu0 0.0
        %749 = vmatpush1.msra.mxu0 0.0
        %750 = vmatprep.subr.mxu0 0.0
        %751 = vmatpush1.msra.mxu0 0.0
        %752 = vmatprep.subr.mxu0 0.0
        %753 = vmatpush1.msra.mxu0 0.0
        %754 = vmatprep.subr.mxu0 0.0
        %755 = vmatpush1.msra.mxu0 0.0
        %756 = vmatprep.subr.mxu0 0.0
        %757 = vmatpush1.msra.mxu0 0.0
        %758 = vmatprep.subr.mxu0 0.0
        %759 = vmatpush1.msra.mxu0 0.0
        %760 = vmatprep.subr.mxu0 0.0
        %761 = vmatpush1.msra.mxu0 0.0
        %762 = vmatprep.subr.mxu0 0.0
        %763 = vmatpush1.msra.mxu0 0.0
        %764 = vmatprep.subr.mxu0 0.0
        %765 = vmatpush1.msra.mxu0 0.0
        %766 = vmatprep.subr.mxu0 0.0
        %767 = vmatpush1.msra.mxu0 0.0
        %768 = vmatprep.subr.mxu0 0.0
        %769 = vmatpush1.msra.mxu0 0.0
        %770 = vmatprep.subr.mxu0 0.0
        %771 = vmatpush1.msra.mxu0 0.0
        %772 = vmatprep.subr.mxu0 0.0
        %773 = vmatpush1.msra.mxu0 0.0
        %774 = vmatprep.subr.mxu0 0.0
        %775 = vmatpush1.msra.mxu0 0.0
        %776 = vmatprep.subr.mxu0 0.0
        %777 = vmatpush1.msra.mxu0 0.0
        %778 = vmatprep.subr.mxu0 0.0
        %779 = vmatpush1.msra.mxu0 0.0
        %780 = vmatprep.subr.mxu0 0.0
        %781 = vmatpush1.msra.mxu0 0.0
        %782 = vmatprep.subr.mxu0 0.0
        %783 = vmatpush1.msra.mxu0 0.0
        %784 = vmatprep.subr.mxu0 0.0
        %785 = vmatpush1.msra.mxu0 0.0
        %786 = vmatprep.subr.mxu0 0.0
        %787 = vmatpush1.msra.mxu0 0.0
        %788 = vmatprep.subr.mxu0 0.0
        %789 = vmatpush1.msra.mxu0 0.0
        %790 = vmatprep.subr.mxu0 0.0
        %791 = vmatpush1.msra.mxu0 0.0
        %792 = vmatprep.mubr.f32.mxu0 0.0
        %v793 = vand.u32 %v240, 4294901760
        %v794 = vsub.f32 %v240, %v793
        %795 = vmatmul.mubr.f32.gmra.mrb[0].mxu0 %v794
        %v796 = vpop.f32.mrb[0].mxu0
        %v797 = vadd.f32 %v615, %v796
        %v798 = vpop.f32.mrb[0].mxu0
        %v799 = vadd.f32 %v617, %v798
        %800 = vmatprep.mubr.f32.mxu0 0.0
        %v801 = vand.u32 %v243, 4294901760
        %v802 = vsub.f32 %v243, %v801
        %803 = vmatmul.mubr.f32.gmra.mrb[0].mxu0 %v802
        %v804 = vpop.f32.mrb[0].mxu0
        %v805 = vadd.f32 %v622, %v804
        %v806 = vpop.f32.mrb[0].mxu0
        %v807 = vadd.f32 %v624, %v806
        %808 = vmatprep.mubr.f32.mxu0 0.0
        %v809 = vand.u32 %v246, 4294901760
        %v810 = vsub.f32 %v246, %v809
        %811 = vmatmul.mubr.f32.gmra.mrb[0].mxu0 %v810
        %v812 = vpop.f32.mrb[0].mxu0
        %v813 = vadd.f32 %v629, %v812
        %v814 = vpop.f32.mrb[0].mxu0
        %v815 = vadd.f32 %v631, %v814
        %816 = vmatprep.mubr.f32.mxu0 0.0
        %v817 = vand.u32 %v249, 4294901760
        %v818 = vsub.f32 %v249, %v817
        %819 = vmatmul.mubr.f32.gmra.mrb[0].mxu0 %v818
        %v820 = vpop.f32.mrb[0].mxu0
        %v821 = vadd.f32 %v636, %v820
        %v822 = vpop.f32.mrb[0].mxu0
        %v823 = vadd.f32 %v638, %v822
        %824 = vmatprep.mubr.f32.mxu0 0.0
        %v825 = vand.u32 %v252, 4294901760
        %v826 = vsub.f32 %v252, %v825
        %827 = vmatmul.mubr.f32.gmra.mrb[0].mxu0 %v826
        %v828 = vpop.f32.mrb[0].mxu0
        %v829 = vadd.f32 %v643, %v828
        %v830 = vpop.f32.mrb[0].mxu0
        %v831 = vadd.f32 %v645, %v830
        %832 = vmatprep.mubr.f32.mxu0 0.0
        %v833 = vand.u32 %v255, 4294901760
        %v834 = vsub.f32 %v255, %v833
        %835 = vmatmul.mubr.f32.gmra.mrb[0].mxu0 %v834
        %v836 = vpop.f32.mrb[0].mxu0
        %v837 = vadd.f32 %v650, %v836
        %v838 = vpop.f32.mrb[0].mxu0
        %v839 = vadd.f32 %v652, %v838
        %840 = vmatprep.mubr.f32.mxu0 0.0
        %v841 = vand.u32 %v258, 4294901760
        %v842 = vsub.f32 %v258, %v841
        %843 = vmatmul.mubr.f32.gmra.mrb[0].mxu0 %v842
        %v844 = vpop.f32.mrb[0].mxu0
        %v845 = vadd.f32 %v657, %v844
        %v846 = vpop.f32.mrb[0].mxu0
        %v847 = vadd.f32 %v659, %v846
        %848 = vmatprep.mubr.f32.mxu0 0.0
        %v849 = vand.u32 %v261, 4294901760
        %v850 = vsub.f32 %v261, %v849
        %851 = vmatmul.mubr.f32.gmra.mrb[0].mxu0 %v850
        %v852 = vpop.f32.mrb[0].mxu0
        %v853 = vadd.f32 %v664, %v852
        %v854 = vpop.f32.mrb[0].mxu0
        %v855 = vadd.f32 %v666, %v854
        %856 = vmatprep.mubr.f32.mxu0 0.0
        %v857 = vand.u32 %v264, 4294901760
        %v858 = vsub.f32 %v264, %v857
        %859 = vmatmul.mubr.f32.gmra.mrb[0].mxu0 %v858
        %v860 = vpop.f32.mrb[0].mxu0
        %v861 = vadd.f32 %v671, %v860
        %v862 = vpop.f32.mrb[0].mxu0
        %v863 = vadd.f32 %v673, %v862
        %864 = vmatprep.mubr.f32.mxu0 0.0
        %v865 = vand.u32 %v267, 4294901760
        %v866 = vsub.f32 %v267, %v865
        %867 = vmatmul.mubr.f32.gmra.mrb[0].mxu0 %v866
        %v868 = vpop.f32.mrb[0].mxu0
        %v869 = vadd.f32 %v678, %v868
        %v870 = vpop.f32.mrb[0].mxu0
        %v871 = vadd.f32 %v680, %v870
        %872 = vmatprep.mubr.f32.mxu0 0.0
        %v873 = vand.u32 %v270, 4294901760
        %v874 = vsub.f32 %v270, %v873
        %875 = vmatmul.mubr.f32.gmra.mrb[0].mxu0 %v874
        %v876 = vpop.f32.mrb[0].mxu0
        %v877 = vadd.f32 %v685, %v876
        %v878 = vpop.f32.mrb[0].mxu0
        %v879 = vadd.f32 %v687, %v878
        %880 = vmatprep.mubr.f32.mxu0 0.0
        %v881 = vand.u32 %v273, 4294901760
        %v882 = vsub.f32 %v273, %v881
        %883 = vmatmul.mubr.f32.gmra.mrb[0].mxu0 %v882
        %v884 = vpop.f32.mrb[0].mxu0
        %v885 = vadd.f32 %v692, %v884
        %v886 = vpop.f32.mrb[0].mxu0
        %v887 = vadd.f32 %v694, %v886
        %888 = vmatprep.mubr.f32.mxu0 0.0
        %v889 = vand.u32 %v276, 4294901760
        %v890 = vsub.f32 %v276, %v889
        %891 = vmatmul.mubr.f32.gmra.mrb[0].mxu0 %v890
        %v892 = vpop.f32.mrb[0].mxu0
        %v893 = vadd.f32 %v699, %v892
        %v894 = vpop.f32.mrb[0].mxu0
        %v895 = vadd.f32 %v701, %v894
        %896 = vmatprep.mubr.f32.mxu0 0.0
        %v897 = vand.u32 %v279, 4294901760
        %v898 = vsub.f32 %v279, %v897
        %899 = vmatmul.mubr.f32.gmra.mrb[0].mxu0 %v898
        %v900 = vpop.f32.mrb[0].mxu0
        %v901 = vadd.f32 %v706, %v900
        %v902 = vpop.f32.mrb[0].mxu0
        %v903 = vadd.f32 %v708, %v902
        %904 = vmatprep.mubr.f32.mxu0 0.0
        %v905 = vand.u32 %v282, 4294901760
        %v906 = vsub.f32 %v282, %v905
        %907 = vmatmul.mubr.f32.gmra.mrb[0].mxu0 %v906
        %v908 = vpop.f32.mrb[0].mxu0
        %v909 = vadd.f32 %v713, %v908
        %v910 = vpop.f32.mrb[0].mxu0
        %v911 = vadd.f32 %v715, %v910
        %912 = vmatprep.mubr.f32.mxu0 0.0
        %v913 = vand.u32 %v285, 4294901760
        %v914 = vsub.f32 %v285, %v913
        %915 = vmatmul.mubr.f32.gmra.mrb[0].mxu0 %v914
        %v916 = vpop.f32.mrb[0].mxu0
        %v917 = vadd.f32 %v720, %v916
        %v918 = vpop.f32.mrb[0].mxu0
        %v919 = vadd.f32 %v722, %v918
        %920 = vdwg.mxu0
        %v921 = vand.u32 %v292, 4294901760
        %922 = vmatprep.subr.mxu0 %v921
        %v923 = vand.u32 %v289, 4294901760
        %924 = vmatpush1.msra.mxu0 %v923
        %925 = vmatprep.subr.mxu0 0.0
        %926 = vmatpush1.msra.mxu0 0.0
        %927 = vmatprep.subr.mxu0 0.0
        %928 = vmatpush1.msra.mxu0 0.0
        %929 = vmatprep.subr.mxu0 0.0
        %930 = vmatpush1.msra.mxu0 0.0
        %931 = vmatprep.subr.mxu0 0.0
        %932 = vmatpush1.msra.mxu0 0.0
        %933 = vmatprep.subr.mxu0 0.0
        %934 = vmatpush1.msra.mxu0 0.0
        %935 = vmatprep.subr.mxu0 0.0
        %936 = vmatpush1.msra.mxu0 0.0
        %937 = vmatprep.subr.mxu0 0.0
        %938 = vmatpush1.msra.mxu0 0.0
        %939 = vmatprep.subr.mxu0 0.0
        %940 = vmatpush1.msra.mxu0 0.0
        %941 = vmatprep.subr.mxu0 0.0
        %942 = vmatpush1.msra.mxu0 0.0
        %943 = vmatprep.subr.mxu0 0.0
        %944 = vmatpush1.msra.mxu0 0.0
        %945 = vmatprep.subr.mxu0 0.0
        %946 = vmatpush1.msra.mxu0 0.0
        %947 = vmatprep.subr.mxu0 0.0
        %948 = vmatpush1.msra.mxu0 0.0
        %949 = vmatprep.subr.mxu0 0.0
        %950 = vmatpush1.msra.mxu0 0.0
        %951 = vmatprep.subr.mxu0 0.0
        %952 = vmatpush1.msra.mxu0 0.0
        %953 = vmatprep.subr.mxu0 0.0
        %954 = vmatpush1.msra.mxu0 0.0
        %955 = vmatprep.subr.mxu0 0.0
        %956 = vmatpush1.msra.mxu0 0.0
        %957 = vmatprep.subr.mxu0 0.0
        %958 = vmatpush1.msra.mxu0 0.0
        %959 = vmatprep.subr.mxu0 0.0
        %960 = vmatpush1.msra.mxu0 0.0
        %961 = vmatprep.subr.mxu0 0.0
        %962 = vmatpush1.msra.mxu0 0.0
        %963 = vmatprep.subr.mxu0 0.0
        %964 = vmatpush1.msra.mxu0 0.0
        %965 = vmatprep.subr.mxu0 0.0
        %966 = vmatpush1.msra.mxu0 0.0
        %967 = vmatprep.subr.mxu0 0.0
        %968 = vmatpush1.msra.mxu0 0.0
        %969 = vmatprep.subr.mxu0 0.0
        %970 = vmatpush1.msra.mxu0 0.0
        %971 = vmatprep.subr.mxu0 0.0
        %972 = vmatpush1.msra.mxu0 0.0
        %973 = vmatprep.subr.mxu0 0.0
        %974 = vmatpush1.msra.mxu0 0.0
        %975 = vmatprep.subr.mxu0 0.0
        %976 = vmatpush1.msra.mxu0 0.0
        %977 = vmatprep.subr.mxu0 0.0
        %978 = vmatpush1.msra.mxu0 0.0
        %979 = vmatprep.subr.mxu0 0.0
        %980 = vmatpush1.msra.mxu0 0.0
        %981 = vmatprep.subr.mxu0 0.0
        %982 = vmatpush1.msra.mxu0 0.0
        %983 = vmatprep.subr.mxu0 0.0
        %984 = vmatpush1.msra.mxu0 0.0
        %985 = vmatprep.subr.mxu0 0.0
        %986 = vmatpush1.msra.mxu0 0.0
        %987 = vmatprep.mubr.f32.mxu0 0.0
        %v988 = vand.u32 %v240, 4294901760
        %v989 = vsub.f32 %v240, %v988
        %v990 = vand.u32 %v989, 4294901760
        %991 = vmatmul.mubr.f32.gmra.mrb[0].mxu0 %v990
        %v992 = vpop.f32.mrb[0].mxu0
        %v993 = vadd.f32 %v797, %v992
        %v994 = vpop.f32.mrb[0].mxu0
        %v995 = vadd.f32 %v799, %v994
        %996 = vmatprep.mubr.f32.mxu0 0.0
        %v997 = vand.u32 %v243, 4294901760
        %v998 = vsub.f32 %v243, %v997
        %v999 = vand.u32 %v998, 4294901760
        %1000 = vmatmul.mubr.f32.gmra.mrb[0].mxu0 %v999
        %v1001 = vpop.f32.mrb[0].mxu0
        %v1002 = vadd.f32 %v805, %v1001
        %v1003 = vpop.f32.mrb[0].mxu0
        %v1004 = vadd.f32 %v807, %v1003
        %1005 = vmatprep.mubr.f32.mxu0 0.0
        %v1006 = vand.u32 %v246, 4294901760
        %v1007 = vsub.f32 %v246, %v1006
        %v1008 = vand.u32 %v1007, 4294901760
        %1009 = vmatmul.mubr.f32.gmra.mrb[0].mxu0 %v1008
        %v1010 = vpop.f32.mrb[0].mxu0
        %v1011 = vadd.f32 %v813, %v1010
        %v1012 = vpop.f32.mrb[0].mxu0
        %v1013 = vadd.f32 %v815, %v1012
        %1014 = vmatprep.mubr.f32.mxu0 0.0
        %v1015 = vand.u32 %v249, 4294901760
        %v1016 = vsub.f32 %v249, %v1015
        %v1017 = vand.u32 %v1016, 4294901760
        %1018 = vmatmul.mubr.f32.gmra.mrb[0].mxu0 %v1017
        %v1019 = vpop.f32.mrb[0].mxu0
        %v1020 = vadd.f32 %v821, %v1019
        %v1021 = vpop.f32.mrb[0].mxu0
        %v1022 = vadd.f32 %v823, %v1021
        %1023 = vmatprep.mubr.f32.mxu0 0.0
        %v1024 = vand.u32 %v252, 4294901760
        %v1025 = vsub.f32 %v252, %v1024
        %v1026 = vand.u32 %v1025, 4294901760
        %1027 = vmatmul.mubr.f32.gmra.mrb[0].mxu0 %v1026
        %v1028 = vpop.f32.mrb[0].mxu0
        %v1029 = vadd.f32 %v829, %v1028
        %v1030 = vpop.f32.mrb[0].mxu0
        %v1031 = vadd.f32 %v831, %v1030
        %1032 = vmatprep.mubr.f32.mxu0 0.0
        %v1033 = vand.u32 %v255, 4294901760
        %v1034 = vsub.f32 %v255, %v1033
        %v1035 = vand.u32 %v1034, 4294901760
        %1036 = vmatmul.mubr.f32.gmra.mrb[0].mxu0 %v1035
        %v1037 = vpop.f32.mrb[0].mxu0
        %v1038 = vadd.f32 %v837, %v1037
        %v1039 = vpop.f32.mrb[0].mxu0
        %v1040 = vadd.f32 %v839, %v1039
        %1041 = vmatprep.mubr.f32.mxu0 0.0
        %v1042 = vand.u32 %v258, 4294901760
        %v1043 = vsub.f32 %v258, %v1042
        %v1044 = vand.u32 %v1043, 4294901760
        %1045 = vmatmul.mubr.f32.gmra.mrb[0].mxu0 %v1044
        %v1046 = vpop.f32.mrb[0].mxu0
        %v1047 = vadd.f32 %v845, %v1046
        %v1048 = vpop.f32.mrb[0].mxu0
        %v1049 = vadd.f32 %v847, %v1048
        %1050 = vmatprep.mubr.f32.mxu0 0.0
        %v1051 = vand.u32 %v261, 4294901760
        %v1052 = vsub.f32 %v261, %v1051
        %v1053 = vand.u32 %v1052, 4294901760
        %1054 = vmatmul.mubr.f32.gmra.mrb[0].mxu0 %v1053
        %v1055 = vpop.f32.mrb[0].mxu0
        %v1056 = vadd.f32 %v853, %v1055
        %v1057 = vpop.f32.mrb[0].mxu0
        %v1058 = vadd.f32 %v855, %v1057
        %1059 = vmatprep.mubr.f32.mxu0 0.0
        %v1060 = vand.u32 %v264, 4294901760
        %v1061 = vsub.f32 %v264, %v1060
        %v1062 = vand.u32 %v1061, 4294901760
        %1063 = vmatmul.mubr.f32.gmra.mrb[0].mxu0 %v1062
        %v1064 = vpop.f32.mrb[0].mxu0
        %v1065 = vadd.f32 %v861, %v1064
        %v1066 = vpop.f32.mrb[0].mxu0
        %v1067 = vadd.f32 %v863, %v1066
        %1068 = vmatprep.mubr.f32.mxu0 0.0
        %v1069 = vand.u32 %v267, 4294901760
        %v1070 = vsub.f32 %v267, %v1069
        %v1071 = vand.u32 %v1070, 4294901760
        %1072 = vmatmul.mubr.f32.gmra.mrb[0].mxu0 %v1071
        %v1073 = vpop.f32.mrb[0].mxu0
        %v1074 = vadd.f32 %v869, %v1073
        %v1075 = vpop.f32.mrb[0].mxu0
        %v1076 = vadd.f32 %v871, %v1075
        %1077 = vmatprep.mubr.f32.mxu0 0.0
        %v1078 = vand.u32 %v270, 4294901760
        %v1079 = vsub.f32 %v270, %v1078
        %v1080 = vand.u32 %v1079, 4294901760
        %1081 = vmatmul.mubr.f32.gmra.mrb[0].mxu0 %v1080
        %v1082 = vpop.f32.mrb[0].mxu0
        %v1083 = vadd.f32 %v877, %v1082
        %v1084 = vpop.f32.mrb[0].mxu0
        %v1085 = vadd.f32 %v879, %v1084
        %1086 = vmatprep.mubr.f32.mxu0 0.0
        %v1087 = vand.u32 %v273, 4294901760
        %v1088 = vsub.f32 %v273, %v1087
        %v1089 = vand.u32 %v1088, 4294901760
        %1090 = vmatmul.mubr.f32.gmra.mrb[0].mxu0 %v1089
        %v1091 = vpop.f32.mrb[0].mxu0
        %v1092 = vadd.f32 %v885, %v1091
        %v1093 = vpop.f32.mrb[0].mxu0
        %v1094 = vadd.f32 %v887, %v1093
        %1095 = vmatprep.mubr.f32.mxu0 0.0
        %v1096 = vand.u32 %v276, 4294901760
        %v1097 = vsub.f32 %v276, %v1096
        %v1098 = vand.u32 %v1097, 4294901760
        %1099 = vmatmul.mubr.f32.gmra.mrb[0].mxu0 %v1098
        %v1100 = vpop.f32.mrb[0].mxu0
        %v1101 = vadd.f32 %v893, %v1100
        %v1102 = vpop.f32.mrb[0].mxu0
        %v1103 = vadd.f32 %v895, %v1102
        %1104 = vmatprep.mubr.f32.mxu0 0.0
        %v1105 = vand.u32 %v279, 4294901760
        %v1106 = vsub.f32 %v279, %v1105
        %v1107 = vand.u32 %v1106, 4294901760
        %1108 = vmatmul.mubr.f32.gmra.mrb[0].mxu0 %v1107
        %v1109 = vpop.f32.mrb[0].mxu0
        %v1110 = vadd.f32 %v901, %v1109
        %v1111 = vpop.f32.mrb[0].mxu0
        %v1112 = vadd.f32 %v903, %v1111
        %1113 = vmatprep.mubr.f32.mxu0 0.0
        %v1114 = vand.u32 %v282, 4294901760
        %v1115 = vsub.f32 %v282, %v1114
        %v1116 = vand.u32 %v1115, 4294901760
        %1117 = vmatmul.mubr.f32.gmra.mrb[0].mxu0 %v1116
        %v1118 = vpop.f32.mrb[0].mxu0
        %v1119 = vadd.f32 %v909, %v1118
        %v1120 = vpop.f32.mrb[0].mxu0
        %v1121 = vadd.f32 %v911, %v1120
        %1122 = vmatprep.mubr.f32.mxu0 0.0
        %v1123 = vand.u32 %v285, 4294901760
        %v1124 = vsub.f32 %v285, %v1123
        %v1125 = vand.u32 %v1124, 4294901760
        %1126 = vmatmul.mubr.f32.gmra.mrb[0].mxu0 %v1125
        %v1127 = vpop.f32.mrb[0].mxu0
        %v1128 = vadd.f32 %v917, %v1127
        %v1129 = vpop.f32.mrb[0].mxu0
        %v1130 = vadd.f32 %v919, %v1129
        %1131 = vdwg.mxu0
        %v1132 = vand.u32 %v292, 4294901760
        %v1133 = vsub.f32 %v292, %v1132
        %v1134 = vand.u32 %v1133, 4294901760
        %1135 = vmatprep.subr.mxu0 %v1134
        %v1136 = vand.u32 %v289, 4294901760
        %v1137 = vsub.f32 %v289, %v1136
        %v1138 = vand.u32 %v1137, 4294901760
        %1139 = vmatpush1.msra.mxu0 %v1138
        %1140 = vmatprep.subr.mxu0 0.0
        %1141 = vmatpush1.msra.mxu0 0.0
        %1142 = vmatprep.subr.mxu0 0.0
        %1143 = vmatpush1.msra.mxu0 0.0
        %1144 = vmatprep.subr.mxu0 0.0
        %1145 = vmatpush1.msra.mxu0 0.0
        %1146 = vmatprep.subr.mxu0 0.0
        %1147 = vmatpush1.msra.mxu0 0.0
        %1148 = vmatprep.subr.mxu0 0.0
        %1149 = vmatpush1.msra.mxu0 0.0
        %1150 = vmatprep.subr.mxu0 0.0
        %1151 = vmatpush1.msra.mxu0 0.0
        %1152 = vmatprep.subr.mxu0 0.0
        %1153 = vmatpush1.msra.mxu0 0.0
        %1154 = vmatprep.subr.mxu0 0.0
        %1155 = vmatpush1.msra.mxu0 0.0
        %1156 = vmatprep.subr.mxu0 0.0
        %1157 = vmatpush1.msra.mxu0 0.0
        %1158 = vmatprep.subr.mxu0 0.0
        %1159 = vmatpush1.msra.mxu0 0.0
        %1160 = vmatprep.subr.mxu0 0.0
        %1161 = vmatpush1.msra.mxu0 0.0
        %1162 = vmatprep.subr.mxu0 0.0
        %1163 = vmatpush1.msra.mxu0 0.0
        %1164 = vmatprep.subr.mxu0 0.0
        %1165 = vmatpush1.msra.mxu0 0.0
        %1166 = vmatprep.subr.mxu0 0.0
        %1167 = vmatpush1.msra.mxu0 0.0
        %1168 = vmatprep.subr.mxu0 0.0
        %1169 = vmatpush1.msra.mxu0 0.0
        %1170 = vmatprep.subr.mxu0 0.0
        %1171 = vmatpush1.msra.mxu0 0.0
        %1172 = vmatprep.subr.mxu0 0.0
        %1173 = vmatpush1.msra.mxu0 0.0
        %1174 = vmatprep.subr.mxu0 0.0
        %1175 = vmatpush1.msra.mxu0 0.0
        %1176 = vmatprep.subr.mxu0 0.0
        %1177 = vmatpush1.msra.mxu0 0.0
        %1178 = vmatprep.subr.mxu0 0.0
        %1179 = vmatpush1.msra.mxu0 0.0
        %1180 = vmatprep.subr.mxu0 0.0
        %1181 = vmatpush1.msra.mxu0 0.0
        %1182 = vmatprep.subr.mxu0 0.0
        %1183 = vmatpush1.msra.mxu0 0.0
        %1184 = vmatprep.subr.mxu0 0.0
        %1185 = vmatpush1.msra.mxu0 0.0
        %1186 = vmatprep.subr.mxu0 0.0
        %1187 = vmatpush1.msra.mxu0 0.0
        %1188 = vmatprep.subr.mxu0 0.0
        %1189 = vmatpush1.msra.mxu0 0.0
        %1190 = vmatprep.subr.mxu0 0.0
        %1191 = vmatpush1.msra.mxu0 0.0
        %1192 = vmatprep.subr.mxu0 0.0
        %1193 = vmatpush1.msra.mxu0 0.0
        %1194 = vmatprep.subr.mxu0 0.0
        %1195 = vmatpush1.msra.mxu0 0.0
        %1196 = vmatprep.subr.mxu0 0.0
        %1197 = vmatpush1.msra.mxu0 0.0
        %1198 = vmatprep.subr.mxu0 0.0
        %1199 = vmatpush1.msra.mxu0 0.0
        %1200 = vmatprep.subr.mxu0 0.0
        %1201 = vmatpush1.msra.mxu0 0.0
        %1202 = vmatprep.mubr.f32.mxu0 0.0
        %v1203 = vand.u32 %v240, 4294901760
        %1204 = vmatmul.mubr.f32.gmra.mrb[0].mxu0 %v1203
        %v1205 = vpop.f32.mrb[0].mxu0
        %v1206 = vadd.f32 %v993, %v1205
        %v1207 = vpop.f32.mrb[0].mxu0
        %v1208 = vadd.f32 %v995, %v1207
        %1209 = vmatprep.mubr.f32.mxu0 0.0
        %v1210 = vand.u32 %v243, 4294901760
        %1211 = vmatmul.mubr.f32.gmra.mrb[0].mxu0 %v1210
        %v1212 = vpop.f32.mrb[0].mxu0
        %v1213 = vadd.f32 %v1002, %v1212
        %v1214 = vpop.f32.mrb[0].mxu0
        %v1215 = vadd.f32 %v1004, %v1214
        %1216 = vmatprep.mubr.f32.mxu0 0.0
        %v1217 = vand.u32 %v246, 4294901760
        %1218 = vmatmul.mubr.f32.gmra.mrb[0].mxu0 %v1217
        %v1219 = vpop.f32.mrb[0].mxu0
        %v1220 = vadd.f32 %v1011, %v1219
        %v1221 = vpop.f32.mrb[0].mxu0
        %v1222 = vadd.f32 %v1013, %v1221
        %1223 = vmatprep.mubr.f32.mxu0 0.0
        %v1224 = vand.u32 %v249, 4294901760
        %1225 = vmatmul.mubr.f32.gmra.mrb[0].mxu0 %v1224
        %v1226 = vpop.f32.mrb[0].mxu0
        %v1227 = vadd.f32 %v1020, %v1226
        %v1228 = vpop.f32.mrb[0].mxu0
        %v1229 = vadd.f32 %v1022, %v1228
        %1230 = vmatprep.mubr.f32.mxu0 0.0
        %v1231 = vand.u32 %v252, 4294901760
        %1232 = vmatmul.mubr.f32.gmra.mrb[0].mxu0 %v1231
        %v1233 = vpop.f32.mrb[0].mxu0
        %v1234 = vadd.f32 %v1029, %v1233
        %v1235 = vpop.f32.mrb[0].mxu0
        %v1236 = vadd.f32 %v1031, %v1235
        %1237 = vmatprep.mubr.f32.mxu0 0.0
        %v1238 = vand.u32 %v255, 4294901760
        %1239 = vmatmul.mubr.f32.gmra.mrb[0].mxu0 %v1238
        %v1240 = vpop.f32.mrb[0].mxu0
        %v1241 = vadd.f32 %v1038, %v1240
        %v1242 = vpop.f32.mrb[0].mxu0
        %v1243 = vadd.f32 %v1040, %v1242
        %1244 = vmatprep.mubr.f32.mxu0 0.0
        %v1245 = vand.u32 %v258, 4294901760
        %1246 = vmatmul.mubr.f32.gmra.mrb[0].mxu0 %v1245
        %v1247 = vpop.f32.mrb[0].mxu0
        %v1248 = vadd.f32 %v1047, %v1247
        %v1249 = vpop.f32.mrb[0].mxu0
        %v1250 = vadd.f32 %v1049, %v1249
        %1251 = vmatprep.mubr.f32.mxu0 0.0
        %v1252 = vand.u32 %v261, 4294901760
        %1253 = vmatmul.mubr.f32.gmra.mrb[0].mxu0 %v1252
        %v1254 = vpop.f32.mrb[0].mxu0
        %v1255 = vadd.f32 %v1056, %v1254
        %v1256 = vpop.f32.mrb[0].mxu0
        %v1257 = vadd.f32 %v1058, %v1256
        %1258 = vmatprep.mubr.f32.mxu0 0.0
        %v1259 = vand.u32 %v264, 4294901760
        %1260 = vmatmul.mubr.f32.gmra.mrb[0].mxu0 %v1259
        %v1261 = vpop.f32.mrb[0].mxu0
        %v1262 = vadd.f32 %v1065, %v1261
        %v1263 = vpop.f32.mrb[0].mxu0
        %v1264 = vadd.f32 %v1067, %v1263
        %1265 = vmatprep.mubr.f32.mxu0 0.0
        %v1266 = vand.u32 %v267, 4294901760
        %1267 = vmatmul.mubr.f32.gmra.mrb[0].mxu0 %v1266
        %v1268 = vpop.f32.mrb[0].mxu0
        %v1269 = vadd.f32 %v1074, %v1268
        %v1270 = vpop.f32.mrb[0].mxu0
        %v1271 = vadd.f32 %v1076, %v1270
        %1272 = vmatprep.mubr.f32.mxu0 0.0
        %v1273 = vand.u32 %v270, 4294901760
        %1274 = vmatmul.mubr.f32.gmra.mrb[0].mxu0 %v1273
        %v1275 = vpop.f32.mrb[0].mxu0
        %v1276 = vadd.f32 %v1083, %v1275
        %v1277 = vpop.f32.mrb[0].mxu0
        %v1278 = vadd.f32 %v1085, %v1277
        %1279 = vmatprep.mubr.f32.mxu0 0.0
        %v1280 = vand.u32 %v273, 4294901760
        %1281 = vmatmul.mubr.f32.gmra.mrb[0].mxu0 %v1280
        %v1282 = vpop.f32.mrb[0].mxu0
        %v1283 = vadd.f32 %v1092, %v1282
        %v1284 = vpop.f32.mrb[0].mxu0
        %v1285 = vadd.f32 %v1094, %v1284
        %1286 = vmatprep.mubr.f32.mxu0 0.0
        %v1287 = vand.u32 %v276, 4294901760
        %1288 = vmatmul.mubr.f32.gmra.mrb[0].mxu0 %v1287
        %v1289 = vpop.f32.mrb[0].mxu0
        %v1290 = vadd.f32 %v1101, %v1289
        %v1291 = vpop.f32.mrb[0].mxu0
        %v1292 = vadd.f32 %v1103, %v1291
        %1293 = vmatprep.mubr.f32.mxu0 0.0
        %v1294 = vand.u32 %v279, 4294901760
        %1295 = vmatmul.mubr.f32.gmra.mrb[0].mxu0 %v1294
        %v1296 = vpop.f32.mrb[0].mxu0
        %v1297 = vadd.f32 %v1110, %v1296
        %v1298 = vpop.f32.mrb[0].mxu0
        %v1299 = vadd.f32 %v1112, %v1298
        %1300 = vmatprep.mubr.f32.mxu0 0.0
        %v1301 = vand.u32 %v282, 4294901760
        %1302 = vmatmul.mubr.f32.gmra.mrb[0].mxu0 %v1301
        %v1303 = vpop.f32.mrb[0].mxu0
        %v1304 = vadd.f32 %v1119, %v1303
        %v1305 = vpop.f32.mrb[0].mxu0
        %v1306 = vadd.f32 %v1121, %v1305
        %1307 = vmatprep.mubr.f32.mxu0 0.0
        %v1308 = vand.u32 %v285, 4294901760
        %1309 = vmatmul.mubr.f32.gmra.mrb[0].mxu0 %v1308
        %v1310 = vpop.f32.mrb[0].mxu0
        %v1311 = vadd.f32 %v1128, %v1310
        %v1312 = vpop.f32.mrb[0].mxu0
        %v1313 = vadd.f32 %v1130, %v1312
        %1314 = vdwg.mxu0
        %v1315 = vand.u32 %v292, 4294901760
        %1316 = vmatprep.subr.mxu0 %v1315
        %v1317 = vand.u32 %v289, 4294901760
        %1318 = vmatpush1.msra.mxu0 %v1317
        %1319 = vmatprep.subr.mxu0 0.0
        %1320 = vmatpush1.msra.mxu0 0.0
        %1321 = vmatprep.subr.mxu0 0.0
        %1322 = vmatpush1.msra.mxu0 0.0
        %1323 = vmatprep.subr.mxu0 0.0
        %1324 = vmatpush1.msra.mxu0 0.0
        %1325 = vmatprep.subr.mxu0 0.0
        %1326 = vmatpush1.msra.mxu0 0.0
        %1327 = vmatprep.subr.mxu0 0.0
        %1328 = vmatpush1.msra.mxu0 0.0
        %1329 = vmatprep.subr.mxu0 0.0
        %1330 = vmatpush1.msra.mxu0 0.0
        %1331 = vmatprep.subr.mxu0 0.0
        %1332 = vmatpush1.msra.mxu0 0.0
        %1333 = vmatprep.subr.mxu0 0.0
        %1334 = vmatpush1.msra.mxu0 0.0
        %1335 = vmatprep.subr.mxu0 0.0
        %1336 = vmatpush1.msra.mxu0 0.0
        %1337 = vmatprep.subr.mxu0 0.0
        %1338 = vmatpush1.msra.mxu0 0.0
        %1339 = vmatprep.subr.mxu0 0.0
        %1340 = vmatpush1.msra.mxu0 0.0
        %1341 = vmatprep.subr.mxu0 0.0
        %1342 = vmatpush1.msra.mxu0 0.0
        %1343 = vmatprep.subr.mxu0 0.0
        %1344 = vmatpush1.msra.mxu0 0.0
        %1345 = vmatprep.subr.mxu0 0.0
        %1346 = vmatpush1.msra.mxu0 0.0
        %1347 = vmatprep.subr.mxu0 0.0
        %1348 = vmatpush1.msra.mxu0 0.0
        %1349 = vmatprep.subr.mxu0 0.0
        %1350 = vmatpush1.msra.mxu0 0.0
        %1351 = vmatprep.subr.mxu0 0.0
        %1352 = vmatpush1.msra.mxu0 0.0
        %1353 = vmatprep.subr.mxu0 0.0
        %1354 = vmatpush1.msra.mxu0 0.0
        %1355 = vmatprep.subr.mxu0 0.0
        %1356 = vmatpush1.msra.mxu0 0.0
        %1357 = vmatprep.subr.mxu0 0.0
        %1358 = vmatpush1.msra.mxu0 0.0
        %1359 = vmatprep.subr.mxu0 0.0
        %1360 = vmatpush1.msra.mxu0 0.0
        %1361 = vmatprep.subr.mxu0 0.0
        %1362 = vmatpush1.msra.mxu0 0.0
        %1363 = vmatprep.subr.mxu0 0.0
        %1364 = vmatpush1.msra.mxu0 0.0
        %1365 = vmatprep.subr.mxu0 0.0
        %1366 = vmatpush1.msra.mxu0 0.0
        %1367 = vmatprep.subr.mxu0 0.0
        %1368 = vmatpush1.msra.mxu0 0.0
        %1369 = vmatprep.subr.mxu0 0.0
        %1370 = vmatpush1.msra.mxu0 0.0
        %1371 = vmatprep.subr.mxu0 0.0
        %1372 = vmatpush1.msra.mxu0 0.0
        %1373 = vmatprep.subr.mxu0 0.0
        %1374 = vmatpush1.msra.mxu0 0.0
        %1375 = vmatprep.subr.mxu0 0.0
        %1376 = vmatpush1.msra.mxu0 0.0
        %1377 = vmatprep.subr.mxu0 0.0
        %1378 = vmatpush1.msra.mxu0 0.0
        %1379 = vmatprep.subr.mxu0 0.0
        %1380 = vmatpush1.msra.mxu0 0.0
        %1381 = vmatprep.mubr.f32.mxu0 0.0
        %v1382 = vand.u32 %v240, 4294901760
        %1383 = vmatmul.mubr.f32.gmra.mrb[0].mxu0 %v1382
        %v1384 = vpop.f32.mrb[0].mxu0
        %v1385 = vadd.f32 %v1206, %v1384
        %v1386 = vpop.f32.mrb[0].mxu0
        %v1387 = vadd.f32 %v1208, %v1386
        %1388 = vmatprep.mubr.f32.mxu0 0.0
        %v1389 = vand.u32 %v243, 4294901760
        %1390 = vmatmul.mubr.f32.gmra.mrb[0].mxu0 %v1389
        %v1391 = vpop.f32.mrb[0].mxu0
        %v1392 = vadd.f32 %v1213, %v1391
        %v1393 = vpop.f32.mrb[0].mxu0
        %v1394 = vadd.f32 %v1215, %v1393
        %1395 = vmatprep.mubr.f32.mxu0 0.0
        %v1396 = vand.u32 %v246, 4294901760
        %1397 = vmatmul.mubr.f32.gmra.mrb[0].mxu0 %v1396
        %v1398 = vpop.f32.mrb[0].mxu0
        %v1399 = vadd.f32 %v1220, %v1398
        %v1400 = vpop.f32.mrb[0].mxu0
        %v1401 = vadd.f32 %v1222, %v1400
        %1402 = vmatprep.mubr.f32.mxu0 0.0
        %v1403 = vand.u32 %v249, 4294901760
        %1404 = vmatmul.mubr.f32.gmra.mrb[0].mxu0 %v1403
        %v1405 = vpop.f32.mrb[0].mxu0
        %v1406 = vadd.f32 %v1227, %v1405
        %v1407 = vpop.f32.mrb[0].mxu0
        %v1408 = vadd.f32 %v1229, %v1407
        %1409 = vmatprep.mubr.f32.mxu0 0.0
        %v1410 = vand.u32 %v252, 4294901760
        %1411 = vmatmul.mubr.f32.gmra.mrb[0].mxu0 %v1410
        %v1412 = vpop.f32.mrb[0].mxu0
        %v1413 = vadd.f32 %v1234, %v1412
        %v1414 = vpop.f32.mrb[0].mxu0
        %v1415 = vadd.f32 %v1236, %v1414
        %1416 = vmatprep.mubr.f32.mxu0 0.0
        %v1417 = vand.u32 %v255, 4294901760
        %1418 = vmatmul.mubr.f32.gmra.mrb[0].mxu0 %v1417
        %v1419 = vpop.f32.mrb[0].mxu0
        %v1420 = vadd.f32 %v1241, %v1419
        %v1421 = vpop.f32.mrb[0].mxu0
        %v1422 = vadd.f32 %v1243, %v1421
        %1423 = vmatprep.mubr.f32.mxu0 0.0
        %v1424 = vand.u32 %v258, 4294901760
        %1425 = vmatmul.mubr.f32.gmra.mrb[0].mxu0 %v1424
        %v1426 = vpop.f32.mrb[0].mxu0
        %v1427 = vadd.f32 %v1248, %v1426
        %v1428 = vpop.f32.mrb[0].mxu0
        %v1429 = vadd.f32 %v1250, %v1428
        %1430 = vmatprep.mubr.f32.mxu0 0.0
        %v1431 = vand.u32 %v261, 4294901760
        %1432 = vmatmul.mubr.f32.gmra.mrb[0].mxu0 %v1431
        %v1433 = vpop.f32.mrb[0].mxu0
        %v1434 = vadd.f32 %v1255, %v1433
        %v1435 = vpop.f32.mrb[0].mxu0
        %v1436 = vadd.f32 %v1257, %v1435
        %1437 = vmatprep.mubr.f32.mxu0 0.0
        %v1438 = vand.u32 %v264, 4294901760
        %1439 = vmatmul.mubr.f32.gmra.mrb[0].mxu0 %v1438
        %v1440 = vpop.f32.mrb[0].mxu0
        %v1441 = vadd.f32 %v1262, %v1440
        %v1442 = vpop.f32.mrb[0].mxu0
        %v1443 = vadd.f32 %v1264, %v1442
        %1444 = vmatprep.mubr.f32.mxu0 0.0
        %v1445 = vand.u32 %v267, 4294901760
        %1446 = vmatmul.mubr.f32.gmra.mrb[0].mxu0 %v1445
        %v1447 = vpop.f32.mrb[0].mxu0
        %v1448 = vadd.f32 %v1269, %v1447
        %v1449 = vpop.f32.mrb[0].mxu0
        %v1450 = vadd.f32 %v1271, %v1449
        %1451 = vmatprep.mubr.f32.mxu0 0.0
        %v1452 = vand.u32 %v270, 4294901760
        %1453 = vmatmul.mubr.f32.gmra.mrb[0].mxu0 %v1452
        %v1454 = vpop.f32.mrb[0].mxu0
        %v1455 = vadd.f32 %v1276, %v1454
        %v1456 = vpop.f32.mrb[0].mxu0
        %v1457 = vadd.f32 %v1278, %v1456
        %1458 = vmatprep.mubr.f32.mxu0 0.0
        %v1459 = vand.u32 %v273, 4294901760
        %1460 = vmatmul.mubr.f32.gmra.mrb[0].mxu0 %v1459
        %v1461 = vpop.f32.mrb[0].mxu0
        %v1462 = vadd.f32 %v1283, %v1461
        %v1463 = vpop.f32.mrb[0].mxu0
        %v1464 = vadd.f32 %v1285, %v1463
        %1465 = vmatprep.mubr.f32.mxu0 0.0
        %v1466 = vand.u32 %v276, 4294901760
        %1467 = vmatmul.mubr.f32.gmra.mrb[0].mxu0 %v1466
        %v1468 = vpop.f32.mrb[0].mxu0
        %v1469 = vadd.f32 %v1290, %v1468
        %v1470 = vpop.f32.mrb[0].mxu0
        %v1471 = vadd.f32 %v1292, %v1470
        %1472 = vmatprep.mubr.f32.mxu0 0.0
        %v1473 = vand.u32 %v279, 4294901760
        %1474 = vmatmul.mubr.f32.gmra.mrb[0].mxu0 %v1473
        %v1475 = vpop.f32.mrb[0].mxu0
        %v1476 = vadd.f32 %v1297, %v1475
        %v1477 = vpop.f32.mrb[0].mxu0
        %v1478 = vadd.f32 %v1299, %v1477
        %1479 = vmatprep.mubr.f32.mxu0 0.0
        %v1480 = vand.u32 %v282, 4294901760
        %1481 = vmatmul.mubr.f32.gmra.mrb[0].mxu0 %v1480
        %v1482 = vpop.f32.mrb[0].mxu0
        %v1483 = vadd.f32 %v1304, %v1482
        %v1484 = vpop.f32.mrb[0].mxu0
        %v1485 = vadd.f32 %v1306, %v1484
        %1486 = vmatprep.mubr.f32.mxu0 0.0
        %v1487 = vand.u32 %v285, 4294901760
        %1488 = vmatmul.mubr.f32.gmra.mrb[0].mxu0 %v1487
        %v1489 = vpop.f32.mrb[0].mxu0
        %v1490 = vadd.f32 %v1311, %v1489
        %v1491 = vpop.f32.mrb[0].mxu0
        %v1492 = vadd.f32 %v1313, %v1491
        %1493 = vdwg.mxu0
        %v1494 = vld [vmem:[%s2] sm:$0xff]
        %v1495 = vld [vmem:[%s2 + $0x8] sm:$0xff]
        %v1496 = vld [vmem:[%s2 + $0x10] sm:$0xff]
        %v1497 = vld [vmem:[%s2 + $0x18] sm:$0xff]
        %v1498 = vld [vmem:[%s2 + $0x20] sm:$0xff]
        %v1499 = vld [vmem:[%s2 + $0x28] sm:$0xff]
        %v1500 = vld [vmem:[%s2 + $0x30] sm:$0xff]
        %v1501 = vld [vmem:[%s2 + $0x38] sm:$0xff]
        %v1502 = vld [vmem:[%s2 + $0x40] sm:$0xff]
        %v1503 = vld [vmem:[%s2 + $0x48] sm:$0xff]
        %v1504 = vld [vmem:[%s2 + $0x50] sm:$0xff]
        %v1505 = vld [vmem:[%s2 + $0x58] sm:$0xff]
        %v1506 = vld [vmem:[%s2 + $0x60] sm:$0xff]
        %v1507 = vld [vmem:[%s2 + $0x68] sm:$0xff]
        %v1508 = vld [vmem:[%s2 + $0x70] sm:$0xff]
        %v1509 = vld [vmem:[%s2 + $0x78] sm:$0xff]
        %v1510 = vlaneseq
        %v1511 = vshrl.u32 %v1510, 7
        %v1512 = vsub.s32 1, %v1511
        %v1513 = vrot.slane %v199, %v1512
        %v1514 = vlaneseq
        %v1515 = vshrl.u32 %v1514, 7
        %v1516 = vsub.s32 5, %v1515
        %v1517 = vrot.slane %v199, %v1516
        %v1518 = vlaneseq
        %v1519 = vshrl.u32 %v1518, 7
        %v1520 = vsub.s32 1, %v1519
        %v1521 = vrot.slane %v1513, %v1520
        %v1522 = vlaneseq
        %v1523 = vshrl.u32 %v1522, 7
        %v1524 = vsub.s32 1, %v1523
        %v1525 = vrot.slane %v1517, %v1524
        %vm1526 = vcmp.eq.s32.totalorder %v217, %v1521
        %vm1527 = vcmp.eq.s32.totalorder %v217, %v1525
        %v1528 = vsel %vm1526, 1.0, 0.0
        %v1529 = vsel %vm1527, 1.0, 0.0
        %v1531 = vsel %vm238, %v1494, 0
        %v1534 = vsel %vm238, %v1495, 0
        %v1537 = vsel %vm238, %v1496, 0
        %v1540 = vsel %vm238, %v1497, 0
        %v1543 = vsel %vm238, %v1498, 0
        %v1546 = vsel %vm238, %v1499, 0
        %v1549 = vsel %vm238, %v1500, 0
        %v1552 = vsel %vm238, %v1501, 0
        %v1555 = vsel %vm238, %v1502, 0
        %v1558 = vsel %vm238, %v1503, 0
        %v1561 = vsel %vm238, %v1504, 0
        %v1564 = vsel %vm238, %v1505, 0
        %v1567 = vsel %vm238, %v1506, 0
        %v1570 = vsel %vm238, %v1507, 0
        %v1573 = vsel %vm238, %v1508, 0
        %v1576 = vsel %vm238, %v1509, 0
        %v1579 = vsel %vm287, %v1528, 0
        %v1582 = vsel %vm287, %v1529, 0
        %v1584 = vand.u32 %v1582, 4294901760
        %1585 = vmatprep.subr.mxu0 %v1584
        %v1586 = vand.u32 %v1579, 4294901760
        %1587 = vmatpush1.msra.mxu0 %v1586
        %1588 = vmatprep.subr.mxu0 0.0
        %1589 = vmatpush1.msra.mxu0 0.0
        %1590 = vmatprep.subr.mxu0 0.0
        %1591 = vmatpush1.msra.mxu0 0.0
        %1592 = vmatprep.subr.mxu0 0.0
        %1593 = vmatpush1.msra.mxu0 0.0
        %1594 = vmatprep.subr.mxu0 0.0
        %1595 = vmatpush1.msra.mxu0 0.0
        %1596 = vmatprep.subr.mxu0 0.0
        %1597 = vmatpush1.msra.mxu0 0.0
        %1598 = vmatprep.subr.mxu0 0.0
        %1599 = vmatpush1.msra.mxu0 0.0
        %1600 = vmatprep.subr.mxu0 0.0
        %1601 = vmatpush1.msra.mxu0 0.0
        %1602 = vmatprep.subr.mxu0 0.0
        %1603 = vmatpush1.msra.mxu0 0.0
        %1604 = vmatprep.subr.mxu0 0.0
        %1605 = vmatpush1.msra.mxu0 0.0
        %1606 = vmatprep.subr.mxu0 0.0
        %1607 = vmatpush1.msra.mxu0 0.0
        %1608 = vmatprep.subr.mxu0 0.0
        %1609 = vmatpush1.msra.mxu0 0.0
        %1610 = vmatprep.subr.mxu0 0.0
        %1611 = vmatpush1.msra.mxu0 0.0
        %1612 = vmatprep.subr.mxu0 0.0
        %1613 = vmatpush1.msra.mxu0 0.0
        %1614 = vmatprep.subr.mxu0 0.0
        %1615 = vmatpush1.msra.mxu0 0.0
        %1616 = vmatprep.subr.mxu0 0.0
        %1617 = vmatpush1.msra.mxu0 0.0
        %1618 = vmatprep.subr.mxu0 0.0
        %1619 = vmatpush1.msra.mxu0 0.0
        %1620 = vmatprep.subr.mxu0 0.0
        %1621 = vmatpush1.msra.mxu0 0.0
        %1622 = vmatprep.subr.mxu0 0.0
        %1623 = vmatpush1.msra.mxu0 0.0
        %1624 = vmatprep.subr.mxu0 0.0
        %1625 = vmatpush1.msra.mxu0 0.0
        %1626 = vmatprep.subr.mxu0 0.0
        %1627 = vmatpush1.msra.mxu0 0.0
        %1628 = vmatprep.subr.mxu0 0.0
        %1629 = vmatpush1.msra.mxu0 0.0
        %1630 = vmatprep.subr.mxu0 0.0
        %1631 = vmatpush1.msra.mxu0 0.0
        %1632 = vmatprep.subr.mxu0 0.0
        %1633 = vmatpush1.msra.mxu0 0.0
        %1634 = vmatprep.subr.mxu0 0.0
        %1635 = vmatpush1.msra.mxu0 0.0
        %1636 = vmatprep.subr.mxu0 0.0
        %1637 = vmatpush1.msra.mxu0 0.0
        %1638 = vmatprep.subr.mxu0 0.0
        %1639 = vmatpush1.msra.mxu0 0.0
        %1640 = vmatprep.subr.mxu0 0.0
        %1641 = vmatpush1.msra.mxu0 0.0
        %1642 = vmatprep.subr.mxu0 0.0
        %1643 = vmatpush1.msra.mxu0 0.0
        %1644 = vmatprep.subr.mxu0 0.0
        %1645 = vmatpush1.msra.mxu0 0.0
        %1646 = vmatprep.subr.mxu0 0.0
        %1647 = vmatpush1.msra.mxu0 0.0
        %1648 = vmatprep.subr.mxu0 0.0
        %1649 = vmatpush1.msra.mxu0 0.0
        %1650 = vmatprep.mubr.f32.mxu0 0.0
        %v1651 = vand.u32 %v1531, 4294901760
        %v1652 = vsub.f32 %v1531, %v1651
        %v1653 = vand.u32 %v1652, 4294901760
        %v1654 = vsub.f32 %v1652, %v1653
        %v1655 = vand.u32 %v1654, 4294901760
        %1656 = vmatmul.mubr.f32.gmra.mrb[0].mxu0 %v1655
        %v1657 = vpop.f32.mrb[0].mxu0
        %v1658 = vadd.f32 0.0, %v1657
        %v1659 = vpop.f32.mrb[0].mxu0
        %v1660 = vadd.f32 0.0, %v1659
        %1661 = vmatprep.mubr.f32.mxu0 0.0
        %v1662 = vand.u32 %v1534, 4294901760
        %v1663 = vsub.f32 %v1534, %v1662
        %v1664 = vand.u32 %v1663, 4294901760
        %v1665 = vsub.f32 %v1663, %v1664
        %v1666 = vand.u32 %v1665, 4294901760
        %1667 = vmatmul.mubr.f32.gmra.mrb[0].mxu0 %v1666
        %v1668 = vpop.f32.mrb[0].mxu0
        %v1669 = vadd.f32 0.0, %v1668
        %v1670 = vpop.f32.mrb[0].mxu0
        %v1671 = vadd.f32 0.0, %v1670
        %1672 = vmatprep.mubr.f32.mxu0 0.0
        %v1673 = vand.u32 %v1537, 4294901760
        %v1674 = vsub.f32 %v1537, %v1673
        %v1675 = vand.u32 %v1674, 4294901760
        %v1676 = vsub.f32 %v1674, %v1675
        %v1677 = vand.u32 %v1676, 4294901760
        %1678 = vmatmul.mubr.f32.gmra.mrb[0].mxu0 %v1677
        %v1679 = vpop.f32.mrb[0].mxu0
        %v1680 = vadd.f32 0.0, %v1679
        %v1681 = vpop.f32.mrb[0].mxu0
        %v1682 = vadd.f32 0.0, %v1681
        %1683 = vmatprep.mubr.f32.mxu0 0.0
        %v1684 = vand.u32 %v1540, 4294901760
        %v1685 = vsub.f32 %v1540, %v1684
        %v1686 = vand.u32 %v1685, 4294901760
        %v1687 = vsub.f32 %v1685, %v1686
        %v1688 = vand.u32 %v1687, 4294901760
        %1689 = vmatmul.mubr.f32.gmra.mrb[0].mxu0 %v1688
        %v1690 = vpop.f32.mrb[0].mxu0
        %v1691 = vadd.f32 0.0, %v1690
        %v1692 = vpop.f32.mrb[0].mxu0
        %v1693 = vadd.f32 0.0, %v1692
        %1694 = vmatprep.mubr.f32.mxu0 0.0
        %v1695 = vand.u32 %v1543, 4294901760
        %v1696 = vsub.f32 %v1543, %v1695
        %v1697 = vand.u32 %v1696, 4294901760
        %v1698 = vsub.f32 %v1696, %v1697
        %v1699 = vand.u32 %v1698, 4294901760
        %1700 = vmatmul.mubr.f32.gmra.mrb[0].mxu0 %v1699
        %v1701 = vpop.f32.mrb[0].mxu0
        %v1702 = vadd.f32 0.0, %v1701
        %v1703 = vpop.f32.mrb[0].mxu0
        %v1704 = vadd.f32 0.0, %v1703
        %1705 = vmatprep.mubr.f32.mxu0 0.0
        %v1706 = vand.u32 %v1546, 4294901760
        %v1707 = vsub.f32 %v1546, %v1706
        %v1708 = vand.u32 %v1707, 4294901760
        %v1709 = vsub.f32 %v1707, %v1708
        %v1710 = vand.u32 %v1709, 4294901760
        %1711 = vmatmul.mubr.f32.gmra.mrb[0].mxu0 %v1710
        %v1712 = vpop.f32.mrb[0].mxu0
        %v1713 = vadd.f32 0.0, %v1712
        %v1714 = vpop.f32.mrb[0].mxu0
        %v1715 = vadd.f32 0.0, %v1714
        %1716 = vmatprep.mubr.f32.mxu0 0.0
        %v1717 = vand.u32 %v1549, 4294901760
        %v1718 = vsub.f32 %v1549, %v1717
        %v1719 = vand.u32 %v1718, 4294901760
        %v1720 = vsub.f32 %v1718, %v1719
        %v1721 = vand.u32 %v1720, 4294901760
        %1722 = vmatmul.mubr.f32.gmra.mrb[0].mxu0 %v1721
        %v1723 = vpop.f32.mrb[0].mxu0
        %v1724 = vadd.f32 0.0, %v1723
        %v1725 = vpop.f32.mrb[0].mxu0
        %v1726 = vadd.f32 0.0, %v1725
        %1727 = vmatprep.mubr.f32.mxu0 0.0
        %v1728 = vand.u32 %v1552, 4294901760
        %v1729 = vsub.f32 %v1552, %v1728
        %v1730 = vand.u32 %v1729, 4294901760
        %v1731 = vsub.f32 %v1729, %v1730
        %v1732 = vand.u32 %v1731, 4294901760
        %1733 = vmatmul.mubr.f32.gmra.mrb[0].mxu0 %v1732
        %v1734 = vpop.f32.mrb[0].mxu0
        %v1735 = vadd.f32 0.0, %v1734
        %v1736 = vpop.f32.mrb[0].mxu0
        %v1737 = vadd.f32 0.0, %v1736
        %1738 = vmatprep.mubr.f32.mxu0 0.0
        %v1739 = vand.u32 %v1555, 4294901760
        %v1740 = vsub.f32 %v1555, %v1739
        %v1741 = vand.u32 %v1740, 4294901760
        %v1742 = vsub.f32 %v1740, %v1741
        %v1743 = vand.u32 %v1742, 4294901760
        %1744 = vmatmul.mubr.f32.gmra.mrb[0].mxu0 %v1743
        %v1745 = vpop.f32.mrb[0].mxu0
        %v1746 = vadd.f32 0.0, %v1745
        %v1747 = vpop.f32.mrb[0].mxu0
        %v1748 = vadd.f32 0.0, %v1747
        %1749 = vmatprep.mubr.f32.mxu0 0.0
        %v1750 = vand.u32 %v1558, 4294901760
        %v1751 = vsub.f32 %v1558, %v1750
        %v1752 = vand.u32 %v1751, 4294901760
        %v1753 = vsub.f32 %v1751, %v1752
        %v1754 = vand.u32 %v1753, 4294901760
        %1755 = vmatmul.mubr.f32.gmra.mrb[0].mxu0 %v1754
        %v1756 = vpop.f32.mrb[0].mxu0
        %v1757 = vadd.f32 0.0, %v1756
        %v1758 = vpop.f32.mrb[0].mxu0
        %v1759 = vadd.f32 0.0, %v1758
        %1760 = vmatprep.mubr.f32.mxu0 0.0
        %v1761 = vand.u32 %v1561, 4294901760
        %v1762 = vsub.f32 %v1561, %v1761
        %v1763 = vand.u32 %v1762, 4294901760
        %v1764 = vsub.f32 %v1762, %v1763
        %v1765 = vand.u32 %v1764, 4294901760
        %1766 = vmatmul.mubr.f32.gmra.mrb[0].mxu0 %v1765
        %v1767 = vpop.f32.mrb[0].mxu0
        %v1768 = vadd.f32 0.0, %v1767
        %v1769 = vpop.f32.mrb[0].mxu0
        %v1770 = vadd.f32 0.0, %v1769
        %1771 = vmatprep.mubr.f32.mxu0 0.0
        %v1772 = vand.u32 %v1564, 4294901760
        %v1773 = vsub.f32 %v1564, %v1772
        %v1774 = vand.u32 %v1773, 4294901760
        %v1775 = vsub.f32 %v1773, %v1774
        %v1776 = vand.u32 %v1775, 4294901760
        %1777 = vmatmul.mubr.f32.gmra.mrb[0].mxu0 %v1776
        %v1778 = vpop.f32.mrb[0].mxu0
        %v1779 = vadd.f32 0.0, %v1778
        %v1780 = vpop.f32.mrb[0].mxu0
        %v1781 = vadd.f32 0.0, %v1780
        %1782 = vmatprep.mubr.f32.mxu0 0.0
        %v1783 = vand.u32 %v1567, 4294901760
        %v1784 = vsub.f32 %v1567, %v1783
        %v1785 = vand.u32 %v1784, 4294901760
        %v1786 = vsub.f32 %v1784, %v1785
        %v1787 = vand.u32 %v1786, 4294901760
        %1788 = vmatmul.mubr.f32.gmra.mrb[0].mxu0 %v1787
        %v1789 = vpop.f32.mrb[0].mxu0
        %v1790 = vadd.f32 0.0, %v1789
        %v1791 = vpop.f32.mrb[0].mxu0
        %v1792 = vadd.f32 0.0, %v1791
        %1793 = vmatprep.mubr.f32.mxu0 0.0
        %v1794 = vand.u32 %v1570, 4294901760
        %v1795 = vsub.f32 %v1570, %v1794
        %v1796 = vand.u32 %v1795, 4294901760
        %v1797 = vsub.f32 %v1795, %v1796
        %v1798 = vand.u32 %v1797, 4294901760
        %1799 = vmatmul.mubr.f32.gmra.mrb[0].mxu0 %v1798
        %v1800 = vpop.f32.mrb[0].mxu0
        %v1801 = vadd.f32 0.0, %v1800
        %v1802 = vpop.f32.mrb[0].mxu0
        %v1803 = vadd.f32 0.0, %v1802
        %1804 = vmatprep.mubr.f32.mxu0 0.0
        %v1805 = vand.u32 %v1573, 4294901760
        %v1806 = vsub.f32 %v1573, %v1805
        %v1807 = vand.u32 %v1806, 4294901760
        %v1808 = vsub.f32 %v1806, %v1807
        %v1809 = vand.u32 %v1808, 4294901760
        %1810 = vmatmul.mubr.f32.gmra.mrb[0].mxu0 %v1809
        %v1811 = vpop.f32.mrb[0].mxu0
        %v1812 = vadd.f32 0.0, %v1811
        %v1813 = vpop.f32.mrb[0].mxu0
        %v1814 = vadd.f32 0.0, %v1813
        %1815 = vmatprep.mubr.f32.mxu0 0.0
        %v1816 = vand.u32 %v1576, 4294901760
        %v1817 = vsub.f32 %v1576, %v1816
        %v1818 = vand.u32 %v1817, 4294901760
        %v1819 = vsub.f32 %v1817, %v1818
        %v1820 = vand.u32 %v1819, 4294901760
        %1821 = vmatmul.mubr.f32.gmra.mrb[0].mxu0 %v1820
        %v1822 = vpop.f32.mrb[0].mxu0
        %v1823 = vadd.f32 0.0, %v1822
        %v1824 = vpop.f32.mrb[0].mxu0
        %v1825 = vadd.f32 0.0, %v1824
        %1826 = vdwg.mxu0
        %v1827 = vand.u32 %v1582, 4294901760
        %v1828 = vsub.f32 %v1582, %v1827
        %v1829 = vand.u32 %v1828, 4294901760
        %v1830 = vsub.f32 %v1828, %v1829
        %v1831 = vand.u32 %v1830, 4294901760
        %1832 = vmatprep.subr.mxu0 %v1831
        %v1833 = vand.u32 %v1579, 4294901760
        %v1834 = vsub.f32 %v1579, %v1833
        %v1835 = vand.u32 %v1834, 4294901760
        %v1836 = vsub.f32 %v1834, %v1835
        %v1837 = vand.u32 %v1836, 4294901760
        %1838 = vmatpush1.msra.mxu0 %v1837
        %1839 = vmatprep.subr.mxu0 0.0
        %1840 = vmatpush1.msra.mxu0 0.0
        %1841 = vmatprep.subr.mxu0 0.0
        %1842 = vmatpush1.msra.mxu0 0.0
        %1843 = vmatprep.subr.mxu0 0.0
        %1844 = vmatpush1.msra.mxu0 0.0
        %1845 = vmatprep.subr.mxu0 0.0
        %1846 = vmatpush1.msra.mxu0 0.0
        %1847 = vmatprep.subr.mxu0 0.0
        %1848 = vmatpush1.msra.mxu0 0.0
        %1849 = vmatprep.subr.mxu0 0.0
        %1850 = vmatpush1.msra.mxu0 0.0
        %1851 = vmatprep.subr.mxu0 0.0
        %1852 = vmatpush1.msra.mxu0 0.0
        %1853 = vmatprep.subr.mxu0 0.0
        %1854 = vmatpush1.msra.mxu0 0.0
        %1855 = vmatprep.subr.mxu0 0.0
        %1856 = vmatpush1.msra.mxu0 0.0
        %1857 = vmatprep.subr.mxu0 0.0
        %1858 = vmatpush1.msra.mxu0 0.0
        %1859 = vmatprep.subr.mxu0 0.0
        %1860 = vmatpush1.msra.mxu0 0.0
        %1861 = vmatprep.subr.mxu0 0.0
        %1862 = vmatpush1.msra.mxu0 0.0
        %1863 = vmatprep.subr.mxu0 0.0
        %1864 = vmatpush1.msra.mxu0 0.0
        %1865 = vmatprep.subr.mxu0 0.0
        %1866 = vmatpush1.msra.mxu0 0.0
        %1867 = vmatprep.subr.mxu0 0.0
        %1868 = vmatpush1.msra.mxu0 0.0
        %1869 = vmatprep.subr.mxu0 0.0
        %1870 = vmatpush1.msra.mxu0 0.0
        %1871 = vmatprep.subr.mxu0 0.0
        %1872 = vmatpush1.msra.mxu0 0.0
        %1873 = vmatprep.subr.mxu0 0.0
        %1874 = vmatpush1.msra.mxu0 0.0
        %1875 = vmatprep.subr.mxu0 0.0
        %1876 = vmatpush1.msra.mxu0 0.0
        %1877 = vmatprep.subr.mxu0 0.0
        %1878 = vmatpush1.msra.mxu0 0.0
        %1879 = vmatprep.subr.mxu0 0.0
        %1880 = vmatpush1.msra.mxu0 0.0
        %1881 = vmatprep.subr.mxu0 0.0
        %1882 = vmatpush1.msra.mxu0 0.0
        %1883 = vmatprep.subr.mxu0 0.0
        %1884 = vmatpush1.msra.mxu0 0.0
        %1885 = vmatprep.subr.mxu0 0.0
        %1886 = vmatpush1.msra.mxu0 0.0
        %1887 = vmatprep.subr.mxu0 0.0
        %1888 = vmatpush1.msra.mxu0 0.0
        %1889 = vmatprep.subr.mxu0 0.0
        %1890 = vmatpush1.msra.mxu0 0.0
        %1891 = vmatprep.subr.mxu0 0.0
        %1892 = vmatpush1.msra.mxu0 0.0
        %1893 = vmatprep.subr.mxu0 0.0
        %1894 = vmatpush1.msra.mxu0 0.0
        %1895 = vmatprep.subr.mxu0 0.0
        %1896 = vmatpush1.msra.mxu0 0.0
        %1897 = vmatprep.subr.mxu0 0.0
        %1898 = vmatpush1.msra.mxu0 0.0
        %1899 = vmatprep.subr.mxu0 0.0
        %1900 = vmatpush1.msra.mxu0 0.0
        %1901 = vmatprep.mubr.f32.mxu0 0.0
        %v1902 = vand.u32 %v1531, 4294901760
        %1903 = vmatmul.mubr.f32.gmra.mrb[0].mxu0 %v1902
        %v1904 = vpop.f32.mrb[0].mxu0
        %v1905 = vadd.f32 %v1658, %v1904
        %v1906 = vpop.f32.mrb[0].mxu0
        %v1907 = vadd.f32 %v1660, %v1906
        %1908 = vmatprep.mubr.f32.mxu0 0.0
        %v1909 = vand.u32 %v1534, 4294901760
        %1910 = vmatmul.mubr.f32.gmra.mrb[0].mxu0 %v1909
        %v1911 = vpop.f32.mrb[0].mxu0
        %v1912 = vadd.f32 %v1669, %v1911
        %v1913 = vpop.f32.mrb[0].mxu0
        %v1914 = vadd.f32 %v1671, %v1913
        %1915 = vmatprep.mubr.f32.mxu0 0.0
        %v1916 = vand.u32 %v1537, 4294901760
        %1917 = vmatmul.mubr.f32.gmra.mrb[0].mxu0 %v1916
        %v1918 = vpop.f32.mrb[0].mxu0
        %v1919 = vadd.f32 %v1680, %v1918
        %v1920 = vpop.f32.mrb[0].mxu0
        %v1921 = vadd.f32 %v1682, %v1920
        %1922 = vmatprep.mubr.f32.mxu0 0.0
        %v1923 = vand.u32 %v1540, 4294901760
        %1924 = vmatmul.mubr.f32.gmra.mrb[0].mxu0 %v1923
        %v1925 = vpop.f32.mrb[0].mxu0
        %v1926 = vadd.f32 %v1691, %v1925
        %v1927 = vpop.f32.mrb[0].mxu0
        %v1928 = vadd.f32 %v1693, %v1927
        %1929 = vmatprep.mubr.f32.mxu0 0.0
        %v1930 = vand.u32 %v1543, 4294901760
        %1931 = vmatmul.mubr.f32.gmra.mrb[0].mxu0 %v1930
        %v1932 = vpop.f32.mrb[0].mxu0
        %v1933 = vadd.f32 %v1702, %v1932
        %v1934 = vpop.f32.mrb[0].mxu0
        %v1935 = vadd.f32 %v1704, %v1934
        %1936 = vmatprep.mubr.f32.mxu0 0.0
        %v1937 = vand.u32 %v1546, 4294901760
        %1938 = vmatmul.mubr.f32.gmra.mrb[0].mxu0 %v1937
        %v1939 = vpop.f32.mrb[0].mxu0
        %v1940 = vadd.f32 %v1713, %v1939
        %v1941 = vpop.f32.mrb[0].mxu0
        %v1942 = vadd.f32 %v1715, %v1941
        %1943 = vmatprep.mubr.f32.mxu0 0.0
        %v1944 = vand.u32 %v1549, 4294901760
        %1945 = vmatmul.mubr.f32.gmra.mrb[0].mxu0 %v1944
        %v1946 = vpop.f32.mrb[0].mxu0
        %v1947 = vadd.f32 %v1724, %v1946
        %v1948 = vpop.f32.mrb[0].mxu0
        %v1949 = vadd.f32 %v1726, %v1948
        %1950 = vmatprep.mubr.f32.mxu0 0.0
        %v1951 = vand.u32 %v1552, 4294901760
        %1952 = vmatmul.mubr.f32.gmra.mrb[0].mxu0 %v1951
        %v1953 = vpop.f32.mrb[0].mxu0
        %v1954 = vadd.f32 %v1735, %v1953
        %v1955 = vpop.f32.mrb[0].mxu0
        %v1956 = vadd.f32 %v1737, %v1955
        %1957 = vmatprep.mubr.f32.mxu0 0.0
        %v1958 = vand.u32 %v1555, 4294901760
        %1959 = vmatmul.mubr.f32.gmra.mrb[0].mxu0 %v1958
        %v1960 = vpop.f32.mrb[0].mxu0
        %v1961 = vadd.f32 %v1746, %v1960
        %v1962 = vpop.f32.mrb[0].mxu0
        %v1963 = vadd.f32 %v1748, %v1962
        %1964 = vmatprep.mubr.f32.mxu0 0.0
        %v1965 = vand.u32 %v1558, 4294901760
        %1966 = vmatmul.mubr.f32.gmra.mrb[0].mxu0 %v1965
        %v1967 = vpop.f32.mrb[0].mxu0
        %v1968 = vadd.f32 %v1757, %v1967
        %v1969 = vpop.f32.mrb[0].mxu0
        %v1970 = vadd.f32 %v1759, %v1969
        %1971 = vmatprep.mubr.f32.mxu0 0.0
        %v1972 = vand.u32 %v1561, 4294901760
        %1973 = vmatmul.mubr.f32.gmra.mrb[0].mxu0 %v1972
        %v1974 = vpop.f32.mrb[0].mxu0
        %v1975 = vadd.f32 %v1768, %v1974
        %v1976 = vpop.f32.mrb[0].mxu0
        %v1977 = vadd.f32 %v1770, %v1976
        %1978 = vmatprep.mubr.f32.mxu0 0.0
        %v1979 = vand.u32 %v1564, 4294901760
        %1980 = vmatmul.mubr.f32.gmra.mrb[0].mxu0 %v1979
        %v1981 = vpop.f32.mrb[0].mxu0
        %v1982 = vadd.f32 %v1779, %v1981
        %v1983 = vpop.f32.mrb[0].mxu0
        %v1984 = vadd.f32 %v1781, %v1983
        %1985 = vmatprep.mubr.f32.mxu0 0.0
        %v1986 = vand.u32 %v1567, 4294901760
        %1987 = vmatmul.mubr.f32.gmra.mrb[0].mxu0 %v1986
        %v1988 = vpop.f32.mrb[0].mxu0
        %v1989 = vadd.f32 %v1790, %v1988
        %v1990 = vpop.f32.mrb[0].mxu0
        %v1991 = vadd.f32 %v1792, %v1990
        %1992 = vmatprep.mubr.f32.mxu0 0.0
        %v1993 = vand.u32 %v1570, 4294901760
        %1994 = vmatmul.mubr.f32.gmra.mrb[0].mxu0 %v1993
        %v1995 = vpop.f32.mrb[0].mxu0
        %v1996 = vadd.f32 %v1801, %v1995
        %v1997 = vpop.f32.mrb[0].mxu0
        %v1998 = vadd.f32 %v1803, %v1997
        %1999 = vmatprep.mubr.f32.mxu0 0.0
        %v2000 = vand.u32 %v1573, 4294901760
        %2001 = vmatmul.mubr.f32.gmra.mrb[0].mxu0 %v2000
        %v2002 = vpop.f32.mrb[0].mxu0
        %v2003 = vadd.f32 %v1812, %v2002
        %v2004 = vpop.f32.mrb[0].mxu0
        %v2005 = vadd.f32 %v1814, %v2004
        %2006 = vmatprep.mubr.f32.mxu0 0.0
        %v2007 = vand.u32 %v1576, 4294901760
        %2008 = vmatmul.mubr.f32.gmra.mrb[0].mxu0 %v2007
        %v2009 = vpop.f32.mrb[0].mxu0
        %v2010 = vadd.f32 %v1823, %v2009
        %v2011 = vpop.f32.mrb[0].mxu0
        %v2012 = vadd.f32 %v1825, %v2011
        %2013 = vdwg.mxu0
        %v2014 = vand.u32 %v1582, 4294901760
        %v2015 = vsub.f32 %v1582, %v2014
        %2016 = vmatprep.subr.mxu0 %v2015
        %v2017 = vand.u32 %v1579, 4294901760
        %v2018 = vsub.f32 %v1579, %v2017
        %2019 = vmatpush1.msra.mxu0 %v2018
        %2020 = vmatprep.subr.mxu0 0.0
        %2021 = vmatpush1.msra.mxu0 0.0
        %2022 = vmatprep.subr.mxu0 0.0
        %2023 = vmatpush1.msra.mxu0 0.0
        %2024 = vmatprep.subr.mxu0 0.0
        %2025 = vmatpush1.msra.mxu0 0.0
        %2026 = vmatprep.subr.mxu0 0.0
        %2027 = vmatpush1.msra.mxu0 0.0
        %2028 = vmatprep.subr.mxu0 0.0
        %2029 = vmatpush1.msra.mxu0 0.0
        %2030 = vmatprep.subr.mxu0 0.0
        %2031 = vmatpush1.msra.mxu0 0.0
        %2032 = vmatprep.subr.mxu0 0.0
        %2033 = vmatpush1.msra.mxu0 0.0
        %2034 = vmatprep.subr.mxu0 0.0
        %2035 = vmatpush1.msra.mxu0 0.0
        %2036 = vmatprep.subr.mxu0 0.0
        %2037 = vmatpush1.msra.mxu0 0.0
        %2038 = vmatprep.subr.mxu0 0.0
        %2039 = vmatpush1.msra.mxu0 0.0
        %2040 = vmatprep.subr.mxu0 0.0
        %2041 = vmatpush1.msra.mxu0 0.0
        %2042 = vmatprep.subr.mxu0 0.0
        %2043 = vmatpush1.msra.mxu0 0.0
        %2044 = vmatprep.subr.mxu0 0.0
        %2045 = vmatpush1.msra.mxu0 0.0
        %2046 = vmatprep.subr.mxu0 0.0
        %2047 = vmatpush1.msra.mxu0 0.0
        %2048 = vmatprep.subr.mxu0 0.0
        %2049 = vmatpush1.msra.mxu0 0.0
        %2050 = vmatprep.subr.mxu0 0.0
        %2051 = vmatpush1.msra.mxu0 0.0
        %2052 = vmatprep.subr.mxu0 0.0
        %2053 = vmatpush1.msra.mxu0 0.0
        %2054 = vmatprep.subr.mxu0 0.0
        %2055 = vmatpush1.msra.mxu0 0.0
        %2056 = vmatprep.subr.mxu0 0.0
        %2057 = vmatpush1.msra.mxu0 0.0
        %2058 = vmatprep.subr.mxu0 0.0
        %2059 = vmatpush1.msra.mxu0 0.0
        %2060 = vmatprep.subr.mxu0 0.0
        %2061 = vmatpush1.msra.mxu0 0.0
        %2062 = vmatprep.subr.mxu0 0.0
        %2063 = vmatpush1.msra.mxu0 0.0
        %2064 = vmatprep.subr.mxu0 0.0
        %2065 = vmatpush1.msra.mxu0 0.0
        %2066 = vmatprep.subr.mxu0 0.0
        %2067 = vmatpush1.msra.mxu0 0.0
        %2068 = vmatprep.subr.mxu0 0.0
        %2069 = vmatpush1.msra.mxu0 0.0
        %2070 = vmatprep.subr.mxu0 0.0
        %2071 = vmatpush1.msra.mxu0 0.0
        %2072 = vmatprep.subr.mxu0 0.0
        %2073 = vmatpush1.msra.mxu0 0.0
        %2074 = vmatprep.subr.mxu0 0.0
        %2075 = vmatpush1.msra.mxu0 0.0
        %2076 = vmatprep.subr.mxu0 0.0
        %2077 = vmatpush1.msra.mxu0 0.0
        %2078 = vmatprep.subr.mxu0 0.0
        %2079 = vmatpush1.msra.mxu0 0.0
        %2080 = vmatprep.subr.mxu0 0.0
        %2081 = vmatpush1.msra.mxu0 0.0
        %2082 = vmatprep.mubr.f32.mxu0 0.0
        %v2083 = vand.u32 %v1531, 4294901760
        %v2084 = vsub.f32 %v1531, %v2083
        %2085 = vmatmul.mubr.f32.gmra.mrb[0].mxu0 %v2084
        %v2086 = vpop.f32.mrb[0].mxu0
        %v2087 = vadd.f32 %v1905, %v2086
        %v2088 = vpop.f32.mrb[0].mxu0
        %v2089 = vadd.f32 %v1907, %v2088
        %2090 = vmatprep.mubr.f32.mxu0 0.0
        %v2091 = vand.u32 %v1534, 4294901760
        %v2092 = vsub.f32 %v1534, %v2091
        %2093 = vmatmul.mubr.f32.gmra.mrb[0].mxu0 %v2092
        %v2094 = vpop.f32.mrb[0].mxu0
        %v2095 = vadd.f32 %v1912, %v2094
        %v2096 = vpop.f32.mrb[0].mxu0
        %v2097 = vadd.f32 %v1914, %v2096
        %2098 = vmatprep.mubr.f32.mxu0 0.0
        %v2099 = vand.u32 %v1537, 4294901760
        %v2100 = vsub.f32 %v1537, %v2099
        %2101 = vmatmul.mubr.f32.gmra.mrb[0].mxu0 %v2100
        %v2102 = vpop.f32.mrb[0].mxu0
        %v2103 = vadd.f32 %v1919, %v2102
        %v2104 = vpop.f32.mrb[0].mxu0
        %v2105 = vadd.f32 %v1921, %v2104
        %2106 = vmatprep.mubr.f32.mxu0 0.0
        %v2107 = vand.u32 %v1540, 4294901760
        %v2108 = vsub.f32 %v1540, %v2107
        %2109 = vmatmul.mubr.f32.gmra.mrb[0].mxu0 %v2108
        %v2110 = vpop.f32.mrb[0].mxu0
        %v2111 = vadd.f32 %v1926, %v2110
        %v2112 = vpop.f32.mrb[0].mxu0
        %v2113 = vadd.f32 %v1928, %v2112
        %2114 = vmatprep.mubr.f32.mxu0 0.0
        %v2115 = vand.u32 %v1543, 4294901760
        %v2116 = vsub.f32 %v1543, %v2115
        %2117 = vmatmul.mubr.f32.gmra.mrb[0].mxu0 %v2116
        %v2118 = vpop.f32.mrb[0].mxu0
        %v2119 = vadd.f32 %v1933, %v2118
        %v2120 = vpop.f32.mrb[0].mxu0
        %v2121 = vadd.f32 %v1935, %v2120
        %2122 = vmatprep.mubr.f32.mxu0 0.0
        %v2123 = vand.u32 %v1546, 4294901760
        %v2124 = vsub.f32 %v1546, %v2123
        %2125 = vmatmul.mubr.f32.gmra.mrb[0].mxu0 %v2124
        %v2126 = vpop.f32.mrb[0].mxu0
        %v2127 = vadd.f32 %v1940, %v2126
        %v2128 = vpop.f32.mrb[0].mxu0
        %v2129 = vadd.f32 %v1942, %v2128
        %2130 = vmatprep.mubr.f32.mxu0 0.0
        %v2131 = vand.u32 %v1549, 4294901760
        %v2132 = vsub.f32 %v1549, %v2131
        %2133 = vmatmul.mubr.f32.gmra.mrb[0].mxu0 %v2132
        %v2134 = vpop.f32.mrb[0].mxu0
        %v2135 = vadd.f32 %v1947, %v2134
        %v2136 = vpop.f32.mrb[0].mxu0
        %v2137 = vadd.f32 %v1949, %v2136
        %2138 = vmatprep.mubr.f32.mxu0 0.0
        %v2139 = vand.u32 %v1552, 4294901760
        %v2140 = vsub.f32 %v1552, %v2139
        %2141 = vmatmul.mubr.f32.gmra.mrb[0].mxu0 %v2140
        %v2142 = vpop.f32.mrb[0].mxu0
        %v2143 = vadd.f32 %v1954, %v2142
        %v2144 = vpop.f32.mrb[0].mxu0
        %v2145 = vadd.f32 %v1956, %v2144
        %2146 = vmatprep.mubr.f32.mxu0 0.0
        %v2147 = vand.u32 %v1555, 4294901760
        %v2148 = vsub.f32 %v1555, %v2147
        %2149 = vmatmul.mubr.f32.gmra.mrb[0].mxu0 %v2148
        %v2150 = vpop.f32.mrb[0].mxu0
        %v2151 = vadd.f32 %v1961, %v2150
        %v2152 = vpop.f32.mrb[0].mxu0
        %v2153 = vadd.f32 %v1963, %v2152
        %2154 = vmatprep.mubr.f32.mxu0 0.0
        %v2155 = vand.u32 %v1558, 4294901760
        %v2156 = vsub.f32 %v1558, %v2155
        %2157 = vmatmul.mubr.f32.gmra.mrb[0].mxu0 %v2156
        %v2158 = vpop.f32.mrb[0].mxu0
        %v2159 = vadd.f32 %v1968, %v2158
        %v2160 = vpop.f32.mrb[0].mxu0
        %v2161 = vadd.f32 %v1970, %v2160
        %2162 = vmatprep.mubr.f32.mxu0 0.0
        %v2163 = vand.u32 %v1561, 4294901760
        %v2164 = vsub.f32 %v1561, %v2163
        %2165 = vmatmul.mubr.f32.gmra.mrb[0].mxu0 %v2164
        %v2166 = vpop.f32.mrb[0].mxu0
        %v2167 = vadd.f32 %v1975, %v2166
        %v2168 = vpop.f32.mrb[0].mxu0
        %v2169 = vadd.f32 %v1977, %v2168
        %2170 = vmatprep.mubr.f32.mxu0 0.0
        %v2171 = vand.u32 %v1564, 4294901760
        %v2172 = vsub.f32 %v1564, %v2171
        %2173 = vmatmul.mubr.f32.gmra.mrb[0].mxu0 %v2172
        %v2174 = vpop.f32.mrb[0].mxu0
        %v2175 = vadd.f32 %v1982, %v2174
        %v2176 = vpop.f32.mrb[0].mxu0
        %v2177 = vadd.f32 %v1984, %v2176
        %2178 = vmatprep.mubr.f32.mxu0 0.0
        %v2179 = vand.u32 %v1567, 4294901760
        %v2180 = vsub.f32 %v1567, %v2179
        %2181 = vmatmul.mubr.f32.gmra.mrb[0].mxu0 %v2180
        %v2182 = vpop.f32.mrb[0].mxu0
        %v2183 = vadd.f32 %v1989, %v2182
        %v2184 = vpop.f32.mrb[0].mxu0
        %v2185 = vadd.f32 %v1991, %v2184
        %2186 = vmatprep.mubr.f32.mxu0 0.0
        %v2187 = vand.u32 %v1570, 4294901760
        %v2188 = vsub.f32 %v1570, %v2187
        %2189 = vmatmul.mubr.f32.gmra.mrb[0].mxu0 %v2188
        %v2190 = vpop.f32.mrb[0].mxu0
        %v2191 = vadd.f32 %v1996, %v2190
        %v2192 = vpop.f32.mrb[0].mxu0
        %v2193 = vadd.f32 %v1998, %v2192
        %2194 = vmatprep.mubr.f32.mxu0 0.0
        %v2195 = vand.u32 %v1573, 4294901760
        %v2196 = vsub.f32 %v1573, %v2195
        %2197 = vmatmul.mubr.f32.gmra.mrb[0].mxu0 %v2196
        %v2198 = vpop.f32.mrb[0].mxu0
        %v2199 = vadd.f32 %v2003, %v2198
        %v2200 = vpop.f32.mrb[0].mxu0
        %v2201 = vadd.f32 %v2005, %v2200
        %2202 = vmatprep.mubr.f32.mxu0 0.0
        %v2203 = vand.u32 %v1576, 4294901760
        %v2204 = vsub.f32 %v1576, %v2203
        %2205 = vmatmul.mubr.f32.gmra.mrb[0].mxu0 %v2204
        %v2206 = vpop.f32.mrb[0].mxu0
        %v2207 = vadd.f32 %v2010, %v2206
        %v2208 = vpop.f32.mrb[0].mxu0
        %v2209 = vadd.f32 %v2012, %v2208
        %2210 = vdwg.mxu0
        %v2211 = vand.u32 %v1582, 4294901760
        %2212 = vmatprep.subr.mxu0 %v2211
        %v2213 = vand.u32 %v1579, 4294901760
        %2214 = vmatpush1.msra.mxu0 %v2213
        %2215 = vmatprep.subr.mxu0 0.0
        %2216 = vmatpush1.msra.mxu0 0.0
        %2217 = vmatprep.subr.mxu0 0.0
        %2218 = vmatpush1.msra.mxu0 0.0
        %2219 = vmatprep.subr.mxu0 0.0
        %2220 = vmatpush1.msra.mxu0 0.0
        %2221 = vmatprep.subr.mxu0 0.0
        %2222 = vmatpush1.msra.mxu0 0.0
        %2223 = vmatprep.subr.mxu0 0.0
        %2224 = vmatpush1.msra.mxu0 0.0
        %2225 = vmatprep.subr.mxu0 0.0
        %2226 = vmatpush1.msra.mxu0 0.0
        %2227 = vmatprep.subr.mxu0 0.0
        %2228 = vmatpush1.msra.mxu0 0.0
        %2229 = vmatprep.subr.mxu0 0.0
        %2230 = vmatpush1.msra.mxu0 0.0
        %2231 = vmatprep.subr.mxu0 0.0
        %2232 = vmatpush1.msra.mxu0 0.0
        %2233 = vmatprep.subr.mxu0 0.0
        %2234 = vmatpush1.msra.mxu0 0.0
        %2235 = vmatprep.subr.mxu0 0.0
        %2236 = vmatpush1.msra.mxu0 0.0
        %2237 = vmatprep.subr.mxu0 0.0
        %2238 = vmatpush1.msra.mxu0 0.0
        %2239 = vmatprep.subr.mxu0 0.0
        %2240 = vmatpush1.msra.mxu0 0.0
        %2241 = vmatprep.subr.mxu0 0.0
        %2242 = vmatpush1.msra.mxu0 0.0
        %2243 = vmatprep.subr.mxu0 0.0
        %2244 = vmatpush1.msra.mxu0 0.0
        %2245 = vmatprep.subr.mxu0 0.0
        %2246 = vmatpush1.msra.mxu0 0.0
        %2247 = vmatprep.subr.mxu0 0.0
        %2248 = vmatpush1.msra.mxu0 0.0
        %2249 = vmatprep.subr.mxu0 0.0
        %2250 = vmatpush1.msra.mxu0 0.0
        %2251 = vmatprep.subr.mxu0 0.0
        %2252 = vmatpush1.msra.mxu0 0.0
        %2253 = vmatprep.subr.mxu0 0.0
        %2254 = vmatpush1.msra.mxu0 0.0
        %2255 = vmatprep.subr.mxu0 0.0
        %2256 = vmatpush1.msra.mxu0 0.0
        %2257 = vmatprep.subr.mxu0 0.0
        %2258 = vmatpush1.msra.mxu0 0.0
        %2259 = vmatprep.subr.mxu0 0.0
        %2260 = vmatpush1.msra.mxu0 0.0
        %2261 = vmatprep.subr.mxu0 0.0
        %2262 = vmatpush1.msra.mxu0 0.0
        %2263 = vmatprep.subr.mxu0 0.0
        %2264 = vmatpush1.msra.mxu0 0.0
        %2265 = vmatprep.subr.mxu0 0.0
        %2266 = vmatpush1.msra.mxu0 0.0
        %2267 = vmatprep.subr.mxu0 0.0
        %2268 = vmatpush1.msra.mxu0 0.0
        %2269 = vmatprep.subr.mxu0 0.0
        %2270 = vmatpush1.msra.mxu0 0.0
        %2271 = vmatprep.subr.mxu0 0.0
        %2272 = vmatpush1.msra.mxu0 0.0
        %2273 = vmatprep.subr.mxu0 0.0
        %2274 = vmatpush1.msra.mxu0 0.0
        %2275 = vmatprep.subr.mxu0 0.0
        %2276 = vmatpush1.msra.mxu0 0.0
        %2277 = vmatprep.mubr.f32.mxu0 0.0
        %v2278 = vand.u32 %v1531, 4294901760
        %v2279 = vsub.f32 %v1531, %v2278
        %v2280 = vand.u32 %v2279, 4294901760
        %2281 = vmatmul.mubr.f32.gmra.mrb[0].mxu0 %v2280
        %v2282 = vpop.f32.mrb[0].mxu0
        %v2283 = vadd.f32 %v2087, %v2282
        %v2284 = vpop.f32.mrb[0].mxu0
        %v2285 = vadd.f32 %v2089, %v2284
        %2286 = vmatprep.mubr.f32.mxu0 0.0
        %v2287 = vand.u32 %v1534, 4294901760
        %v2288 = vsub.f32 %v1534, %v2287
        %v2289 = vand.u32 %v2288, 4294901760
        %2290 = vmatmul.mubr.f32.gmra.mrb[0].mxu0 %v2289
        %v2291 = vpop.f32.mrb[0].mxu0
        %v2292 = vadd.f32 %v2095, %v2291
        %v2293 = vpop.f32.mrb[0].mxu0
        %v2294 = vadd.f32 %v2097, %v2293
        %2295 = vmatprep.mubr.f32.mxu0 0.0
        %v2296 = vand.u32 %v1537, 4294901760
        %v2297 = vsub.f32 %v1537, %v2296
        %v2298 = vand.u32 %v2297, 4294901760
        %2299 = vmatmul.mubr.f32.gmra.mrb[0].mxu0 %v2298
        %v2300 = vpop.f32.mrb[0].mxu0
        %v2301 = vadd.f32 %v2103, %v2300
        %v2302 = vpop.f32.mrb[0].mxu0
        %v2303 = vadd.f32 %v2105, %v2302
        %2304 = vmatprep.mubr.f32.mxu0 0.0
        %v2305 = vand.u32 %v1540, 4294901760
        %v2306 = vsub.f32 %v1540, %v2305
        %v2307 = vand.u32 %v2306, 4294901760
        %2308 = vmatmul.mubr.f32.gmra.mrb[0].mxu0 %v2307
        %v2309 = vpop.f32.mrb[0].mxu0
        %v2310 = vadd.f32 %v2111, %v2309
        %v2311 = vpop.f32.mrb[0].mxu0
        %v2312 = vadd.f32 %v2113, %v2311
        %2313 = vmatprep.mubr.f32.mxu0 0.0
        %v2314 = vand.u32 %v1543, 4294901760
        %v2315 = vsub.f32 %v1543, %v2314
        %v2316 = vand.u32 %v2315, 4294901760
        %2317 = vmatmul.mubr.f32.gmra.mrb[0].mxu0 %v2316
        %v2318 = vpop.f32.mrb[0].mxu0
        %v2319 = vadd.f32 %v2119, %v2318
        %v2320 = vpop.f32.mrb[0].mxu0
        %v2321 = vadd.f32 %v2121, %v2320
        %2322 = vmatprep.mubr.f32.mxu0 0.0
        %v2323 = vand.u32 %v1546, 4294901760
        %v2324 = vsub.f32 %v1546, %v2323
        %v2325 = vand.u32 %v2324, 4294901760
        %2326 = vmatmul.mubr.f32.gmra.mrb[0].mxu0 %v2325
        %v2327 = vpop.f32.mrb[0].mxu0
        %v2328 = vadd.f32 %v2127, %v2327
        %v2329 = vpop.f32.mrb[0].mxu0
        %v2330 = vadd.f32 %v2129, %v2329
        %2331 = vmatprep.mubr.f32.mxu0 0.0
        %v2332 = vand.u32 %v1549, 4294901760
        %v2333 = vsub.f32 %v1549, %v2332
        %v2334 = vand.u32 %v2333, 4294901760
        %2335 = vmatmul.mubr.f32.gmra.mrb[0].mxu0 %v2334
        %v2336 = vpop.f32.mrb[0].mxu0
        %v2337 = vadd.f32 %v2135, %v2336
        %v2338 = vpop.f32.mrb[0].mxu0
        %v2339 = vadd.f32 %v2137, %v2338
        %2340 = vmatprep.mubr.f32.mxu0 0.0
        %v2341 = vand.u32 %v1552, 4294901760
        %v2342 = vsub.f32 %v1552, %v2341
        %v2343 = vand.u32 %v2342, 4294901760
        %2344 = vmatmul.mubr.f32.gmra.mrb[0].mxu0 %v2343
        %v2345 = vpop.f32.mrb[0].mxu0
        %v2346 = vadd.f32 %v2143, %v2345
        %v2347 = vpop.f32.mrb[0].mxu0
        %v2348 = vadd.f32 %v2145, %v2347
        %2349 = vmatprep.mubr.f32.mxu0 0.0
        %v2350 = vand.u32 %v1555, 4294901760
        %v2351 = vsub.f32 %v1555, %v2350
        %v2352 = vand.u32 %v2351, 4294901760
        %2353 = vmatmul.mubr.f32.gmra.mrb[0].mxu0 %v2352
        %v2354 = vpop.f32.mrb[0].mxu0
        %v2355 = vadd.f32 %v2151, %v2354
        %v2356 = vpop.f32.mrb[0].mxu0
        %v2357 = vadd.f32 %v2153, %v2356
        %2358 = vmatprep.mubr.f32.mxu0 0.0
        %v2359 = vand.u32 %v1558, 4294901760
        %v2360 = vsub.f32 %v1558, %v2359
        %v2361 = vand.u32 %v2360, 4294901760
        %2362 = vmatmul.mubr.f32.gmra.mrb[0].mxu0 %v2361
        %v2363 = vpop.f32.mrb[0].mxu0
        %v2364 = vadd.f32 %v2159, %v2363
        %v2365 = vpop.f32.mrb[0].mxu0
        %v2366 = vadd.f32 %v2161, %v2365
        %2367 = vmatprep.mubr.f32.mxu0 0.0
        %v2368 = vand.u32 %v1561, 4294901760
        %v2369 = vsub.f32 %v1561, %v2368
        %v2370 = vand.u32 %v2369, 4294901760
        %2371 = vmatmul.mubr.f32.gmra.mrb[0].mxu0 %v2370
        %v2372 = vpop.f32.mrb[0].mxu0
        %v2373 = vadd.f32 %v2167, %v2372
        %v2374 = vpop.f32.mrb[0].mxu0
        %v2375 = vadd.f32 %v2169, %v2374
        %2376 = vmatprep.mubr.f32.mxu0 0.0
        %v2377 = vand.u32 %v1564, 4294901760
        %v2378 = vsub.f32 %v1564, %v2377
        %v2379 = vand.u32 %v2378, 4294901760
        %2380 = vmatmul.mubr.f32.gmra.mrb[0].mxu0 %v2379
        %v2381 = vpop.f32.mrb[0].mxu0
        %v2382 = vadd.f32 %v2175, %v2381
        %v2383 = vpop.f32.mrb[0].mxu0
        %v2384 = vadd.f32 %v2177, %v2383
        %2385 = vmatprep.mubr.f32.mxu0 0.0
        %v2386 = vand.u32 %v1567, 4294901760
        %v2387 = vsub.f32 %v1567, %v2386
        %v2388 = vand.u32 %v2387, 4294901760
        %2389 = vmatmul.mubr.f32.gmra.mrb[0].mxu0 %v2388
        %v2390 = vpop.f32.mrb[0].mxu0
        %v2391 = vadd.f32 %v2183, %v2390
        %v2392 = vpop.f32.mrb[0].mxu0
        %v2393 = vadd.f32 %v2185, %v2392
        %2394 = vmatprep.mubr.f32.mxu0 0.0
        %v2395 = vand.u32 %v1570, 4294901760
        %v2396 = vsub.f32 %v1570, %v2395
        %v2397 = vand.u32 %v2396, 4294901760
        %2398 = vmatmul.mubr.f32.gmra.mrb[0].mxu0 %v2397
        %v2399 = vpop.f32.mrb[0].mxu0
        %v2400 = vadd.f32 %v2191, %v2399
        %v2401 = vpop.f32.mrb[0].mxu0
        %v2402 = vadd.f32 %v2193, %v2401
        %2403 = vmatprep.mubr.f32.mxu0 0.0
        %v2404 = vand.u32 %v1573, 4294901760
        %v2405 = vsub.f32 %v1573, %v2404
        %v2406 = vand.u32 %v2405, 4294901760
        %2407 = vmatmul.mubr.f32.gmra.mrb[0].mxu0 %v2406
        %v2408 = vpop.f32.mrb[0].mxu0
        %v2409 = vadd.f32 %v2199, %v2408
        %v2410 = vpop.f32.mrb[0].mxu0
        %v2411 = vadd.f32 %v2201, %v2410
        %2412 = vmatprep.mubr.f32.mxu0 0.0
        %v2413 = vand.u32 %v1576, 4294901760
        %v2414 = vsub.f32 %v1576, %v2413
        %v2415 = vand.u32 %v2414, 4294901760
        %2416 = vmatmul.mubr.f32.gmra.mrb[0].mxu0 %v2415
        %v2417 = vpop.f32.mrb[0].mxu0
        %v2418 = vadd.f32 %v2207, %v2417
        %v2419 = vpop.f32.mrb[0].mxu0
        %v2420 = vadd.f32 %v2209, %v2419
        %2421 = vdwg.mxu0
        %v2422 = vand.u32 %v1582, 4294901760
        %v2423 = vsub.f32 %v1582, %v2422
        %v2424 = vand.u32 %v2423, 4294901760
        %2425 = vmatprep.subr.mxu0 %v2424
        %v2426 = vand.u32 %v1579, 4294901760
        %v2427 = vsub.f32 %v1579, %v2426
        %v2428 = vand.u32 %v2427, 4294901760
        %2429 = vmatpush1.msra.mxu0 %v2428
        %2430 = vmatprep.subr.mxu0 0.0
        %2431 = vmatpush1.msra.mxu0 0.0
        %2432 = vmatprep.subr.mxu0 0.0
        %2433 = vmatpush1.msra.mxu0 0.0
        %2434 = vmatprep.subr.mxu0 0.0
        %2435 = vmatpush1.msra.mxu0 0.0
        %2436 = vmatprep.subr.mxu0 0.0
        %2437 = vmatpush1.msra.mxu0 0.0
        %2438 = vmatprep.subr.mxu0 0.0
        %2439 = vmatpush1.msra.mxu0 0.0
        %2440 = vmatprep.subr.mxu0 0.0
        %2441 = vmatpush1.msra.mxu0 0.0
        %2442 = vmatprep.subr.mxu0 0.0
        %2443 = vmatpush1.msra.mxu0 0.0
        %2444 = vmatprep.subr.mxu0 0.0
        %2445 = vmatpush1.msra.mxu0 0.0
        %2446 = vmatprep.subr.mxu0 0.0
        %2447 = vmatpush1.msra.mxu0 0.0
        %2448 = vmatprep.subr.mxu0 0.0
        %2449 = vmatpush1.msra.mxu0 0.0
        %2450 = vmatprep.subr.mxu0 0.0
        %2451 = vmatpush1.msra.mxu0 0.0
        %2452 = vmatprep.subr.mxu0 0.0
        %2453 = vmatpush1.msra.mxu0 0.0
        %2454 = vmatprep.subr.mxu0 0.0
        %2455 = vmatpush1.msra.mxu0 0.0
        %2456 = vmatprep.subr.mxu0 0.0
        %2457 = vmatpush1.msra.mxu0 0.0
        %2458 = vmatprep.subr.mxu0 0.0
        %2459 = vmatpush1.msra.mxu0 0.0
        %2460 = vmatprep.subr.mxu0 0.0
        %2461 = vmatpush1.msra.mxu0 0.0
        %2462 = vmatprep.subr.mxu0 0.0
        %2463 = vmatpush1.msra.mxu0 0.0
        %2464 = vmatprep.subr.mxu0 0.0
        %2465 = vmatpush1.msra.mxu0 0.0
        %2466 = vmatprep.subr.mxu0 0.0
        %2467 = vmatpush1.msra.mxu0 0.0
        %2468 = vmatprep.subr.mxu0 0.0
        %2469 = vmatpush1.msra.mxu0 0.0
        %2470 = vmatprep.subr.mxu0 0.0
        %2471 = vmatpush1.msra.mxu0 0.0
        %2472 = vmatprep.subr.mxu0 0.0
        %2473 = vmatpush1.msra.mxu0 0.0
        %2474 = vmatprep.subr.mxu0 0.0
        %2475 = vmatpush1.msra.mxu0 0.0
        %2476 = vmatprep.subr.mxu0 0.0
        %2477 = vmatpush1.msra.mxu0 0.0
        %2478 = vmatprep.subr.mxu0 0.0
        %2479 = vmatpush1.msra.mxu0 0.0
        %2480 = vmatprep.subr.mxu0 0.0
        %2481 = vmatpush1.msra.mxu0 0.0
        %2482 = vmatprep.subr.mxu0 0.0
        %2483 = vmatpush1.msra.mxu0 0.0
        %2484 = vmatprep.subr.mxu0 0.0
        %2485 = vmatpush1.msra.mxu0 0.0
        %2486 = vmatprep.subr.mxu0 0.0
        %2487 = vmatpush1.msra.mxu0 0.0
        %2488 = vmatprep.subr.mxu0 0.0
        %2489 = vmatpush1.msra.mxu0 0.0
        %2490 = vmatprep.subr.mxu0 0.0
        %2491 = vmatpush1.msra.mxu0 0.0
        %2492 = vmatprep.mubr.f32.mxu0 0.0
        %v2493 = vand.u32 %v1531, 4294901760
        %2494 = vmatmul.mubr.f32.gmra.mrb[0].mxu0 %v2493
        %v2495 = vpop.f32.mrb[0].mxu0
        %v2496 = vadd.f32 %v2283, %v2495
        %v2497 = vpop.f32.mrb[0].mxu0
        %v2498 = vadd.f32 %v2285, %v2497
        %2499 = vmatprep.mubr.f32.mxu0 0.0
        %v2500 = vand.u32 %v1534, 4294901760
        %2501 = vmatmul.mubr.f32.gmra.mrb[0].mxu0 %v2500
        %v2502 = vpop.f32.mrb[0].mxu0
        %v2503 = vadd.f32 %v2292, %v2502
        %v2504 = vpop.f32.mrb[0].mxu0
        %v2505 = vadd.f32 %v2294, %v2504
        %2506 = vmatprep.mubr.f32.mxu0 0.0
        %v2507 = vand.u32 %v1537, 4294901760
        %2508 = vmatmul.mubr.f32.gmra.mrb[0].mxu0 %v2507
        %v2509 = vpop.f32.mrb[0].mxu0
        %v2510 = vadd.f32 %v2301, %v2509
        %v2511 = vpop.f32.mrb[0].mxu0
        %v2512 = vadd.f32 %v2303, %v2511
        %2513 = vmatprep.mubr.f32.mxu0 0.0
        %v2514 = vand.u32 %v1540, 4294901760
        %2515 = vmatmul.mubr.f32.gmra.mrb[0].mxu0 %v2514
        %v2516 = vpop.f32.mrb[0].mxu0
        %v2517 = vadd.f32 %v2310, %v2516
        %v2518 = vpop.f32.mrb[0].mxu0
        %v2519 = vadd.f32 %v2312, %v2518
        %2520 = vmatprep.mubr.f32.mxu0 0.0
        %v2521 = vand.u32 %v1543, 4294901760
        %2522 = vmatmul.mubr.f32.gmra.mrb[0].mxu0 %v2521
        %v2523 = vpop.f32.mrb[0].mxu0
        %v2524 = vadd.f32 %v2319, %v2523
        %v2525 = vpop.f32.mrb[0].mxu0
        %v2526 = vadd.f32 %v2321, %v2525
        %2527 = vmatprep.mubr.f32.mxu0 0.0
        %v2528 = vand.u32 %v1546, 4294901760
        %2529 = vmatmul.mubr.f32.gmra.mrb[0].mxu0 %v2528
        %v2530 = vpop.f32.mrb[0].mxu0
        %v2531 = vadd.f32 %v2328, %v2530
        %v2532 = vpop.f32.mrb[0].mxu0
        %v2533 = vadd.f32 %v2330, %v2532
        %2534 = vmatprep.mubr.f32.mxu0 0.0
        %v2535 = vand.u32 %v1549, 4294901760
        %2536 = vmatmul.mubr.f32.gmra.mrb[0].mxu0 %v2535
        %v2537 = vpop.f32.mrb[0].mxu0
        %v2538 = vadd.f32 %v2337, %v2537
        %v2539 = vpop.f32.mrb[0].mxu0
        %v2540 = vadd.f32 %v2339, %v2539
        %2541 = vmatprep.mubr.f32.mxu0 0.0
        %v2542 = vand.u32 %v1552, 4294901760
        %2543 = vmatmul.mubr.f32.gmra.mrb[0].mxu0 %v2542
        %v2544 = vpop.f32.mrb[0].mxu0
        %v2545 = vadd.f32 %v2346, %v2544
        %v2546 = vpop.f32.mrb[0].mxu0
        %v2547 = vadd.f32 %v2348, %v2546
        %2548 = vmatprep.mubr.f32.mxu0 0.0
        %v2549 = vand.u32 %v1555, 4294901760
        %2550 = vmatmul.mubr.f32.gmra.mrb[0].mxu0 %v2549
        %v2551 = vpop.f32.mrb[0].mxu0
        %v2552 = vadd.f32 %v2355, %v2551
        %v2553 = vpop.f32.mrb[0].mxu0
        %v2554 = vadd.f32 %v2357, %v2553
        %2555 = vmatprep.mubr.f32.mxu0 0.0
        %v2556 = vand.u32 %v1558, 4294901760
        %2557 = vmatmul.mubr.f32.gmra.mrb[0].mxu0 %v2556
        %v2558 = vpop.f32.mrb[0].mxu0
        %v2559 = vadd.f32 %v2364, %v2558
        %v2560 = vpop.f32.mrb[0].mxu0
        %v2561 = vadd.f32 %v2366, %v2560
        %2562 = vmatprep.mubr.f32.mxu0 0.0
        %v2563 = vand.u32 %v1561, 4294901760
        %2564 = vmatmul.mubr.f32.gmra.mrb[0].mxu0 %v2563
        %v2565 = vpop.f32.mrb[0].mxu0
        %v2566 = vadd.f32 %v2373, %v2565
        %v2567 = vpop.f32.mrb[0].mxu0
        %v2568 = vadd.f32 %v2375, %v2567
        %2569 = vmatprep.mubr.f32.mxu0 0.0
        %v2570 = vand.u32 %v1564, 4294901760
        %2571 = vmatmul.mubr.f32.gmra.mrb[0].mxu0 %v2570
        %v2572 = vpop.f32.mrb[0].mxu0
        %v2573 = vadd.f32 %v2382, %v2572
        %v2574 = vpop.f32.mrb[0].mxu0
        %v2575 = vadd.f32 %v2384, %v2574
        %2576 = vmatprep.mubr.f32.mxu0 0.0
        %v2577 = vand.u32 %v1567, 4294901760
        %2578 = vmatmul.mubr.f32.gmra.mrb[0].mxu0 %v2577
        %v2579 = vpop.f32.mrb[0].mxu0
        %v2580 = vadd.f32 %v2391, %v2579
        %v2581 = vpop.f32.mrb[0].mxu0
        %v2582 = vadd.f32 %v2393, %v2581
        %2583 = vmatprep.mubr.f32.mxu0 0.0
        %v2584 = vand.u32 %v1570, 4294901760
        %2585 = vmatmul.mubr.f32.gmra.mrb[0].mxu0 %v2584
        %v2586 = vpop.f32.mrb[0].mxu0
        %v2587 = vadd.f32 %v2400, %v2586
        %v2588 = vpop.f32.mrb[0].mxu0
        %v2589 = vadd.f32 %v2402, %v2588
        %2590 = vmatprep.mubr.f32.mxu0 0.0
        %v2591 = vand.u32 %v1573, 4294901760
        %2592 = vmatmul.mubr.f32.gmra.mrb[0].mxu0 %v2591
        %v2593 = vpop.f32.mrb[0].mxu0
        %v2594 = vadd.f32 %v2409, %v2593
        %v2595 = vpop.f32.mrb[0].mxu0
        %v2596 = vadd.f32 %v2411, %v2595
        %2597 = vmatprep.mubr.f32.mxu0 0.0
        %v2598 = vand.u32 %v1576, 4294901760
        %2599 = vmatmul.mubr.f32.gmra.mrb[0].mxu0 %v2598
        %v2600 = vpop.f32.mrb[0].mxu0
        %v2601 = vadd.f32 %v2418, %v2600
        %v2602 = vpop.f32.mrb[0].mxu0
        %v2603 = vadd.f32 %v2420, %v2602
        %2604 = vdwg.mxu0
        %v2605 = vand.u32 %v1582, 4294901760
        %2606 = vmatprep.subr.mxu0 %v2605
        %v2607 = vand.u32 %v1579, 4294901760
        %2608 = vmatpush1.msra.mxu0 %v2607
        %2609 = vmatprep.subr.mxu0 0.0
        %2610 = vmatpush1.msra.mxu0 0.0
        %2611 = vmatprep.subr.mxu0 0.0
        %2612 = vmatpush1.msra.mxu0 0.0
        %2613 = vmatprep.subr.mxu0 0.0
        %2614 = vmatpush1.msra.mxu0 0.0
        %2615 = vmatprep.subr.mxu0 0.0
        %2616 = vmatpush1.msra.mxu0 0.0
        %2617 = vmatprep.subr.mxu0 0.0
        %2618 = vmatpush1.msra.mxu0 0.0
        %2619 = vmatprep.subr.mxu0 0.0
        %2620 = vmatpush1.msra.mxu0 0.0
        %2621 = vmatprep.subr.mxu0 0.0
        %2622 = vmatpush1.msra.mxu0 0.0
        %2623 = vmatprep.subr.mxu0 0.0
        %2624 = vmatpush1.msra.mxu0 0.0
        %2625 = vmatprep.subr.mxu0 0.0
        %2626 = vmatpush1.msra.mxu0 0.0
        %2627 = vmatprep.subr.mxu0 0.0
        %2628 = vmatpush1.msra.mxu0 0.0
        %2629 = vmatprep.subr.mxu0 0.0
        %2630 = vmatpush1.msra.mxu0 0.0
        %2631 = vmatprep.subr.mxu0 0.0
        %2632 = vmatpush1.msra.mxu0 0.0
        %2633 = vmatprep.subr.mxu0 0.0
        %2634 = vmatpush1.msra.mxu0 0.0
        %2635 = vmatprep.subr.mxu0 0.0
        %2636 = vmatpush1.msra.mxu0 0.0
        %2637 = vmatprep.subr.mxu0 0.0
        %2638 = vmatpush1.msra.mxu0 0.0
        %2639 = vmatprep.subr.mxu0 0.0
        %2640 = vmatpush1.msra.mxu0 0.0
        %2641 = vmatprep.subr.mxu0 0.0
        %2642 = vmatpush1.msra.mxu0 0.0
        %2643 = vmatprep.subr.mxu0 0.0
        %2644 = vmatpush1.msra.mxu0 0.0
        %2645 = vmatprep.subr.mxu0 0.0
        %2646 = vmatpush1.msra.mxu0 0.0
        %2647 = vmatprep.subr.mxu0 0.0
        %2648 = vmatpush1.msra.mxu0 0.0
        %2649 = vmatprep.subr.mxu0 0.0
        %2650 = vmatpush1.msra.mxu0 0.0
        %2651 = vmatprep.subr.mxu0 0.0
        %2652 = vmatpush1.msra.mxu0 0.0
        %2653 = vmatprep.subr.mxu0 0.0
        %2654 = vmatpush1.msra.mxu0 0.0
        %2655 = vmatprep.subr.mxu0 0.0
        %2656 = vmatpush1.msra.mxu0 0.0
        %2657 = vmatprep.subr.mxu0 0.0
        %2658 = vmatpush1.msra.mxu0 0.0
        %2659 = vmatprep.subr.mxu0 0.0
        %2660 = vmatpush1.msra.mxu0 0.0
        %2661 = vmatprep.subr.mxu0 0.0
        %2662 = vmatpush1.msra.mxu0 0.0
        %2663 = vmatprep.subr.mxu0 0.0
        %2664 = vmatpush1.msra.mxu0 0.0
        %2665 = vmatprep.subr.mxu0 0.0
        %2666 = vmatpush1.msra.mxu0 0.0
        %2667 = vmatprep.subr.mxu0 0.0
        %2668 = vmatpush1.msra.mxu0 0.0
        %2669 = vmatprep.subr.mxu0 0.0
        %2670 = vmatpush1.msra.mxu0 0.0
        %2671 = vmatprep.mubr.f32.mxu0 0.0
        %v2672 = vand.u32 %v1531, 4294901760
        %2673 = vmatmul.mubr.f32.gmra.mrb[0].mxu0 %v2672
        %v2674 = vpop.f32.mrb[0].mxu0
        %v2675 = vadd.f32 %v2496, %v2674
        %v2676 = vpop.f32.mrb[0].mxu0
        %v2677 = vadd.f32 %v2498, %v2676
        %2678 = vmatprep.mubr.f32.mxu0 0.0
        %v2679 = vand.u32 %v1534, 4294901760
        %2680 = vmatmul.mubr.f32.gmra.mrb[0].mxu0 %v2679
        %v2681 = vpop.f32.mrb[0].mxu0
        %v2682 = vadd.f32 %v2503, %v2681
        %v2683 = vpop.f32.mrb[0].mxu0
        %v2684 = vadd.f32 %v2505, %v2683
        %2685 = vmatprep.mubr.f32.mxu0 0.0
        %v2686 = vand.u32 %v1537, 4294901760
        %2687 = vmatmul.mubr.f32.gmra.mrb[0].mxu0 %v2686
        %v2688 = vpop.f32.mrb[0].mxu0
        %v2689 = vadd.f32 %v2510, %v2688
        %v2690 = vpop.f32.mrb[0].mxu0
        %v2691 = vadd.f32 %v2512, %v2690
        %2692 = vmatprep.mubr.f32.mxu0 0.0
        %v2693 = vand.u32 %v1540, 4294901760
        %2694 = vmatmul.mubr.f32.gmra.mrb[0].mxu0 %v2693
        %v2695 = vpop.f32.mrb[0].mxu0
        %v2696 = vadd.f32 %v2517, %v2695
        %v2697 = vpop.f32.mrb[0].mxu0
        %v2698 = vadd.f32 %v2519, %v2697
        %2699 = vmatprep.mubr.f32.mxu0 0.0
        %v2700 = vand.u32 %v1543, 4294901760
        %2701 = vmatmul.mubr.f32.gmra.mrb[0].mxu0 %v2700
        %v2702 = vpop.f32.mrb[0].mxu0
        %v2703 = vadd.f32 %v2524, %v2702
        %v2704 = vpop.f32.mrb[0].mxu0
        %v2705 = vadd.f32 %v2526, %v2704
        %2706 = vmatprep.mubr.f32.mxu0 0.0
        %v2707 = vand.u32 %v1546, 4294901760
        %2708 = vmatmul.mubr.f32.gmra.mrb[0].mxu0 %v2707
        %v2709 = vpop.f32.mrb[0].mxu0
        %v2710 = vadd.f32 %v2531, %v2709
        %v2711 = vpop.f32.mrb[0].mxu0
        %v2712 = vadd.f32 %v2533, %v2711
        %2713 = vmatprep.mubr.f32.mxu0 0.0
        %v2714 = vand.u32 %v1549, 4294901760
        %2715 = vmatmul.mubr.f32.gmra.mrb[0].mxu0 %v2714
        %v2716 = vpop.f32.mrb[0].mxu0
        %v2717 = vadd.f32 %v2538, %v2716
        %v2718 = vpop.f32.mrb[0].mxu0
        %v2719 = vadd.f32 %v2540, %v2718
        %2720 = vmatprep.mubr.f32.mxu0 0.0
        %v2721 = vand.u32 %v1552, 4294901760
        %2722 = vmatmul.mubr.f32.gmra.mrb[0].mxu0 %v2721
        %v2723 = vpop.f32.mrb[0].mxu0
        %v2724 = vadd.f32 %v2545, %v2723
        %v2725 = vpop.f32.mrb[0].mxu0
        %v2726 = vadd.f32 %v2547, %v2725
        %2727 = vmatprep.mubr.f32.mxu0 0.0
        %v2728 = vand.u32 %v1555, 4294901760
        %2729 = vmatmul.mubr.f32.gmra.mrb[0].mxu0 %v2728
        %v2730 = vpop.f32.mrb[0].mxu0
        %v2731 = vadd.f32 %v2552, %v2730
        %v2732 = vpop.f32.mrb[0].mxu0
        %v2733 = vadd.f32 %v2554, %v2732
        %2734 = vmatprep.mubr.f32.mxu0 0.0
        %v2735 = vand.u32 %v1558, 4294901760
        %2736 = vmatmul.mubr.f32.gmra.mrb[0].mxu0 %v2735
        %v2737 = vpop.f32.mrb[0].mxu0
        %v2738 = vadd.f32 %v2559, %v2737
        %v2739 = vpop.f32.mrb[0].mxu0
        %v2740 = vadd.f32 %v2561, %v2739
        %2741 = vmatprep.mubr.f32.mxu0 0.0
        %v2742 = vand.u32 %v1561, 4294901760
        %2743 = vmatmul.mubr.f32.gmra.mrb[0].mxu0 %v2742
        %v2744 = vpop.f32.mrb[0].mxu0
        %v2745 = vadd.f32 %v2566, %v2744
        %v2746 = vpop.f32.mrb[0].mxu0
        %v2747 = vadd.f32 %v2568, %v2746
        %2748 = vmatprep.mubr.f32.mxu0 0.0
        %v2749 = vand.u32 %v1564, 4294901760
        %2750 = vmatmul.mubr.f32.gmra.mrb[0].mxu0 %v2749
        %v2751 = vpop.f32.mrb[0].mxu0
        %v2752 = vadd.f32 %v2573, %v2751
        %v2753 = vpop.f32.mrb[0].mxu0
        %v2754 = vadd.f32 %v2575, %v2753
        %2755 = vmatprep.mubr.f32.mxu0 0.0
        %v2756 = vand.u32 %v1567, 4294901760
        %2757 = vmatmul.mubr.f32.gmra.mrb[0].mxu0 %v2756
        %v2758 = vpop.f32.mrb[0].mxu0
        %v2759 = vadd.f32 %v2580, %v2758
        %v2760 = vpop.f32.mrb[0].mxu0
        %v2761 = vadd.f32 %v2582, %v2760
        %2762 = vmatprep.mubr.f32.mxu0 0.0
        %v2763 = vand.u32 %v1570, 4294901760
        %2764 = vmatmul.mubr.f32.gmra.mrb[0].mxu0 %v2763
        %v2765 = vpop.f32.mrb[0].mxu0
        %v2766 = vadd.f32 %v2587, %v2765
        %v2767 = vpop.f32.mrb[0].mxu0
        %v2768 = vadd.f32 %v2589, %v2767
        %2769 = vmatprep.mubr.f32.mxu0 0.0
        %v2770 = vand.u32 %v1573, 4294901760
        %2771 = vmatmul.mubr.f32.gmra.mrb[0].mxu0 %v2770
        %v2772 = vpop.f32.mrb[0].mxu0
        %v2773 = vadd.f32 %v2594, %v2772
        %v2774 = vpop.f32.mrb[0].mxu0
        %v2775 = vadd.f32 %v2596, %v2774
        %2776 = vmatprep.mubr.f32.mxu0 0.0
        %v2777 = vand.u32 %v1576, 4294901760
        %2778 = vmatmul.mubr.f32.gmra.mrb[0].mxu0 %v2777
        %v2779 = vpop.f32.mrb[0].mxu0
        %v2780 = vadd.f32 %v2601, %v2779
        %v2781 = vpop.f32.mrb[0].mxu0
        %v2782 = vadd.f32 %v2603, %v2781
        %2783 = vdwg.mxu0
        %v2784 = vld [vmem:[%s3] sm:$0xff]
        %v2785 = vld [vmem:[%s3 + $0x8] sm:$0xff]
        %v2786 = vld [vmem:[%s3 + $0x10] sm:$0xff]
        %v2787 = vld [vmem:[%s3 + $0x18] sm:$0xff]
        %v2788 = vld [vmem:[%s3 + $0x20] sm:$0xff]
        %v2789 = vld [vmem:[%s3 + $0x28] sm:$0xff]
        %v2790 = vld [vmem:[%s3 + $0x30] sm:$0xff]
        %v2791 = vld [vmem:[%s3 + $0x38] sm:$0xff]
        %v2792 = vld [vmem:[%s3 + $0x40] sm:$0xff]
        %v2793 = vld [vmem:[%s3 + $0x48] sm:$0xff]
        %v2794 = vld [vmem:[%s3 + $0x50] sm:$0xff]
        %v2795 = vld [vmem:[%s3 + $0x58] sm:$0xff]
        %v2796 = vld [vmem:[%s3 + $0x60] sm:$0xff]
        %v2797 = vld [vmem:[%s3 + $0x68] sm:$0xff]
        %v2798 = vld [vmem:[%s3 + $0x70] sm:$0xff]
        %v2799 = vld [vmem:[%s3 + $0x78] sm:$0xff]
        %v2800 = vlaneseq
        %v2801 = vshrl.u32 %v2800, 7
        %v2802 = vsub.s32 2, %v2801
        %v2803 = vrot.slane %v199, %v2802
        %v2804 = vlaneseq
        %v2805 = vshrl.u32 %v2804, 7
        %v2806 = vsub.s32 6, %v2805
        %v2807 = vrot.slane %v199, %v2806
        %v2808 = vlaneseq
        %v2809 = vshrl.u32 %v2808, 7
        %v2810 = vsub.s32 2, %v2809
        %v2811 = vrot.slane %v2803, %v2810
        %v2812 = vlaneseq
        %v2813 = vshrl.u32 %v2812, 7
        %v2814 = vsub.s32 2, %v2813
        %v2815 = vrot.slane %v2807, %v2814
        %vm2816 = vcmp.eq.s32.totalorder %v217, %v2811
        %vm2817 = vcmp.eq.s32.totalorder %v217, %v2815
        %v2818 = vsel %vm2816, 1.0, 0.0
        %v2819 = vsel %vm2817, 1.0, 0.0
        %v2821 = vsel %vm238, %v2784, 0
        %v2824 = vsel %vm238, %v2785, 0
        %v2827 = vsel %vm238, %v2786, 0
        %v2830 = vsel %vm238, %v2787, 0
        %v2833 = vsel %vm238, %v2788, 0
        %v2836 = vsel %vm238, %v2789, 0
        %v2839 = vsel %vm238, %v2790, 0
        %v2842 = vsel %vm238, %v2791, 0
        %v2845 = vsel %vm238, %v2792, 0
        %v2848 = vsel %vm238, %v2793, 0
        %v2851 = vsel %vm238, %v2794, 0
        %v2854 = vsel %vm238, %v2795, 0
        %v2857 = vsel %vm238, %v2796, 0
        %v2860 = vsel %vm238, %v2797, 0
        %v2863 = vsel %vm238, %v2798, 0
        %v2866 = vsel %vm238, %v2799, 0
        %v2869 = vsel %vm287, %v2818, 0
        %v2872 = vsel %vm287, %v2819, 0
        %v2874 = vand.u32 %v2872, 4294901760
        %2875 = vmatprep.subr.mxu0 %v2874
        %v2876 = vand.u32 %v2869, 4294901760
        %2877 = vmatpush1.msra.mxu0 %v2876
        %2878 = vmatprep.subr.mxu0 0.0
        %2879 = vmatpush1.msra.mxu0 0.0
        %2880 = vmatprep.subr.mxu0 0.0
        %2881 = vmatpush1.msra.mxu0 0.0
        %2882 = vmatprep.subr.mxu0 0.0
        %2883 = vmatpush1.msra.mxu0 0.0
        %2884 = vmatprep.subr.mxu0 0.0
        %2885 = vmatpush1.msra.mxu0 0.0
        %2886 = vmatprep.subr.mxu0 0.0
        %2887 = vmatpush1.msra.mxu0 0.0
        %2888 = vmatprep.subr.mxu0 0.0
        %2889 = vmatpush1.msra.mxu0 0.0
        %2890 = vmatprep.subr.mxu0 0.0
        %2891 = vmatpush1.msra.mxu0 0.0
        %2892 = vmatprep.subr.mxu0 0.0
        %2893 = vmatpush1.msra.mxu0 0.0
        %2894 = vmatprep.subr.mxu0 0.0
        %2895 = vmatpush1.msra.mxu0 0.0
        %2896 = vmatprep.subr.mxu0 0.0
        %2897 = vmatpush1.msra.mxu0 0.0
        %2898 = vmatprep.subr.mxu0 0.0
        %2899 = vmatpush1.msra.mxu0 0.0
        %2900 = vmatprep.subr.mxu0 0.0
        %2901 = vmatpush1.msra.mxu0 0.0
        %2902 = vmatprep.subr.mxu0 0.0
        %2903 = vmatpush1.msra.mxu0 0.0
        %2904 = vmatprep.subr.mxu0 0.0
        %2905 = vmatpush1.msra.mxu0 0.0
        %2906 = vmatprep.subr.mxu0 0.0
        %2907 = vmatpush1.msra.mxu0 0.0
        %2908 = vmatprep.subr.mxu0 0.0
        %2909 = vmatpush1.msra.mxu0 0.0
        %2910 = vmatprep.subr.mxu0 0.0
        %2911 = vmatpush1.msra.mxu0 0.0
        %2912 = vmatprep.subr.mxu0 0.0
        %2913 = vmatpush1.msra.mxu0 0.0
        %2914 = vmatprep.subr.mxu0 0.0
        %2915 = vmatpush1.msra.mxu0 0.0
        %2916 = vmatprep.subr.mxu0 0.0
        %2917 = vmatpush1.msra.mxu0 0.0
        %2918 = vmatprep.subr.mxu0 0.0
        %2919 = vmatpush1.msra.mxu0 0.0
        %2920 = vmatprep.subr.mxu0 0.0
        %2921 = vmatpush1.msra.mxu0 0.0
        %2922 = vmatprep.subr.mxu0 0.0
        %2923 = vmatpush1.msra.mxu0 0.0
        %2924 = vmatprep.subr.mxu0 0.0
        %2925 = vmatpush1.msra.mxu0 0.0
        %2926 = vmatprep.subr.mxu0 0.0
        %2927 = vmatpush1.msra.mxu0 0.0
        %2928 = vmatprep.subr.mxu0 0.0
        %2929 = vmatpush1.msra.mxu0 0.0
        %2930 = vmatprep.subr.mxu0 0.0
        %2931 = vmatpush1.msra.mxu0 0.0
        %2932 = vmatprep.subr.mxu0 0.0
        %2933 = vmatpush1.msra.mxu0 0.0
        %2934 = vmatprep.subr.mxu0 0.0
        %2935 = vmatpush1.msra.mxu0 0.0
        %2936 = vmatprep.subr.mxu0 0.0
        %2937 = vmatpush1.msra.mxu0 0.0
        %2938 = vmatprep.subr.mxu0 0.0
        %2939 = vmatpush1.msra.mxu0 0.0
        %2940 = vmatprep.mubr.f32.mxu0 0.0
        %v2941 = vand.u32 %v2821, 4294901760
        %v2942 = vsub.f32 %v2821, %v2941
        %v2943 = vand.u32 %v2942, 4294901760
        %v2944 = vsub.f32 %v2942, %v2943
        %v2945 = vand.u32 %v2944, 4294901760
        %2946 = vmatmul.mubr.f32.gmra.mrb[0].mxu0 %v2945
        %v2947 = vpop.f32.mrb[0].mxu0
        %v2948 = vadd.f32 0.0, %v2947
        %v2949 = vpop.f32.mrb[0].mxu0
        %v2950 = vadd.f32 0.0, %v2949
        %2951 = vmatprep.mubr.f32.mxu0 0.0
        %v2952 = vand.u32 %v2824, 4294901760
        %v2953 = vsub.f32 %v2824, %v2952
        %v2954 = vand.u32 %v2953, 4294901760
        %v2955 = vsub.f32 %v2953, %v2954
        %v2956 = vand.u32 %v2955, 4294901760
        %2957 = vmatmul.mubr.f32.gmra.mrb[0].mxu0 %v2956
        %v2958 = vpop.f32.mrb[0].mxu0
        %v2959 = vadd.f32 0.0, %v2958
        %v2960 = vpop.f32.mrb[0].mxu0
        %v2961 = vadd.f32 0.0, %v2960
        %2962 = vmatprep.mubr.f32.mxu0 0.0
        %v2963 = vand.u32 %v2827, 4294901760
        %v2964 = vsub.f32 %v2827, %v2963
        %v2965 = vand.u32 %v2964, 4294901760
        %v2966 = vsub.f32 %v2964, %v2965
        %v2967 = vand.u32 %v2966, 4294901760
        %2968 = vmatmul.mubr.f32.gmra.mrb[0].mxu0 %v2967
        %v2969 = vpop.f32.mrb[0].mxu0
        %v2970 = vadd.f32 0.0, %v2969
        %v2971 = vpop.f32.mrb[0].mxu0
        %v2972 = vadd.f32 0.0, %v2971
        %2973 = vmatprep.mubr.f32.mxu0 0.0
        %v2974 = vand.u32 %v2830, 4294901760
        %v2975 = vsub.f32 %v2830, %v2974
        %v2976 = vand.u32 %v2975, 4294901760
        %v2977 = vsub.f32 %v2975, %v2976
        %v2978 = vand.u32 %v2977, 4294901760
        %2979 = vmatmul.mubr.f32.gmra.mrb[0].mxu0 %v2978
        %v2980 = vpop.f32.mrb[0].mxu0
        %v2981 = vadd.f32 0.0, %v2980
        %v2982 = vpop.f32.mrb[0].mxu0
        %v2983 = vadd.f32 0.0, %v2982
        %2984 = vmatprep.mubr.f32.mxu0 0.0
        %v2985 = vand.u32 %v2833, 4294901760
        %v2986 = vsub.f32 %v2833, %v2985
        %v2987 = vand.u32 %v2986, 4294901760
        %v2988 = vsub.f32 %v2986, %v2987
        %v2989 = vand.u32 %v2988, 4294901760
        %2990 = vmatmul.mubr.f32.gmra.mrb[0].mxu0 %v2989
        %v2991 = vpop.f32.mrb[0].mxu0
        %v2992 = vadd.f32 0.0, %v2991
        %v2993 = vpop.f32.mrb[0].mxu0
        %v2994 = vadd.f32 0.0, %v2993
        %2995 = vmatprep.mubr.f32.mxu0 0.0
        %v2996 = vand.u32 %v2836, 4294901760
        %v2997 = vsub.f32 %v2836, %v2996
        %v2998 = vand.u32 %v2997, 4294901760
        %v2999 = vsub.f32 %v2997, %v2998
        %v3000 = vand.u32 %v2999, 4294901760
        %3001 = vmatmul.mubr.f32.gmra.mrb[0].mxu0 %v3000
        %v3002 = vpop.f32.mrb[0].mxu0
        %v3003 = vadd.f32 0.0, %v3002
        %v3004 = vpop.f32.mrb[0].mxu0
        %v3005 = vadd.f32 0.0, %v3004
        %3006 = vmatprep.mubr.f32.mxu0 0.0
        %v3007 = vand.u32 %v2839, 4294901760
        %v3008 = vsub.f32 %v2839, %v3007
        %v3009 = vand.u32 %v3008, 4294901760
        %v3010 = vsub.f32 %v3008, %v3009
        %v3011 = vand.u32 %v3010, 4294901760
        %3012 = vmatmul.mubr.f32.gmra.mrb[0].mxu0 %v3011
        %v3013 = vpop.f32.mrb[0].mxu0
        %v3014 = vadd.f32 0.0, %v3013
        %v3015 = vpop.f32.mrb[0].mxu0
        %v3016 = vadd.f32 0.0, %v3015
        %3017 = vmatprep.mubr.f32.mxu0 0.0
        %v3018 = vand.u32 %v2842, 4294901760
        %v3019 = vsub.f32 %v2842, %v3018
        %v3020 = vand.u32 %v3019, 4294901760
        %v3021 = vsub.f32 %v3019, %v3020
        %v3022 = vand.u32 %v3021, 4294901760
        %3023 = vmatmul.mubr.f32.gmra.mrb[0].mxu0 %v3022
        %v3024 = vpop.f32.mrb[0].mxu0
        %v3025 = vadd.f32 0.0, %v3024
        %v3026 = vpop.f32.mrb[0].mxu0
        %v3027 = vadd.f32 0.0, %v3026
        %3028 = vmatprep.mubr.f32.mxu0 0.0
        %v3029 = vand.u32 %v2845, 4294901760
        %v3030 = vsub.f32 %v2845, %v3029
        %v3031 = vand.u32 %v3030, 4294901760
        %v3032 = vsub.f32 %v3030, %v3031
        %v3033 = vand.u32 %v3032, 4294901760
        %3034 = vmatmul.mubr.f32.gmra.mrb[0].mxu0 %v3033
        %v3035 = vpop.f32.mrb[0].mxu0
        %v3036 = vadd.f32 0.0, %v3035
        %v3037 = vpop.f32.mrb[0].mxu0
        %v3038 = vadd.f32 0.0, %v3037
        %3039 = vmatprep.mubr.f32.mxu0 0.0
        %v3040 = vand.u32 %v2848, 4294901760
        %v3041 = vsub.f32 %v2848, %v3040
        %v3042 = vand.u32 %v3041, 4294901760
        %v3043 = vsub.f32 %v3041, %v3042
        %v3044 = vand.u32 %v3043, 4294901760
        %3045 = vmatmul.mubr.f32.gmra.mrb[0].mxu0 %v3044
        %v3046 = vpop.f32.mrb[0].mxu0
        %v3047 = vadd.f32 0.0, %v3046
        %v3048 = vpop.f32.mrb[0].mxu0
        %v3049 = vadd.f32 0.0, %v3048
        %3050 = vmatprep.mubr.f32.mxu0 0.0
        %v3051 = vand.u32 %v2851, 4294901760
        %v3052 = vsub.f32 %v2851, %v3051
        %v3053 = vand.u32 %v3052, 4294901760
        %v3054 = vsub.f32 %v3052, %v3053
        %v3055 = vand.u32 %v3054, 4294901760
        %3056 = vmatmul.mubr.f32.gmra.mrb[0].mxu0 %v3055
        %v3057 = vpop.f32.mrb[0].mxu0
        %v3058 = vadd.f32 0.0, %v3057
        %v3059 = vpop.f32.mrb[0].mxu0
        %v3060 = vadd.f32 0.0, %v3059
        %3061 = vmatprep.mubr.f32.mxu0 0.0
        %v3062 = vand.u32 %v2854, 4294901760
        %v3063 = vsub.f32 %v2854, %v3062
        %v3064 = vand.u32 %v3063, 4294901760
        %v3065 = vsub.f32 %v3063, %v3064
        %v3066 = vand.u32 %v3065, 4294901760
        %3067 = vmatmul.mubr.f32.gmra.mrb[0].mxu0 %v3066
        %v3068 = vpop.f32.mrb[0].mxu0
        %v3069 = vadd.f32 0.0, %v3068
        %v3070 = vpop.f32.mrb[0].mxu0
        %v3071 = vadd.f32 0.0, %v3070
        %3072 = vmatprep.mubr.f32.mxu0 0.0
        %v3073 = vand.u32 %v2857, 4294901760
        %v3074 = vsub.f32 %v2857, %v3073
        %v3075 = vand.u32 %v3074, 4294901760
        %v3076 = vsub.f32 %v3074, %v3075
        %v3077 = vand.u32 %v3076, 4294901760
        %3078 = vmatmul.mubr.f32.gmra.mrb[0].mxu0 %v3077
        %v3079 = vpop.f32.mrb[0].mxu0
        %v3080 = vadd.f32 0.0, %v3079
        %v3081 = vpop.f32.mrb[0].mxu0
        %v3082 = vadd.f32 0.0, %v3081
        %3083 = vmatprep.mubr.f32.mxu0 0.0
        %v3084 = vand.u32 %v2860, 4294901760
        %v3085 = vsub.f32 %v2860, %v3084
        %v3086 = vand.u32 %v3085, 4294901760
        %v3087 = vsub.f32 %v3085, %v3086
        %v3088 = vand.u32 %v3087, 4294901760
        %3089 = vmatmul.mubr.f32.gmra.mrb[0].mxu0 %v3088
        %v3090 = vpop.f32.mrb[0].mxu0
        %v3091 = vadd.f32 0.0, %v3090
        %v3092 = vpop.f32.mrb[0].mxu0
        %v3093 = vadd.f32 0.0, %v3092
        %3094 = vmatprep.mubr.f32.mxu0 0.0
        %v3095 = vand.u32 %v2863, 4294901760
        %v3096 = vsub.f32 %v2863, %v3095
        %v3097 = vand.u32 %v3096, 4294901760
        %v3098 = vsub.f32 %v3096, %v3097
        %v3099 = vand.u32 %v3098, 4294901760
        %3100 = vmatmul.mubr.f32.gmra.mrb[0].mxu0 %v3099
        %v3101 = vpop.f32.mrb[0].mxu0
        %v3102 = vadd.f32 0.0, %v3101
        %v3103 = vpop.f32.mrb[0].mxu0
        %v3104 = vadd.f32 0.0, %v3103
        %3105 = vmatprep.mubr.f32.mxu0 0.0
        %v3106 = vand.u32 %v2866, 4294901760
        %v3107 = vsub.f32 %v2866, %v3106
        %v3108 = vand.u32 %v3107, 4294901760
        %v3109 = vsub.f32 %v3107, %v3108
        %v3110 = vand.u32 %v3109, 4294901760
        %3111 = vmatmul.mubr.f32.gmra.mrb[0].mxu0 %v3110
        %v3112 = vpop.f32.mrb[0].mxu0
        %v3113 = vadd.f32 0.0, %v3112
        %v3114 = vpop.f32.mrb[0].mxu0
        %v3115 = vadd.f32 0.0, %v3114
        %3116 = vdwg.mxu0
        %v3117 = vand.u32 %v2872, 4294901760
        %v3118 = vsub.f32 %v2872, %v3117
        %v3119 = vand.u32 %v3118, 4294901760
        %v3120 = vsub.f32 %v3118, %v3119
        %v3121 = vand.u32 %v3120, 4294901760
        %3122 = vmatprep.subr.mxu0 %v3121
        %v3123 = vand.u32 %v2869, 4294901760
        %v3124 = vsub.f32 %v2869, %v3123
        %v3125 = vand.u32 %v3124, 4294901760
        %v3126 = vsub.f32 %v3124, %v3125
        %v3127 = vand.u32 %v3126, 4294901760
        %3128 = vmatpush1.msra.mxu0 %v3127
        %3129 = vmatprep.subr.mxu0 0.0
        %3130 = vmatpush1.msra.mxu0 0.0
        %3131 = vmatprep.subr.mxu0 0.0
        %3132 = vmatpush1.msra.mxu0 0.0
        %3133 = vmatprep.subr.mxu0 0.0
        %3134 = vmatpush1.msra.mxu0 0.0
        %3135 = vmatprep.subr.mxu0 0.0
        %3136 = vmatpush1.msra.mxu0 0.0
        %3137 = vmatprep.subr.mxu0 0.0
        %3138 = vmatpush1.msra.mxu0 0.0
        %3139 = vmatprep.subr.mxu0 0.0
        %3140 = vmatpush1.msra.mxu0 0.0
        %3141 = vmatprep.subr.mxu0 0.0
        %3142 = vmatpush1.msra.mxu0 0.0
        %3143 = vmatprep.subr.mxu0 0.0
        %3144 = vmatpush1.msra.mxu0 0.0
        %3145 = vmatprep.subr.mxu0 0.0
        %3146 = vmatpush1.msra.mxu0 0.0
        %3147 = vmatprep.subr.mxu0 0.0
        %3148 = vmatpush1.msra.mxu0 0.0
        %3149 = vmatprep.subr.mxu0 0.0
        %3150 = vmatpush1.msra.mxu0 0.0
        %3151 = vmatprep.subr.mxu0 0.0
        %3152 = vmatpush1.msra.mxu0 0.0
        %3153 = vmatprep.subr.mxu0 0.0
        %3154 = vmatpush1.msra.mxu0 0.0
        %3155 = vmatprep.subr.mxu0 0.0
        %3156 = vmatpush1.msra.mxu0 0.0
        %3157 = vmatprep.subr.mxu0 0.0
        %3158 = vmatpush1.msra.mxu0 0.0
        %3159 = vmatprep.subr.mxu0 0.0
        %3160 = vmatpush1.msra.mxu0 0.0
        %3161 = vmatprep.subr.mxu0 0.0
        %3162 = vmatpush1.msra.mxu0 0.0
        %3163 = vmatprep.subr.mxu0 0.0
        %3164 = vmatpush1.msra.mxu0 0.0
        %3165 = vmatprep.subr.mxu0 0.0
        %3166 = vmatpush1.msra.mxu0 0.0
        %3167 = vmatprep.subr.mxu0 0.0
        %3168 = vmatpush1.msra.mxu0 0.0
        %3169 = vmatprep.subr.mxu0 0.0
        %3170 = vmatpush1.msra.mxu0 0.0
        %3171 = vmatprep.subr.mxu0 0.0
        %3172 = vmatpush1.msra.mxu0 0.0
        %3173 = vmatprep.subr.mxu0 0.0
        %3174 = vmatpush1.msra.mxu0 0.0
        %3175 = vmatprep.subr.mxu0 0.0
        %3176 = vmatpush1.msra.mxu0 0.0
        %3177 = vmatprep.subr.mxu0 0.0
        %3178 = vmatpush1.msra.mxu0 0.0
        %3179 = vmatprep.subr.mxu0 0.0
        %3180 = vmatpush1.msra.mxu0 0.0
        %3181 = vmatprep.subr.mxu0 0.0
        %3182 = vmatpush1.msra.mxu0 0.0
        %3183 = vmatprep.subr.mxu0 0.0
        %3184 = vmatpush1.msra.mxu0 0.0
        %3185 = vmatprep.subr.mxu0 0.0
        %3186 = vmatpush1.msra.mxu0 0.0
        %3187 = vmatprep.subr.mxu0 0.0
        %3188 = vmatpush1.msra.mxu0 0.0
        %3189 = vmatprep.subr.mxu0 0.0
        %3190 = vmatpush1.msra.mxu0 0.0
        %3191 = vmatprep.mubr.f32.mxu0 0.0
        %v3192 = vand.u32 %v2821, 4294901760
        %3193 = vmatmul.mubr.f32.gmra.mrb[0].mxu0 %v3192
        %v3194 = vpop.f32.mrb[0].mxu0
        %v3195 = vadd.f32 %v2948, %v3194
        %v3196 = vpop.f32.mrb[0].mxu0
        %v3197 = vadd.f32 %v2950, %v3196
        %3198 = vmatprep.mubr.f32.mxu0 0.0
        %v3199 = vand.u32 %v2824, 4294901760
        %3200 = vmatmul.mubr.f32.gmra.mrb[0].mxu0 %v3199
        %v3201 = vpop.f32.mrb[0].mxu0
        %v3202 = vadd.f32 %v2959, %v3201
        %v3203 = vpop.f32.mrb[0].mxu0
        %v3204 = vadd.f32 %v2961, %v3203
        %3205 = vmatprep.mubr.f32.mxu0 0.0
        %v3206 = vand.u32 %v2827, 4294901760
        %3207 = vmatmul.mubr.f32.gmra.mrb[0].mxu0 %v3206
        %v3208 = vpop.f32.mrb[0].mxu0
        %v3209 = vadd.f32 %v2970, %v3208
        %v3210 = vpop.f32.mrb[0].mxu0
        %v3211 = vadd.f32 %v2972, %v3210
        %3212 = vmatprep.mubr.f32.mxu0 0.0
        %v3213 = vand.u32 %v2830, 4294901760
        %3214 = vmatmul.mubr.f32.gmra.mrb[0].mxu0 %v3213
        %v3215 = vpop.f32.mrb[0].mxu0
        %v3216 = vadd.f32 %v2981, %v3215
        %v3217 = vpop.f32.mrb[0].mxu0
        %v3218 = vadd.f32 %v2983, %v3217
        %3219 = vmatprep.mubr.f32.mxu0 0.0
        %v3220 = vand.u32 %v2833, 4294901760
        %3221 = vmatmul.mubr.f32.gmra.mrb[0].mxu0 %v3220
        %v3222 = vpop.f32.mrb[0].mxu0
        %v3223 = vadd.f32 %v2992, %v3222
        %v3224 = vpop.f32.mrb[0].mxu0
        %v3225 = vadd.f32 %v2994, %v3224
        %3226 = vmatprep.mubr.f32.mxu0 0.0
        %v3227 = vand.u32 %v2836, 4294901760
        %3228 = vmatmul.mubr.f32.gmra.mrb[0].mxu0 %v3227
        %v3229 = vpop.f32.mrb[0].mxu0
        %v3230 = vadd.f32 %v3003, %v3229
        %v3231 = vpop.f32.mrb[0].mxu0
        %v3232 = vadd.f32 %v3005, %v3231
        %3233 = vmatprep.mubr.f32.mxu0 0.0
        %v3234 = vand.u32 %v2839, 4294901760
        %3235 = vmatmul.mubr.f32.gmra.mrb[0].mxu0 %v3234
        %v3236 = vpop.f32.mrb[0].mxu0
        %v3237 = vadd.f32 %v3014, %v3236
        %v3238 = vpop.f32.mrb[0].mxu0
        %v3239 = vadd.f32 %v3016, %v3238
        %3240 = vmatprep.mubr.f32.mxu0 0.0
        %v3241 = vand.u32 %v2842, 4294901760
        %3242 = vmatmul.mubr.f32.gmra.mrb[0].mxu0 %v3241
        %v3243 = vpop.f32.mrb[0].mxu0
        %v3244 = vadd.f32 %v3025, %v3243
        %v3245 = vpop.f32.mrb[0].mxu0
        %v3246 = vadd.f32 %v3027, %v3245
        %3247 = vmatprep.mubr.f32.mxu0 0.0
        %v3248 = vand.u32 %v2845, 4294901760
        %3249 = vmatmul.mubr.f32.gmra.mrb[0].mxu0 %v3248
        %v3250 = vpop.f32.mrb[0].mxu0
        %v3251 = vadd.f32 %v3036, %v3250
        %v3252 = vpop.f32.mrb[0].mxu0
        %v3253 = vadd.f32 %v3038, %v3252
        %3254 = vmatprep.mubr.f32.mxu0 0.0
        %v3255 = vand.u32 %v2848, 4294901760
        %3256 = vmatmul.mubr.f32.gmra.mrb[0].mxu0 %v3255
        %v3257 = vpop.f32.mrb[0].mxu0
        %v3258 = vadd.f32 %v3047, %v3257
        %v3259 = vpop.f32.mrb[0].mxu0
        %v3260 = vadd.f32 %v3049, %v3259
        %3261 = vmatprep.mubr.f32.mxu0 0.0
        %v3262 = vand.u32 %v2851, 4294901760
        %3263 = vmatmul.mubr.f32.gmra.mrb[0].mxu0 %v3262
        %v3264 = vpop.f32.mrb[0].mxu0
        %v3265 = vadd.f32 %v3058, %v3264
        %v3266 = vpop.f32.mrb[0].mxu0
        %v3267 = vadd.f32 %v3060, %v3266
        %3268 = vmatprep.mubr.f32.mxu0 0.0
        %v3269 = vand.u32 %v2854, 4294901760
        %3270 = vmatmul.mubr.f32.gmra.mrb[0].mxu0 %v3269
        %v3271 = vpop.f32.mrb[0].mxu0
        %v3272 = vadd.f32 %v3069, %v3271
        %v3273 = vpop.f32.mrb[0].mxu0
        %v3274 = vadd.f32 %v3071, %v3273
        %3275 = vmatprep.mubr.f32.mxu0 0.0
        %v3276 = vand.u32 %v2857, 4294901760
        %3277 = vmatmul.mubr.f32.gmra.mrb[0].mxu0 %v3276
        %v3278 = vpop.f32.mrb[0].mxu0
        %v3279 = vadd.f32 %v3080, %v3278
        %v3280 = vpop.f32.mrb[0].mxu0
        %v3281 = vadd.f32 %v3082, %v3280
        %3282 = vmatprep.mubr.f32.mxu0 0.0
        %v3283 = vand.u32 %v2860, 4294901760
        %3284 = vmatmul.mubr.f32.gmra.mrb[0].mxu0 %v3283
        %v3285 = vpop.f32.mrb[0].mxu0
        %v3286 = vadd.f32 %v3091, %v3285
        %v3287 = vpop.f32.mrb[0].mxu0
        %v3288 = vadd.f32 %v3093, %v3287
        %3289 = vmatprep.mubr.f32.mxu0 0.0
        %v3290 = vand.u32 %v2863, 4294901760
        %3291 = vmatmul.mubr.f32.gmra.mrb[0].mxu0 %v3290
        %v3292 = vpop.f32.mrb[0].mxu0
        %v3293 = vadd.f32 %v3102, %v3292
        %v3294 = vpop.f32.mrb[0].mxu0
        %v3295 = vadd.f32 %v3104, %v3294
        %3296 = vmatprep.mubr.f32.mxu0 0.0
        %v3297 = vand.u32 %v2866, 4294901760
        %3298 = vmatmul.mubr.f32.gmra.mrb[0].mxu0 %v3297
        %v3299 = vpop.f32.mrb[0].mxu0
        %v3300 = vadd.f32 %v3113, %v3299
        %v3301 = vpop.f32.mrb[0].mxu0
        %v3302 = vadd.f32 %v3115, %v3301
        %3303 = vdwg.mxu0
        %v3304 = vand.u32 %v2872, 4294901760
        %v3305 = vsub.f32 %v2872, %v3304
        %3306 = vmatprep.subr.mxu0 %v3305
        %v3307 = vand.u32 %v2869, 4294901760
        %v3308 = vsub.f32 %v2869, %v3307
        %3309 = vmatpush1.msra.mxu0 %v3308
        %3310 = vmatprep.subr.mxu0 0.0
        %3311 = vmatpush1.msra.mxu0 0.0
        %3312 = vmatprep.subr.mxu0 0.0
        %3313 = vmatpush1.msra.mxu0 0.0
        %3314 = vmatprep.subr.mxu0 0.0
        %3315 = vmatpush1.msra.mxu0 0.0
        %3316 = vmatprep.subr.mxu0 0.0
        %3317 = vmatpush1.msra.mxu0 0.0
        %3318 = vmatprep.subr.mxu0 0.0
        %3319 = vmatpush1.msra.mxu0 0.0
        %3320 = vmatprep.subr.mxu0 0.0
        %3321 = vmatpush1.msra.mxu0 0.0
        %3322 = vmatprep.subr.mxu0 0.0
        %3323 = vmatpush1.msra.mxu0 0.0
        %3324 = vmatprep.subr.mxu0 0.0
        %3325 = vmatpush1.msra.mxu0 0.0
        %3326 = vmatprep.subr.mxu0 0.0
        %3327 = vmatpush1.msra.mxu0 0.0
        %3328 = vmatprep.subr.mxu0 0.0
        %3329 = vmatpush1.msra.mxu0 0.0
        %3330 = vmatprep.subr.mxu0 0.0
        %3331 = vmatpush1.msra.mxu0 0.0
        %3332 = vmatprep.subr.mxu0 0.0
        %3333 = vmatpush1.msra.mxu0 0.0
        %3334 = vmatprep.subr.mxu0 0.0
        %3335 = vmatpush1.msra.mxu0 0.0
        %3336 = vmatprep.subr.mxu0 0.0
        %3337 = vmatpush1.msra.mxu0 0.0
        %3338 = vmatprep.subr.mxu0 0.0
        %3339 = vmatpush1.msra.mxu0 0.0
        %3340 = vmatprep.subr.mxu0 0.0
        %3341 = vmatpush1.msra.mxu0 0.0
        %3342 = vmatprep.subr.mxu0 0.0
        %3343 = vmatpush1.msra.mxu0 0.0
        %3344 = vmatprep.subr.mxu0 0.0
        %3345 = vmatpush1.msra.mxu0 0.0
        %3346 = vmatprep.subr.mxu0 0.0
        %3347 = vmatpush1.msra.mxu0 0.0
        %3348 = vmatprep.subr.mxu0 0.0
        %3349 = vmatpush1.msra.mxu0 0.0
        %3350 = vmatprep.subr.mxu0 0.0
        %3351 = vmatpush1.msra.mxu0 0.0
        %3352 = vmatprep.subr.mxu0 0.0
        %3353 = vmatpush1.msra.mxu0 0.0
        %3354 = vmatprep.subr.mxu0 0.0
        %3355 = vmatpush1.msra.mxu0 0.0
        %3356 = vmatprep.subr.mxu0 0.0
        %3357 = vmatpush1.msra.mxu0 0.0
        %3358 = vmatprep.subr.mxu0 0.0
        %3359 = vmatpush1.msra.mxu0 0.0
        %3360 = vmatprep.subr.mxu0 0.0
        %3361 = vmatpush1.msra.mxu0 0.0
        %3362 = vmatprep.subr.mxu0 0.0
        %3363 = vmatpush1.msra.mxu0 0.0
        %3364 = vmatprep.subr.mxu0 0.0
        %3365 = vmatpush1.msra.mxu0 0.0
        %3366 = vmatprep.subr.mxu0 0.0
        %3367 = vmatpush1.msra.mxu0 0.0
        %3368 = vmatprep.subr.mxu0 0.0
        %3369 = vmatpush1.msra.mxu0 0.0
        %3370 = vmatprep.subr.mxu0 0.0
        %3371 = vmatpush1.msra.mxu0 0.0
        %3372 = vmatprep.mubr.f32.mxu0 0.0
        %v3373 = vand.u32 %v2821, 4294901760
        %v3374 = vsub.f32 %v2821, %v3373
        %3375 = vmatmul.mubr.f32.gmra.mrb[0].mxu0 %v3374
        %v3376 = vpop.f32.mrb[0].mxu0
        %v3377 = vadd.f32 %v3195, %v3376
        %v3378 = vpop.f32.mrb[0].mxu0
        %v3379 = vadd.f32 %v3197, %v3378
        %3380 = vmatprep.mubr.f32.mxu0 0.0
        %v3381 = vand.u32 %v2824, 4294901760
        %v3382 = vsub.f32 %v2824, %v3381
        %3383 = vmatmul.mubr.f32.gmra.mrb[0].mxu0 %v3382
        %v3384 = vpop.f32.mrb[0].mxu0
        %v3385 = vadd.f32 %v3202, %v3384
        %v3386 = vpop.f32.mrb[0].mxu0
        %v3387 = vadd.f32 %v3204, %v3386
        %3388 = vmatprep.mubr.f32.mxu0 0.0
        %v3389 = vand.u32 %v2827, 4294901760
        %v3390 = vsub.f32 %v2827, %v3389
        %3391 = vmatmul.mubr.f32.gmra.mrb[0].mxu0 %v3390
        %v3392 = vpop.f32.mrb[0].mxu0
        %v3393 = vadd.f32 %v3209, %v3392
        %v3394 = vpop.f32.mrb[0].mxu0
        %v3395 = vadd.f32 %v3211, %v3394
        %3396 = vmatprep.mubr.f32.mxu0 0.0
        %v3397 = vand.u32 %v2830, 4294901760
        %v3398 = vsub.f32 %v2830, %v3397
        %3399 = vmatmul.mubr.f32.gmra.mrb[0].mxu0 %v3398
        %v3400 = vpop.f32.mrb[0].mxu0
        %v3401 = vadd.f32 %v3216, %v3400
        %v3402 = vpop.f32.mrb[0].mxu0
        %v3403 = vadd.f32 %v3218, %v3402
        %3404 = vmatprep.mubr.f32.mxu0 0.0
        %v3405 = vand.u32 %v2833, 4294901760
        %v3406 = vsub.f32 %v2833, %v3405
        %3407 = vmatmul.mubr.f32.gmra.mrb[0].mxu0 %v3406
        %v3408 = vpop.f32.mrb[0].mxu0
        %v3409 = vadd.f32 %v3223, %v3408
        %v3410 = vpop.f32.mrb[0].mxu0
        %v3411 = vadd.f32 %v3225, %v3410
        %3412 = vmatprep.mubr.f32.mxu0 0.0
        %v3413 = vand.u32 %v2836, 4294901760
        %v3414 = vsub.f32 %v2836, %v3413
        %3415 = vmatmul.mubr.f32.gmra.mrb[0].mxu0 %v3414
        %v3416 = vpop.f32.mrb[0].mxu0
        %v3417 = vadd.f32 %v3230, %v3416
        %v3418 = vpop.f32.mrb[0].mxu0
        %v3419 = vadd.f32 %v3232, %v3418
        %3420 = vmatprep.mubr.f32.mxu0 0.0
        %v3421 = vand.u32 %v2839, 4294901760
        %v3422 = vsub.f32 %v2839, %v3421
        %3423 = vmatmul.mubr.f32.gmra.mrb[0].mxu0 %v3422
        %v3424 = vpop.f32.mrb[0].mxu0
        %v3425 = vadd.f32 %v3237, %v3424
        %v3426 = vpop.f32.mrb[0].mxu0
        %v3427 = vadd.f32 %v3239, %v3426
        %3428 = vmatprep.mubr.f32.mxu0 0.0
        %v3429 = vand.u32 %v2842, 4294901760
        %v3430 = vsub.f32 %v2842, %v3429
        %3431 = vmatmul.mubr.f32.gmra.mrb[0].mxu0 %v3430
        %v3432 = vpop.f32.mrb[0].mxu0
        %v3433 = vadd.f32 %v3244, %v3432
        %v3434 = vpop.f32.mrb[0].mxu0
        %v3435 = vadd.f32 %v3246, %v3434
        %3436 = vmatprep.mubr.f32.mxu0 0.0
        %v3437 = vand.u32 %v2845, 4294901760
        %v3438 = vsub.f32 %v2845, %v3437
        %3439 = vmatmul.mubr.f32.gmra.mrb[0].mxu0 %v3438
        %v3440 = vpop.f32.mrb[0].mxu0
        %v3441 = vadd.f32 %v3251, %v3440
        %v3442 = vpop.f32.mrb[0].mxu0
        %v3443 = vadd.f32 %v3253, %v3442
        %3444 = vmatprep.mubr.f32.mxu0 0.0
        %v3445 = vand.u32 %v2848, 4294901760
        %v3446 = vsub.f32 %v2848, %v3445
        %3447 = vmatmul.mubr.f32.gmra.mrb[0].mxu0 %v3446
        %v3448 = vpop.f32.mrb[0].mxu0
        %v3449 = vadd.f32 %v3258, %v3448
        %v3450 = vpop.f32.mrb[0].mxu0
        %v3451 = vadd.f32 %v3260, %v3450
        %3452 = vmatprep.mubr.f32.mxu0 0.0
        %v3453 = vand.u32 %v2851, 4294901760
        %v3454 = vsub.f32 %v2851, %v3453
        %3455 = vmatmul.mubr.f32.gmra.mrb[0].mxu0 %v3454
        %v3456 = vpop.f32.mrb[0].mxu0
        %v3457 = vadd.f32 %v3265, %v3456
        %v3458 = vpop.f32.mrb[0].mxu0
        %v3459 = vadd.f32 %v3267, %v3458
        %3460 = vmatprep.mubr.f32.mxu0 0.0
        %v3461 = vand.u32 %v2854, 4294901760
        %v3462 = vsub.f32 %v2854, %v3461
        %3463 = vmatmul.mubr.f32.gmra.mrb[0].mxu0 %v3462
        %v3464 = vpop.f32.mrb[0].mxu0
        %v3465 = vadd.f32 %v3272, %v3464
        %v3466 = vpop.f32.mrb[0].mxu0
        %v3467 = vadd.f32 %v3274, %v3466
        %3468 = vmatprep.mubr.f32.mxu0 0.0
        %v3469 = vand.u32 %v2857, 4294901760
        %v3470 = vsub.f32 %v2857, %v3469
        %3471 = vmatmul.mubr.f32.gmra.mrb[0].mxu0 %v3470
        %v3472 = vpop.f32.mrb[0].mxu0
        %v3473 = vadd.f32 %v3279, %v3472
        %v3474 = vpop.f32.mrb[0].mxu0
        %v3475 = vadd.f32 %v3281, %v3474
        %3476 = vmatprep.mubr.f32.mxu0 0.0
        %v3477 = vand.u32 %v2860, 4294901760
        %v3478 = vsub.f32 %v2860, %v3477
        %3479 = vmatmul.mubr.f32.gmra.mrb[0].mxu0 %v3478
        %v3480 = vpop.f32.mrb[0].mxu0
        %v3481 = vadd.f32 %v3286, %v3480
        %v3482 = vpop.f32.mrb[0].mxu0
        %v3483 = vadd.f32 %v3288, %v3482
        %3484 = vmatprep.mubr.f32.mxu0 0.0
        %v3485 = vand.u32 %v2863, 4294901760
        %v3486 = vsub.f32 %v2863, %v3485
        %3487 = vmatmul.mubr.f32.gmra.mrb[0].mxu0 %v3486
        %v3488 = vpop.f32.mrb[0].mxu0
        %v3489 = vadd.f32 %v3293, %v3488
        %v3490 = vpop.f32.mrb[0].mxu0
        %v3491 = vadd.f32 %v3295, %v3490
        %3492 = vmatprep.mubr.f32.mxu0 0.0
        %v3493 = vand.u32 %v2866, 4294901760
        %v3494 = vsub.f32 %v2866, %v3493
        %3495 = vmatmul.mubr.f32.gmra.mrb[0].mxu0 %v3494
        %v3496 = vpop.f32.mrb[0].mxu0
        %v3497 = vadd.f32 %v3300, %v3496
        %v3498 = vpop.f32.mrb[0].mxu0
        %v3499 = vadd.f32 %v3302, %v3498
        %3500 = vdwg.mxu0
        %v3501 = vand.u32 %v2872, 4294901760
        %3502 = vmatprep.subr.mxu0 %v3501
        %v3503 = vand.u32 %v2869, 4294901760
        %3504 = vmatpush1.msra.mxu0 %v3503
        %3505 = vmatprep.subr.mxu0 0.0
        %3506 = vmatpush1.msra.mxu0 0.0
        %3507 = vmatprep.subr.mxu0 0.0
        %3508 = vmatpush1.msra.mxu0 0.0
        %3509 = vmatprep.subr.mxu0 0.0
        %3510 = vmatpush1.msra.mxu0 0.0
        %3511 = vmatprep.subr.mxu0 0.0
        %3512 = vmatpush1.msra.mxu0 0.0
        %3513 = vmatprep.subr.mxu0 0.0
        %3514 = vmatpush1.msra.mxu0 0.0
        %3515 = vmatprep.subr.mxu0 0.0
        %3516 = vmatpush1.msra.mxu0 0.0
        %3517 = vmatprep.subr.mxu0 0.0
        %3518 = vmatpush1.msra.mxu0 0.0
        %3519 = vmatprep.subr.mxu0 0.0
        %3520 = vmatpush1.msra.mxu0 0.0
        %3521 = vmatprep.subr.mxu0 0.0
        %3522 = vmatpush1.msra.mxu0 0.0
        %3523 = vmatprep.subr.mxu0 0.0
        %3524 = vmatpush1.msra.mxu0 0.0
        %3525 = vmatprep.subr.mxu0 0.0
        %3526 = vmatpush1.msra.mxu0 0.0
        %3527 = vmatprep.subr.mxu0 0.0
        %3528 = vmatpush1.msra.mxu0 0.0
        %3529 = vmatprep.subr.mxu0 0.0
        %3530 = vmatpush1.msra.mxu0 0.0
        %3531 = vmatprep.subr.mxu0 0.0
        %3532 = vmatpush1.msra.mxu0 0.0
        %3533 = vmatprep.subr.mxu0 0.0
        %3534 = vmatpush1.msra.mxu0 0.0
        %3535 = vmatprep.subr.mxu0 0.0
        %3536 = vmatpush1.msra.mxu0 0.0
        %3537 = vmatprep.subr.mxu0 0.0
        %3538 = vmatpush1.msra.mxu0 0.0
        %3539 = vmatprep.subr.mxu0 0.0
        %3540 = vmatpush1.msra.mxu0 0.0
        %3541 = vmatprep.subr.mxu0 0.0
        %3542 = vmatpush1.msra.mxu0 0.0
        %3543 = vmatprep.subr.mxu0 0.0
        %3544 = vmatpush1.msra.mxu0 0.0
        %3545 = vmatprep.subr.mxu0 0.0
        %3546 = vmatpush1.msra.mxu0 0.0
        %3547 = vmatprep.subr.mxu0 0.0
        %3548 = vmatpush1.msra.mxu0 0.0
        %3549 = vmatprep.subr.mxu0 0.0
        %3550 = vmatpush1.msra.mxu0 0.0
        %3551 = vmatprep.subr.mxu0 0.0
        %3552 = vmatpush1.msra.mxu0 0.0
        %3553 = vmatprep.subr.mxu0 0.0
        %3554 = vmatpush1.msra.mxu0 0.0
        %3555 = vmatprep.subr.mxu0 0.0
        %3556 = vmatpush1.msra.mxu0 0.0
        %3557 = vmatprep.subr.mxu0 0.0
        %3558 = vmatpush1.msra.mxu0 0.0
        %3559 = vmatprep.subr.mxu0 0.0
        %3560 = vmatpush1.msra.mxu0 0.0
        %3561 = vmatprep.subr.mxu0 0.0
        %3562 = vmatpush1.msra.mxu0 0.0
        %3563 = vmatprep.subr.mxu0 0.0
        %3564 = vmatpush1.msra.mxu0 0.0
        %3565 = vmatprep.subr.mxu0 0.0
        %3566 = vmatpush1.msra.mxu0 0.0
        %3567 = vmatprep.mubr.f32.mxu0 0.0
        %v3568 = vand.u32 %v2821, 4294901760
        %v3569 = vsub.f32 %v2821, %v3568
        %v3570 = vand.u32 %v3569, 4294901760
        %3571 = vmatmul.mubr.f32.gmra.mrb[0].mxu0 %v3570
        %v3572 = vpop.f32.mrb[0].mxu0
        %v3573 = vadd.f32 %v3377, %v3572
        %v3574 = vpop.f32.mrb[0].mxu0
        %v3575 = vadd.f32 %v3379, %v3574
        %3576 = vmatprep.mubr.f32.mxu0 0.0
        %v3577 = vand.u32 %v2824, 4294901760
        %v3578 = vsub.f32 %v2824, %v3577
        %v3579 = vand.u32 %v3578, 4294901760
        %3580 = vmatmul.mubr.f32.gmra.mrb[0].mxu0 %v3579
        %v3581 = vpop.f32.mrb[0].mxu0
        %v3582 = vadd.f32 %v3385, %v3581
        %v3583 = vpop.f32.mrb[0].mxu0
        %v3584 = vadd.f32 %v3387, %v3583
        %3585 = vmatprep.mubr.f32.mxu0 0.0
        %v3586 = vand.u32 %v2827, 4294901760
        %v3587 = vsub.f32 %v2827, %v3586
        %v3588 = vand.u32 %v3587, 4294901760
        %3589 = vmatmul.mubr.f32.gmra.mrb[0].mxu0 %v3588
        %v3590 = vpop.f32.mrb[0].mxu0
        %v3591 = vadd.f32 %v3393, %v3590
        %v3592 = vpop.f32.mrb[0].mxu0
        %v3593 = vadd.f32 %v3395, %v3592
        %3594 = vmatprep.mubr.f32.mxu0 0.0
        %v3595 = vand.u32 %v2830, 4294901760
        %v3596 = vsub.f32 %v2830, %v3595
        %v3597 = vand.u32 %v3596, 4294901760
        %3598 = vmatmul.mubr.f32.gmra.mrb[0].mxu0 %v3597
        %v3599 = vpop.f32.mrb[0].mxu0
        %v3600 = vadd.f32 %v3401, %v3599
        %v3601 = vpop.f32.mrb[0].mxu0
        %v3602 = vadd.f32 %v3403, %v3601
        %3603 = vmatprep.mubr.f32.mxu0 0.0
        %v3604 = vand.u32 %v2833, 4294901760
        %v3605 = vsub.f32 %v2833, %v3604
        %v3606 = vand.u32 %v3605, 4294901760
        %3607 = vmatmul.mubr.f32.gmra.mrb[0].mxu0 %v3606
        %v3608 = vpop.f32.mrb[0].mxu0
        %v3609 = vadd.f32 %v3409, %v3608
        %v3610 = vpop.f32.mrb[0].mxu0
        %v3611 = vadd.f32 %v3411, %v3610
        %3612 = vmatprep.mubr.f32.mxu0 0.0
        %v3613 = vand.u32 %v2836, 4294901760
        %v3614 = vsub.f32 %v2836, %v3613
        %v3615 = vand.u32 %v3614, 4294901760
        %3616 = vmatmul.mubr.f32.gmra.mrb[0].mxu0 %v3615
        %v3617 = vpop.f32.mrb[0].mxu0
        %v3618 = vadd.f32 %v3417, %v3617
        %v3619 = vpop.f32.mrb[0].mxu0
        %v3620 = vadd.f32 %v3419, %v3619
        %3621 = vmatprep.mubr.f32.mxu0 0.0
        %v3622 = vand.u32 %v2839, 4294901760
        %v3623 = vsub.f32 %v2839, %v3622
        %v3624 = vand.u32 %v3623, 4294901760
        %3625 = vmatmul.mubr.f32.gmra.mrb[0].mxu0 %v3624
        %v3626 = vpop.f32.mrb[0].mxu0
        %v3627 = vadd.f32 %v3425, %v3626
        %v3628 = vpop.f32.mrb[0].mxu0
        %v3629 = vadd.f32 %v3427, %v3628
        %3630 = vmatprep.mubr.f32.mxu0 0.0
        %v3631 = vand.u32 %v2842, 4294901760
        %v3632 = vsub.f32 %v2842, %v3631
        %v3633 = vand.u32 %v3632, 4294901760
        %3634 = vmatmul.mubr.f32.gmra.mrb[0].mxu0 %v3633
        %v3635 = vpop.f32.mrb[0].mxu0
        %v3636 = vadd.f32 %v3433, %v3635
        %v3637 = vpop.f32.mrb[0].mxu0
        %v3638 = vadd.f32 %v3435, %v3637
        %3639 = vmatprep.mubr.f32.mxu0 0.0
        %v3640 = vand.u32 %v2845, 4294901760
        %v3641 = vsub.f32 %v2845, %v3640
        %v3642 = vand.u32 %v3641, 4294901760
        %3643 = vmatmul.mubr.f32.gmra.mrb[0].mxu0 %v3642
        %v3644 = vpop.f32.mrb[0].mxu0
        %v3645 = vadd.f32 %v3441, %v3644
        %v3646 = vpop.f32.mrb[0].mxu0
        %v3647 = vadd.f32 %v3443, %v3646
        %3648 = vmatprep.mubr.f32.mxu0 0.0
        %v3649 = vand.u32 %v2848, 4294901760
        %v3650 = vsub.f32 %v2848, %v3649
        %v3651 = vand.u32 %v3650, 4294901760
        %3652 = vmatmul.mubr.f32.gmra.mrb[0].mxu0 %v3651
        %v3653 = vpop.f32.mrb[0].mxu0
        %v3654 = vadd.f32 %v3449, %v3653
        %v3655 = vpop.f32.mrb[0].mxu0
        %v3656 = vadd.f32 %v3451, %v3655
        %3657 = vmatprep.mubr.f32.mxu0 0.0
        %v3658 = vand.u32 %v2851, 4294901760
        %v3659 = vsub.f32 %v2851, %v3658
        %v3660 = vand.u32 %v3659, 4294901760
        %3661 = vmatmul.mubr.f32.gmra.mrb[0].mxu0 %v3660
        %v3662 = vpop.f32.mrb[0].mxu0
        %v3663 = vadd.f32 %v3457, %v3662
        %v3664 = vpop.f32.mrb[0].mxu0
        %v3665 = vadd.f32 %v3459, %v3664
        %3666 = vmatprep.mubr.f32.mxu0 0.0
        %v3667 = vand.u32 %v2854, 4294901760
        %v3668 = vsub.f32 %v2854, %v3667
        %v3669 = vand.u32 %v3668, 4294901760
        %3670 = vmatmul.mubr.f32.gmra.mrb[0].mxu0 %v3669
        %v3671 = vpop.f32.mrb[0].mxu0
        %v3672 = vadd.f32 %v3465, %v3671
        %v3673 = vpop.f32.mrb[0].mxu0
        %v3674 = vadd.f32 %v3467, %v3673
        %3675 = vmatprep.mubr.f32.mxu0 0.0
        %v3676 = vand.u32 %v2857, 4294901760
        %v3677 = vsub.f32 %v2857, %v3676
        %v3678 = vand.u32 %v3677, 4294901760
        %3679 = vmatmul.mubr.f32.gmra.mrb[0].mxu0 %v3678
        %v3680 = vpop.f32.mrb[0].mxu0
        %v3681 = vadd.f32 %v3473, %v3680
        %v3682 = vpop.f32.mrb[0].mxu0
        %v3683 = vadd.f32 %v3475, %v3682
        %3684 = vmatprep.mubr.f32.mxu0 0.0
        %v3685 = vand.u32 %v2860, 4294901760
        %v3686 = vsub.f32 %v2860, %v3685
        %v3687 = vand.u32 %v3686, 4294901760
        %3688 = vmatmul.mubr.f32.gmra.mrb[0].mxu0 %v3687
        %v3689 = vpop.f32.mrb[0].mxu0
        %v3690 = vadd.f32 %v3481, %v3689
        %v3691 = vpop.f32.mrb[0].mxu0
        %v3692 = vadd.f32 %v3483, %v3691
        %3693 = vmatprep.mubr.f32.mxu0 0.0
        %v3694 = vand.u32 %v2863, 4294901760
        %v3695 = vsub.f32 %v2863, %v3694
        %v3696 = vand.u32 %v3695, 4294901760
        %3697 = vmatmul.mubr.f32.gmra.mrb[0].mxu0 %v3696
        %v3698 = vpop.f32.mrb[0].mxu0
        %v3699 = vadd.f32 %v3489, %v3698
        %v3700 = vpop.f32.mrb[0].mxu0
        %v3701 = vadd.f32 %v3491, %v3700
        %3702 = vmatprep.mubr.f32.mxu0 0.0
        %v3703 = vand.u32 %v2866, 4294901760
        %v3704 = vsub.f32 %v2866, %v3703
        %v3705 = vand.u32 %v3704, 4294901760
        %3706 = vmatmul.mubr.f32.gmra.mrb[0].mxu0 %v3705
        %v3707 = vpop.f32.mrb[0].mxu0
        %v3708 = vadd.f32 %v3497, %v3707
        %v3709 = vpop.f32.mrb[0].mxu0
        %v3710 = vadd.f32 %v3499, %v3709
        %3711 = vdwg.mxu0
        %v3712 = vand.u32 %v2872, 4294901760
        %v3713 = vsub.f32 %v2872, %v3712
        %v3714 = vand.u32 %v3713, 4294901760
        %3715 = vmatprep.subr.mxu0 %v3714
        %v3716 = vand.u32 %v2869, 4294901760
        %v3717 = vsub.f32 %v2869, %v3716
        %v3718 = vand.u32 %v3717, 4294901760
        %3719 = vmatpush1.msra.mxu0 %v3718
        %3720 = vmatprep.subr.mxu0 0.0
        %3721 = vmatpush1.msra.mxu0 0.0
        %3722 = vmatprep.subr.mxu0 0.0
        %3723 = vmatpush1.msra.mxu0 0.0
        %3724 = vmatprep.subr.mxu0 0.0
        %3725 = vmatpush1.msra.mxu0 0.0
        %3726 = vmatprep.subr.mxu0 0.0
        %3727 = vmatpush1.msra.mxu0 0.0
        %3728 = vmatprep.subr.mxu0 0.0
        %3729 = vmatpush1.msra.mxu0 0.0
        %3730 = vmatprep.subr.mxu0 0.0
        %3731 = vmatpush1.msra.mxu0 0.0
        %3732 = vmatprep.subr.mxu0 0.0
        %3733 = vmatpush1.msra.mxu0 0.0
        %3734 = vmatprep.subr.mxu0 0.0
        %3735 = vmatpush1.msra.mxu0 0.0
        %3736 = vmatprep.subr.mxu0 0.0
        %3737 = vmatpush1.msra.mxu0 0.0
        %3738 = vmatprep.subr.mxu0 0.0
        %3739 = vmatpush1.msra.mxu0 0.0
        %3740 = vmatprep.subr.mxu0 0.0
        %3741 = vmatpush1.msra.mxu0 0.0
        %3742 = vmatprep.subr.mxu0 0.0
        %3743 = vmatpush1.msra.mxu0 0.0
        %3744 = vmatprep.subr.mxu0 0.0
        %3745 = vmatpush1.msra.mxu0 0.0
        %3746 = vmatprep.subr.mxu0 0.0
        %3747 = vmatpush1.msra.mxu0 0.0
        %3748 = vmatprep.subr.mxu0 0.0
        %3749 = vmatpush1.msra.mxu0 0.0
        %3750 = vmatprep.subr.mxu0 0.0
        %3751 = vmatpush1.msra.mxu0 0.0
        %3752 = vmatprep.subr.mxu0 0.0
        %3753 = vmatpush1.msra.mxu0 0.0
        %3754 = vmatprep.subr.mxu0 0.0
        %3755 = vmatpush1.msra.mxu0 0.0
        %3756 = vmatprep.subr.mxu0 0.0
        %3757 = vmatpush1.msra.mxu0 0.0
        %3758 = vmatprep.subr.mxu0 0.0
        %3759 = vmatpush1.msra.mxu0 0.0
        %3760 = vmatprep.subr.mxu0 0.0
        %3761 = vmatpush1.msra.mxu0 0.0
        %3762 = vmatprep.subr.mxu0 0.0
        %3763 = vmatpush1.msra.mxu0 0.0
        %3764 = vmatprep.subr.mxu0 0.0
        %3765 = vmatpush1.msra.mxu0 0.0
        %3766 = vmatprep.subr.mxu0 0.0
        %3767 = vmatpush1.msra.mxu0 0.0
        %3768 = vmatprep.subr.mxu0 0.0
        %3769 = vmatpush1.msra.mxu0 0.0
        %3770 = vmatprep.subr.mxu0 0.0
        %3771 = vmatpush1.msra.mxu0 0.0
        %3772 = vmatprep.subr.mxu0 0.0
        %3773 = vmatpush1.msra.mxu0 0.0
        %3774 = vmatprep.subr.mxu0 0.0
        %3775 = vmatpush1.msra.mxu0 0.0
        %3776 = vmatprep.subr.mxu0 0.0
        %3777 = vmatpush1.msra.mxu0 0.0
        %3778 = vmatprep.subr.mxu0 0.0
        %3779 = vmatpush1.msra.mxu0 0.0
        %3780 = vmatprep.subr.mxu0 0.0
        %3781 = vmatpush1.msra.mxu0 0.0
        %3782 = vmatprep.mubr.f32.mxu0 0.0
        %v3783 = vand.u32 %v2821, 4294901760
        %3784 = vmatmul.mubr.f32.gmra.mrb[0].mxu0 %v3783
        %v3785 = vpop.f32.mrb[0].mxu0
        %v3786 = vadd.f32 %v3573, %v3785
        %v3787 = vpop.f32.mrb[0].mxu0
        %v3788 = vadd.f32 %v3575, %v3787
        %3789 = vmatprep.mubr.f32.mxu0 0.0
        %v3790 = vand.u32 %v2824, 4294901760
        %3791 = vmatmul.mubr.f32.gmra.mrb[0].mxu0 %v3790
        %v3792 = vpop.f32.mrb[0].mxu0
        %v3793 = vadd.f32 %v3582, %v3792
        %v3794 = vpop.f32.mrb[0].mxu0
        %v3795 = vadd.f32 %v3584, %v3794
        %3796 = vmatprep.mubr.f32.mxu0 0.0
        %v3797 = vand.u32 %v2827, 4294901760
        %3798 = vmatmul.mubr.f32.gmra.mrb[0].mxu0 %v3797
        %v3799 = vpop.f32.mrb[0].mxu0
        %v3800 = vadd.f32 %v3591, %v3799
        %v3801 = vpop.f32.mrb[0].mxu0
        %v3802 = vadd.f32 %v3593, %v3801
        %3803 = vmatprep.mubr.f32.mxu0 0.0
        %v3804 = vand.u32 %v2830, 4294901760
        %3805 = vmatmul.mubr.f32.gmra.mrb[0].mxu0 %v3804
        %v3806 = vpop.f32.mrb[0].mxu0
        %v3807 = vadd.f32 %v3600, %v3806
        %v3808 = vpop.f32.mrb[0].mxu0
        %v3809 = vadd.f32 %v3602, %v3808
        %3810 = vmatprep.mubr.f32.mxu0 0.0
        %v3811 = vand.u32 %v2833, 4294901760
        %3812 = vmatmul.mubr.f32.gmra.mrb[0].mxu0 %v3811
        %v3813 = vpop.f32.mrb[0].mxu0
        %v3814 = vadd.f32 %v3609, %v3813
        %v3815 = vpop.f32.mrb[0].mxu0
        %v3816 = vadd.f32 %v3611, %v3815
        %3817 = vmatprep.mubr.f32.mxu0 0.0
        %v3818 = vand.u32 %v2836, 4294901760
        %3819 = vmatmul.mubr.f32.gmra.mrb[0].mxu0 %v3818
        %v3820 = vpop.f32.mrb[0].mxu0
        %v3821 = vadd.f32 %v3618, %v3820
        %v3822 = vpop.f32.mrb[0].mxu0
        %v3823 = vadd.f32 %v3620, %v3822
        %3824 = vmatprep.mubr.f32.mxu0 0.0
        %v3825 = vand.u32 %v2839, 4294901760
        %3826 = vmatmul.mubr.f32.gmra.mrb[0].mxu0 %v3825
        %v3827 = vpop.f32.mrb[0].mxu0
        %v3828 = vadd.f32 %v3627, %v3827
        %v3829 = vpop.f32.mrb[0].mxu0
        %v3830 = vadd.f32 %v3629, %v3829
        %3831 = vmatprep.mubr.f32.mxu0 0.0
        %v3832 = vand.u32 %v2842, 4294901760
        %3833 = vmatmul.mubr.f32.gmra.mrb[0].mxu0 %v3832
        %v3834 = vpop.f32.mrb[0].mxu0
        %v3835 = vadd.f32 %v3636, %v3834
        %v3836 = vpop.f32.mrb[0].mxu0
        %v3837 = vadd.f32 %v3638, %v3836
        %3838 = vmatprep.mubr.f32.mxu0 0.0
        %v3839 = vand.u32 %v2845, 4294901760
        %3840 = vmatmul.mubr.f32.gmra.mrb[0].mxu0 %v3839
        %v3841 = vpop.f32.mrb[0].mxu0
        %v3842 = vadd.f32 %v3645, %v3841
        %v3843 = vpop.f32.mrb[0].mxu0
        %v3844 = vadd.f32 %v3647, %v3843
        %3845 = vmatprep.mubr.f32.mxu0 0.0
        %v3846 = vand.u32 %v2848, 4294901760
        %3847 = vmatmul.mubr.f32.gmra.mrb[0].mxu0 %v3846
        %v3848 = vpop.f32.mrb[0].mxu0
        %v3849 = vadd.f32 %v3654, %v3848
        %v3850 = vpop.f32.mrb[0].mxu0
        %v3851 = vadd.f32 %v3656, %v3850
        %3852 = vmatprep.mubr.f32.mxu0 0.0
        %v3853 = vand.u32 %v2851, 4294901760
        %3854 = vmatmul.mubr.f32.gmra.mrb[0].mxu0 %v3853
        %v3855 = vpop.f32.mrb[0].mxu0
        %v3856 = vadd.f32 %v3663, %v3855
        %v3857 = vpop.f32.mrb[0].mxu0
        %v3858 = vadd.f32 %v3665, %v3857
        %3859 = vmatprep.mubr.f32.mxu0 0.0
        %v3860 = vand.u32 %v2854, 4294901760
        %3861 = vmatmul.mubr.f32.gmra.mrb[0].mxu0 %v3860
        %v3862 = vpop.f32.mrb[0].mxu0
        %v3863 = vadd.f32 %v3672, %v3862
        %v3864 = vpop.f32.mrb[0].mxu0
        %v3865 = vadd.f32 %v3674, %v3864
        %3866 = vmatprep.mubr.f32.mxu0 0.0
        %v3867 = vand.u32 %v2857, 4294901760
        %3868 = vmatmul.mubr.f32.gmra.mrb[0].mxu0 %v3867
        %v3869 = vpop.f32.mrb[0].mxu0
        %v3870 = vadd.f32 %v3681, %v3869
        %v3871 = vpop.f32.mrb[0].mxu0
        %v3872 = vadd.f32 %v3683, %v3871
        %3873 = vmatprep.mubr.f32.mxu0 0.0
        %v3874 = vand.u32 %v2860, 4294901760
        %3875 = vmatmul.mubr.f32.gmra.mrb[0].mxu0 %v3874
        %v3876 = vpop.f32.mrb[0].mxu0
        %v3877 = vadd.f32 %v3690, %v3876
        %v3878 = vpop.f32.mrb[0].mxu0
        %v3879 = vadd.f32 %v3692, %v3878
        %3880 = vmatprep.mubr.f32.mxu0 0.0
        %v3881 = vand.u32 %v2863, 4294901760
        %3882 = vmatmul.mubr.f32.gmra.mrb[0].mxu0 %v3881
        %v3883 = vpop.f32.mrb[0].mxu0
        %v3884 = vadd.f32 %v3699, %v3883
        %v3885 = vpop.f32.mrb[0].mxu0
        %v3886 = vadd.f32 %v3701, %v3885
        %3887 = vmatprep.mubr.f32.mxu0 0.0
        %v3888 = vand.u32 %v2866, 4294901760
        %3889 = vmatmul.mubr.f32.gmra.mrb[0].mxu0 %v3888
        %v3890 = vpop.f32.mrb[0].mxu0
        %v3891 = vadd.f32 %v3708, %v3890
        %v3892 = vpop.f32.mrb[0].mxu0
        %v3893 = vadd.f32 %v3710, %v3892
        %3894 = vdwg.mxu0
        %v3895 = vand.u32 %v2872, 4294901760
        %3896 = vmatprep.subr.mxu0 %v3895
        %v3897 = vand.u32 %v2869, 4294901760
        %3898 = vmatpush1.msra.mxu0 %v3897
        %3899 = vmatprep.subr.mxu0 0.0
        %3900 = vmatpush1.msra.mxu0 0.0
        %3901 = vmatprep.subr.mxu0 0.0
        %3902 = vmatpush1.msra.mxu0 0.0
        %3903 = vmatprep.subr.mxu0 0.0
        %3904 = vmatpush1.msra.mxu0 0.0
        %3905 = vmatprep.subr.mxu0 0.0
        %3906 = vmatpush1.msra.mxu0 0.0
        %3907 = vmatprep.subr.mxu0 0.0
        %3908 = vmatpush1.msra.mxu0 0.0
        %3909 = vmatprep.subr.mxu0 0.0
        %3910 = vmatpush1.msra.mxu0 0.0
        %3911 = vmatprep.subr.mxu0 0.0
        %3912 = vmatpush1.msra.mxu0 0.0
        %3913 = vmatprep.subr.mxu0 0.0
        %3914 = vmatpush1.msra.mxu0 0.0
        %3915 = vmatprep.subr.mxu0 0.0
        %3916 = vmatpush1.msra.mxu0 0.0
        %3917 = vmatprep.subr.mxu0 0.0
        %3918 = vmatpush1.msra.mxu0 0.0
        %3919 = vmatprep.subr.mxu0 0.0
        %3920 = vmatpush1.msra.mxu0 0.0
        %3921 = vmatprep.subr.mxu0 0.0
        %3922 = vmatpush1.msra.mxu0 0.0
        %3923 = vmatprep.subr.mxu0 0.0
        %3924 = vmatpush1.msra.mxu0 0.0
        %3925 = vmatprep.subr.mxu0 0.0
        %3926 = vmatpush1.msra.mxu0 0.0
        %3927 = vmatprep.subr.mxu0 0.0
        %3928 = vmatpush1.msra.mxu0 0.0
        %3929 = vmatprep.subr.mxu0 0.0
        %3930 = vmatpush1.msra.mxu0 0.0
        %3931 = vmatprep.subr.mxu0 0.0
        %3932 = vmatpush1.msra.mxu0 0.0
        %3933 = vmatprep.subr.mxu0 0.0
        %3934 = vmatpush1.msra.mxu0 0.0
        %3935 = vmatprep.subr.mxu0 0.0
        %3936 = vmatpush1.msra.mxu0 0.0
        %3937 = vmatprep.subr.mxu0 0.0
        %3938 = vmatpush1.msra.mxu0 0.0
        %3939 = vmatprep.subr.mxu0 0.0
        %3940 = vmatpush1.msra.mxu0 0.0
        %3941 = vmatprep.subr.mxu0 0.0
        %3942 = vmatpush1.msra.mxu0 0.0
        %3943 = vmatprep.subr.mxu0 0.0
        %3944 = vmatpush1.msra.mxu0 0.0
        %3945 = vmatprep.subr.mxu0 0.0
        %3946 = vmatpush1.msra.mxu0 0.0
        %3947 = vmatprep.subr.mxu0 0.0
        %3948 = vmatpush1.msra.mxu0 0.0
        %3949 = vmatprep.subr.mxu0 0.0
        %3950 = vmatpush1.msra.mxu0 0.0
        %3951 = vmatprep.subr.mxu0 0.0
        %3952 = vmatpush1.msra.mxu0 0.0
        %3953 = vmatprep.subr.mxu0 0.0
        %3954 = vmatpush1.msra.mxu0 0.0
        %3955 = vmatprep.subr.mxu0 0.0
        %3956 = vmatpush1.msra.mxu0 0.0
        %3957 = vmatprep.subr.mxu0 0.0
        %3958 = vmatpush1.msra.mxu0 0.0
        %3959 = vmatprep.subr.mxu0 0.0
        %3960 = vmatpush1.msra.mxu0 0.0
        %3961 = vmatprep.mubr.f32.mxu0 0.0
        %v3962 = vand.u32 %v2821, 4294901760
        %3963 = vmatmul.mubr.f32.gmra.mrb[0].mxu0 %v3962
        %v3964 = vpop.f32.mrb[0].mxu0
        %v3965 = vadd.f32 %v3786, %v3964
        %v3966 = vpop.f32.mrb[0].mxu0
        %v3967 = vadd.f32 %v3788, %v3966
        %3968 = vmatprep.mubr.f32.mxu0 0.0
        %v3969 = vand.u32 %v2824, 4294901760
        %3970 = vmatmul.mubr.f32.gmra.mrb[0].mxu0 %v3969
        %v3971 = vpop.f32.mrb[0].mxu0
        %v3972 = vadd.f32 %v3793, %v3971
        %v3973 = vpop.f32.mrb[0].mxu0
        %v3974 = vadd.f32 %v3795, %v3973
        %3975 = vmatprep.mubr.f32.mxu0 0.0
        %v3976 = vand.u32 %v2827, 4294901760
        %3977 = vmatmul.mubr.f32.gmra.mrb[0].mxu0 %v3976
        %v3978 = vpop.f32.mrb[0].mxu0
        %v3979 = vadd.f32 %v3800, %v3978
        %v3980 = vpop.f32.mrb[0].mxu0
        %v3981 = vadd.f32 %v3802, %v3980
        %3982 = vmatprep.mubr.f32.mxu0 0.0
        %v3983 = vand.u32 %v2830, 4294901760
        %3984 = vmatmul.mubr.f32.gmra.mrb[0].mxu0 %v3983
        %v3985 = vpop.f32.mrb[0].mxu0
        %v3986 = vadd.f32 %v3807, %v3985
        %v3987 = vpop.f32.mrb[0].mxu0
        %v3988 = vadd.f32 %v3809, %v3987
        %3989 = vmatprep.mubr.f32.mxu0 0.0
        %v3990 = vand.u32 %v2833, 4294901760
        %3991 = vmatmul.mubr.f32.gmra.mrb[0].mxu0 %v3990
        %v3992 = vpop.f32.mrb[0].mxu0
        %v3993 = vadd.f32 %v3814, %v3992
        %v3994 = vpop.f32.mrb[0].mxu0
        %v3995 = vadd.f32 %v3816, %v3994
        %3996 = vmatprep.mubr.f32.mxu0 0.0
        %v3997 = vand.u32 %v2836, 4294901760
        %3998 = vmatmul.mubr.f32.gmra.mrb[0].mxu0 %v3997
        %v3999 = vpop.f32.mrb[0].mxu0
        %v4000 = vadd.f32 %v3821, %v3999
        %v4001 = vpop.f32.mrb[0].mxu0
        %v4002 = vadd.f32 %v3823, %v4001
        %4003 = vmatprep.mubr.f32.mxu0 0.0
        %v4004 = vand.u32 %v2839, 4294901760
        %4005 = vmatmul.mubr.f32.gmra.mrb[0].mxu0 %v4004
        %v4006 = vpop.f32.mrb[0].mxu0
        %v4007 = vadd.f32 %v3828, %v4006
        %v4008 = vpop.f32.mrb[0].mxu0
        %v4009 = vadd.f32 %v3830, %v4008
        %4010 = vmatprep.mubr.f32.mxu0 0.0
        %v4011 = vand.u32 %v2842, 4294901760
        %4012 = vmatmul.mubr.f32.gmra.mrb[0].mxu0 %v4011
        %v4013 = vpop.f32.mrb[0].mxu0
        %v4014 = vadd.f32 %v3835, %v4013
        %v4015 = vpop.f32.mrb[0].mxu0
        %v4016 = vadd.f32 %v3837, %v4015
        %4017 = vmatprep.mubr.f32.mxu0 0.0
        %v4018 = vand.u32 %v2845, 4294901760
        %4019 = vmatmul.mubr.f32.gmra.mrb[0].mxu0 %v4018
        %v4020 = vpop.f32.mrb[0].mxu0
        %v4021 = vadd.f32 %v3842, %v4020
        %v4022 = vpop.f32.mrb[0].mxu0
        %v4023 = vadd.f32 %v3844, %v4022
        %4024 = vmatprep.mubr.f32.mxu0 0.0
        %v4025 = vand.u32 %v2848, 4294901760
        %4026 = vmatmul.mubr.f32.gmra.mrb[0].mxu0 %v4025
        %v4027 = vpop.f32.mrb[0].mxu0
        %v4028 = vadd.f32 %v3849, %v4027
        %v4029 = vpop.f32.mrb[0].mxu0
        %v4030 = vadd.f32 %v3851, %v4029
        %4031 = vmatprep.mubr.f32.mxu0 0.0
        %v4032 = vand.u32 %v2851, 4294901760
        %4033 = vmatmul.mubr.f32.gmra.mrb[0].mxu0 %v4032
        %v4034 = vpop.f32.mrb[0].mxu0
        %v4035 = vadd.f32 %v3856, %v4034
        %v4036 = vpop.f32.mrb[0].mxu0
        %v4037 = vadd.f32 %v3858, %v4036
        %4038 = vmatprep.mubr.f32.mxu0 0.0
        %v4039 = vand.u32 %v2854, 4294901760
        %4040 = vmatmul.mubr.f32.gmra.mrb[0].mxu0 %v4039
        %v4041 = vpop.f32.mrb[0].mxu0
        %v4042 = vadd.f32 %v3863, %v4041
        %v4043 = vpop.f32.mrb[0].mxu0
        %v4044 = vadd.f32 %v3865, %v4043
        %4045 = vmatprep.mubr.f32.mxu0 0.0
        %v4046 = vand.u32 %v2857, 4294901760
        %4047 = vmatmul.mubr.f32.gmra.mrb[0].mxu0 %v4046
        %v4048 = vpop.f32.mrb[0].mxu0
        %v4049 = vadd.f32 %v3870, %v4048
        %v4050 = vpop.f32.mrb[0].mxu0
        %v4051 = vadd.f32 %v3872, %v4050
        %4052 = vmatprep.mubr.f32.mxu0 0.0
        %v4053 = vand.u32 %v2860, 4294901760
        %4054 = vmatmul.mubr.f32.gmra.mrb[0].mxu0 %v4053
        %v4055 = vpop.f32.mrb[0].mxu0
        %v4056 = vadd.f32 %v3877, %v4055
        %v4057 = vpop.f32.mrb[0].mxu0
        %v4058 = vadd.f32 %v3879, %v4057
        %4059 = vmatprep.mubr.f32.mxu0 0.0
        %v4060 = vand.u32 %v2863, 4294901760
        %4061 = vmatmul.mubr.f32.gmra.mrb[0].mxu0 %v4060
        %v4062 = vpop.f32.mrb[0].mxu0
        %v4063 = vadd.f32 %v3884, %v4062
        %v4064 = vpop.f32.mrb[0].mxu0
        %v4065 = vadd.f32 %v3886, %v4064
        %4066 = vmatprep.mubr.f32.mxu0 0.0
        %v4067 = vand.u32 %v2866, 4294901760
        %4068 = vmatmul.mubr.f32.gmra.mrb[0].mxu0 %v4067
        %v4069 = vpop.f32.mrb[0].mxu0
        %v4070 = vadd.f32 %v3891, %v4069
        %v4071 = vpop.f32.mrb[0].mxu0
        %v4072 = vadd.f32 %v3893, %v4071
        %4073 = vdwg.mxu0
        %v4074 = vmul.f32 %v2675, %v3965
        %v4075 = vmul.f32 %v2677, %v3967
        %v4076 = vmul.f32 %v2682, %v3972
        %v4077 = vmul.f32 %v2684, %v3974
        %v4078 = vmul.f32 %v2689, %v3979
        %v4079 = vmul.f32 %v2691, %v3981
        %v4080 = vmul.f32 %v2696, %v3986
        %v4081 = vmul.f32 %v2698, %v3988
        %v4082 = vmul.f32 %v2703, %v3993
        %v4083 = vmul.f32 %v2705, %v3995
        %v4084 = vmul.f32 %v2710, %v4000
        %v4085 = vmul.f32 %v2712, %v4002
        %v4086 = vmul.f32 %v2717, %v4007
        %v4087 = vmul.f32 %v2719, %v4009
        %v4088 = vmul.f32 %v2724, %v4014
        %v4089 = vmul.f32 %v2726, %v4016
        %v4090 = vadd.f32 %v4074, %v4082
        %v4091 = vadd.f32 %v4075, %v4083
        %v4092 = vadd.f32 %v4076, %v4084
        %v4093 = vadd.f32 %v4077, %v4085
        %v4094 = vadd.f32 %v4078, %v4086
        %v4095 = vadd.f32 %v4079, %v4087
        %v4096 = vadd.f32 %v4080, %v4088
        %v4097 = vadd.f32 %v4081, %v4089
        %v4098 = vmul.f32 %v2731, %v4021
        %v4099 = vmul.f32 %v2733, %v4023
        %v4100 = vmul.f32 %v2738, %v4028
        %v4101 = vmul.f32 %v2740, %v4030
        %v4102 = vmul.f32 %v2745, %v4035
        %v4103 = vmul.f32 %v2747, %v4037
        %v4104 = vmul.f32 %v2752, %v4042
        %v4105 = vmul.f32 %v2754, %v4044
        %v4106 = vadd.f32 %v4090, %v4098
        %v4107 = vadd.f32 %v4091, %v4099
        %v4108 = vadd.f32 %v4092, %v4100
        %v4109 = vadd.f32 %v4093, %v4101
        %v4110 = vadd.f32 %v4094, %v4102
        %v4111 = vadd.f32 %v4095, %v4103
        %v4112 = vadd.f32 %v4096, %v4104
        %v4113 = vadd.f32 %v4097, %v4105
        %v4114 = vmul.f32 %v2759, %v4049
        %v4115 = vmul.f32 %v2761, %v4051
        %v4116 = vmul.f32 %v2766, %v4056
        %v4117 = vmul.f32 %v2768, %v4058
        %v4118 = vmul.f32 %v2773, %v4063
        %v4119 = vmul.f32 %v2775, %v4065
        %v4120 = vmul.f32 %v2780, %v4070
        %v4121 = vmul.f32 %v2782, %v4072
        %v4122 = vadd.f32 %v4106, %v4114
        %v4123 = vadd.f32 %v4107, %v4115
        %v4124 = vadd.f32 %v4108, %v4116
        %v4125 = vadd.f32 %v4109, %v4117
        %v4126 = vadd.f32 %v4110, %v4118
        %v4127 = vadd.f32 %v4111, %v4119
        %v4128 = vadd.f32 %v4112, %v4120
        %v4129 = vadd.f32 %v4113, %v4121
        %v4130 = vmul.f32 %v1385, %v4122
        %v4131 = vmul.f32 %v1387, %v4123
        %v4132 = vmul.f32 %v1392, %v4122
        %v4133 = vmul.f32 %v1394, %v4123
        %v4134 = vmul.f32 %v1399, %v4122
        %v4135 = vmul.f32 %v1401, %v4123
        %v4136 = vmul.f32 %v1406, %v4122
        %v4137 = vmul.f32 %v1408, %v4123
        %v4138 = vmul.f32 %v1413, %v4124
        %v4139 = vmul.f32 %v1415, %v4125
        %v4140 = vmul.f32 %v1420, %v4124
        %v4141 = vmul.f32 %v1422, %v4125
        %v4142 = vmul.f32 %v1427, %v4124
        %v4143 = vmul.f32 %v1429, %v4125
        %v4144 = vmul.f32 %v1434, %v4124
        %v4145 = vmul.f32 %v1436, %v4125
        %v4146 = vadd.f32 %v4130, %v4138
        %v4147 = vadd.f32 %v4131, %v4139
        %v4148 = vadd.f32 %v4132, %v4140
        %v4149 = vadd.f32 %v4133, %v4141
        %v4150 = vadd.f32 %v4134, %v4142
        %v4151 = vadd.f32 %v4135, %v4143
        %v4152 = vadd.f32 %v4136, %v4144
        %v4153 = vadd.f32 %v4137, %v4145
        %v4154 = vmul.f32 %v1441, %v4126
        %v4155 = vmul.f32 %v1443, %v4127
        %v4156 = vmul.f32 %v1448, %v4126
        %v4157 = vmul.f32 %v1450, %v4127
        %v4158 = vmul.f32 %v1455, %v4126
        %v4159 = vmul.f32 %v1457, %v4127
        %v4160 = vmul.f32 %v1462, %v4126
        %v4161 = vmul.f32 %v1464, %v4127
        %v4162 = vadd.f32 %v4146, %v4154
        %v4163 = vadd.f32 %v4147, %v4155
        %v4164 = vadd.f32 %v4148, %v4156
        %v4165 = vadd.f32 %v4149, %v4157
        %v4166 = vadd.f32 %v4150, %v4158
        %v4167 = vadd.f32 %v4151, %v4159
        %v4168 = vadd.f32 %v4152, %v4160
        %v4169 = vadd.f32 %v4153, %v4161
        %v4170 = vmul.f32 %v1469, %v4128
        %v4171 = vmul.f32 %v1471, %v4129
        %v4172 = vmul.f32 %v1476, %v4128
        %v4173 = vmul.f32 %v1478, %v4129
        %v4174 = vmul.f32 %v1483, %v4128
        %v4175 = vmul.f32 %v1485, %v4129
        %v4176 = vmul.f32 %v1490, %v4128
        %v4177 = vmul.f32 %v1492, %v4129
        %v4178 = vadd.f32 %v4162, %v4170
        %v4179 = vadd.f32 %v4163, %v4171
        %v4180 = vadd.f32 %v4164, %v4172
        %v4181 = vadd.f32 %v4165, %v4173
        %v4182 = vadd.f32 %v4166, %v4174
        %v4183 = vadd.f32 %v4167, %v4175
        %v4184 = vadd.f32 %v4168, %v4176
        %v4185 = vadd.f32 %v4169, %v4177
        %4186 = vst [vmem:[%s191] sm:$0xff] %v4178
        %4187 = vst [vmem:[%s191 + $0x8] sm:$0xff] %v4179
        %4188 = vst [vmem:[%s191 + $0x10] sm:$0xff] %v4180
        %4189 = vst [vmem:[%s191 + $0x18] sm:$0xff] %v4181
        %4190 = vst [vmem:[%s191 + $0x20] sm:$0xff] %v4182
        %4191 = vst [vmem:[%s191 + $0x28] sm:$0xff] %v4183
        %4192 = vst [vmem:[%s191 + $0x30] sm:$0xff] %v4184
        %4193 = vst [vmem:[%s191 + $0x38] sm:$0xff] %v4185
        %s4194 = sand.u32 %s115, 1
        %s4195 = scalar_lea.sflag [#allocation3], %s4194
        %s4196 = sand.u32 %s115, 1
        %s4197 = smul.addr %s4196, 64
        %s4198 = scalar_lea.vmem [#allocation2], %s4197
        // Predicated region
        $region37: #{tpu_custom_call.1} parent=35 // pred_check
          %p4199 = pneg %p125
        $region38: #{tpu_custom_call.1} parent=35 // pred_check_branch
          %4201 = sbr.rel (%p4199) target = $region40
        $region39: #{tpu_custom_call.1} parent=35 // pred_region
          %s4202 = smul.u32 2, %s18
          %s4204 = ssub.s32 1024, 1024
          %4205 = vsyncadd %s4195, %s4204
          %s4206 = smul.addr %s4202, 128
          %s4207 = scalar_lea.hbm %s4, %s4206
          %s4208 = sshll.u32 %s4198, 4
          %s4209 = int_to_ptr.vmem [resolvable:$true] %s4208
          %4214 = dma.vmem_to_hbm [thread:$0]  %s4209, 1024, %s4207, %s4195, 256, 512, 16
        $region40: #{tpu_custom_call.1} parent=35 // pred_fallthru
          _
      $region36: #{tpu_custom_call.1} parent=5 // pred_fallthru
        _
      %p4215 = scmp.le.s32.totalorder 2, %s13
      // Predicated region
      $region41: #{tpu_custom_call.1} parent=5 // pred_check
        %p4216 = pneg %p4215
      $region42: #{tpu_custom_call.1} parent=5 // pred_check_branch
        %4218 = sbr.rel (%p4216) target = $region44
      $region43: #{tpu_custom_call.1} parent=5 // pred_region
        %s4219 = ssub.s32 %s13, 2
        // Predicated region
        $region45: #{tpu_custom_call.1} parent=43 // pred_check
          %p4220 = pneg %p131
        $region46: #{tpu_custom_call.1} parent=43 // pred_check_branch
          %4222 = sbr.rel (%p4220) target = $region48
        $region47: #{tpu_custom_call.1} parent=43 // pred_region
          %s4223 = sand.u32 %s116, 1
          %s4224 = scalar_lea.sflag [#allocation3], %s4223
          %s4225 = sand.u32 %s116, 1
          %s4226 = smul.addr %s4225, 64
          %s4227 = scalar_lea.vmem [#allocation2], %s4226
          %4228 = dma.done %s4224, 1024
        $region48: #{tpu_custom_call.1} parent=43 // pred_fallthru
          _
      $region44: #{tpu_custom_call.1} parent=5 // pred_fallthru
        _
    $region6: #{tpu_custom_call.1} parent=1 // loop_footer
      %s17 = sadd.s32 1, %s13
    $region7: #{tpu_custom_call.1} parent=1 // loop_footer_branch
      %12 = sbr.rel target = $region3
    $region8: #{tpu_custom_call.1} parent=1 // loop_exit
      _
    %4229 = vsyncpa [#allocation3], 1
    %s4230 = scalar_lea.sflag [#allocation3], 1
    %4231 = vsyncpa %s4230, 1

</llo_original>
